<compile_context>
chip_gen: v5e
topology: v5e:2x2
jax: 0.10.0
libtpu: 0.0.40
codegen_flags: <defaults>
</compile_context>

<pallas_src>
import numpy as np
import jax
import jax.numpy as jnp
from jax import lax
from jax.experimental import pallas as pl
from jax.experimental.pallas import tpu as pltpu


def _round_up(x, m):
    return (x + m - 1) // m * m


def _choose_nb(N, H, max_lanes=2048):
    """Largest divisor Nb of N s.t. the grid keeps >= 2 steps (when N >= 2)
    and the per-step lane extent Nb*H stays modest (VMEM / unroll)."""
    best = 1
    for nb in range(1, N + 1):
        if N % nb:
            continue
        if N >= 2 and N // nb < 2:
            continue
        if nb * H > max_lanes:
            continue
        best = nb
    return best


# ---------------------------------------------------------------------------
# Pallas kernel: fused 1-D "same"/replicate conv for Nb batch rows.
#   w_ref   : (Cout_p, K*Cin_p)   bf16, contraction index = t*Cin_p + c
#   v_ref   : (Nb, H, W*Cv)       f32, native time-major layout
#   s_ref   : (Nb, H, Cs_p)       f32, native time-major layout (zero-padded ch)
#   o_ref   : (Cout_p, Nb*H)      f32, channel-major (lane-dense stores)
#   xp_ref  : (Nb*(H+K-1), Cin_p) f32 scratch, replicate-padded packed input
#   xcol_ref: (Nb*H, K*Cin_p)     bf16 scratch, time-major im2col slab
# ---------------------------------------------------------------------------
def _fused_conv1d_kernel(w_ref, v_ref, s_ref, o_ref, xp_ref, xcol_ref):
    nb, H, wc = v_ref.shape
    cs = s_ref.shape[2]
    cin = wc + cs
    cout_p, KC = w_ref.shape
    K = KC // cin
    lp = (K - 1) // 2
    rp = (K - 1) - lp
    Hp = H + K - 1

    # ---- pack + replicate ('edge') padding, time-major; no transposes ----
    for b in range(nb):                      # static unroll (Nb is small)
        v = v_ref[b]                         # (H, wc)  f32
        s = s_ref[b]                         # (H, cs)  f32
        base = b * Hp
        xp_ref[base + lp:base + lp + H, 0:wc] = v
        xp_ref[base + lp:base + lp + H, wc:cin] = s
        if lp:
            xp_ref[base:base + lp, 0:wc] = jnp.broadcast_to(v[0:1, :], (lp, wc))
            xp_ref[base:base + lp, wc:cin] = jnp.broadcast_to(s[0:1, :], (lp, cs))
        if rp:
            xp_ref[base + lp + H:base + Hp, 0:wc] = (
                jnp.broadcast_to(v[H - 1:H, :], (rp, wc)))
            xp_ref[base + lp + H:base + Hp, wc:cin] = (
                jnp.broadcast_to(s[H - 1:H, :], (rp, cs)))

    # ---- im2col (time-major): xcol[b*H+h, t*cin+c] = xpad[b, h+t, c] ------
    # The f32 -> bf16 cast is fused into these copies (element touched once).
    for b in range(nb):
        for t in range(K):                   # K = 16, static
            xcol_ref[b * H:(b + 1) * H, t * cin:(t + 1) * cin] = (
                xp_ref[b * Hp + t:b * Hp + t + H, :].astype(xcol_ref.dtype))

    # ---- single MXU matmul, contracting K*Cin of both operands (A @ B^T) --
    out = lax.dot_general(
        w_ref[...], xcol_ref[...],
        dimension_numbers=(((1,), (1,)), ((), ())),
        preferred_element_type=jnp.float32)
    o_ref[...] = out.astype(o_ref.dtype)


def fused_conv1d_same_replicate(v2, s2, w_mat, K, Nb):
    """v2: (N, H, W*Cv) f32, s2: (N, H, Cs_p) f32, w_mat: (Cout_p, K*Cin_p) bf16
    -> (Cout_p, N*H) f32 (channel-major, batch folded onto the lane axis)."""
    N, H, WC = v2.shape
    CsP = s2.shape[2]
    cin_p = WC + CsP
    cout_p, KC = w_mat.shape
    assert KC == K * cin_p
    assert H % 128 == 0 and N % Nb == 0
    steps = N // Nb
    Hp = H + K - 1
    return pl.pallas_call(
        _fused_conv1d_kernel,
        out_shape=jax.ShapeDtypeStruct((cout_p, N * H), jnp.float32),
        grid_spec=pltpu.PrefetchScalarGridSpec(
            num_scalar_prefetch=0,
            grid=(steps,),
            in_specs=[
                # constant index_map -> weight stays resident across the grid
                pl.BlockSpec((cout_p, KC), lambda n: (0, 0)),
                pl.BlockSpec((Nb, H, WC), lambda n: (n, 0, 0)),
                pl.BlockSpec((Nb, H, CsP), lambda n: (n, 0, 0)),
            ],
            out_specs=pl.BlockSpec((cout_p, Nb * H), lambda n: (0, n)),
            scratch_shapes=[
                pltpu.VMEM((Nb * Hp, cin_p), jnp.float32),   # padded pack
                pltpu.VMEM((Nb * H, KC), jnp.bfloat16),      # im2col slab
            ]),
        compiler_params=pltpu.CompilerParams(
            dimension_semantics=("parallel",)),
    )(w_mat, v2, s2)


# ---------------------------------------------------------------------------
# Module equivalent
# ---------------------------------------------------------------------------
class Convolutional:
    def __init__(self, dim_in, dim_out, scalar_dim_out, scalar_dim_in,
                 kernel=(16, 1), key=None):
        kh, kw = kernel
        assert kw == 1, "module is used with kernel=(16, 1)"
        self.K = kh
        self.dim_in, self.dim_out = dim_in, dim_out
        self.sca_in, self.sca_out = scalar_dim_in, scalar_dim_out

        k1, k2 = jax.random.split(key)
        # Deterministic PyTorch-like init: U(-1/sqrt(fan_in), 1/sqrt(fan_in)).
        bound_v = 1.0 / float(jnp.sqrt(dim_in * kh * kw))
        bound_s = 1.0 / float(jnp.sqrt(scalar_dim_in * kh * kw))
        # PyTorch weight layout: (Cout, Cin, kh, kw)
        self.w_vec_oihw = jax.random.uniform(
            k1, (dim_out, dim_in, kh, kw), jnp.float32, -bound_v, bound_v)
        self.w_sca_oihw = jax.random.uniform(
            k2, (scalar_dim_out, scalar_dim_in, kh, kw), jnp.float32,
            -bound_s, bound_s)
        # Kernel-friendly layout: (K, Cin, Cout), kept as host numpy so the
        # fused weight can be built concretely even under jit tracing.
        self._w_vec_kio = np.transpose(np.asarray(self.w_vec_oihw)[..., 0],
                                       (2, 1, 0))
        self._w_sca_kio = np.transpose(np.asarray(self.w_sca_oihw)[..., 0],
                                       (2, 1, 0))
        self._wmat_cache = {}

    def _fused_weight(self, W):
        """Block-diagonal fused weight for W vector columns + scalar path,
        flattened to (Cout_p, K*Cin_p) with contraction index t*Cin_p + c."""
        if W not in self._wmat_cache:
            K = self.K
            cv, co = self.dim_in, self.dim_out
            cs, cso = self.sca_in, self.sca_out
            wc = W * cv
            # Pad only the scalar channel group so Cin_p % 8 == 0
            # (=> K*Cin_p % 128 == 0: clean MXU contraction, no stale lanes).
            CsP = _round_up(wc + cs, 8) - wc
            cin_p = wc + CsP
            c_out = W * co + cso
            cout_p = _round_up(c_out, 8)
            w_full = np.zeros((K, cin_p, cout_p), np.float32)
            for wi in range(W):   # same vector weight for every vector column
                w_full[:, wi * cv:(wi + 1) * cv,
                       wi * co:(wi + 1) * co] = self._w_vec_kio
            w_full[:, wc:wc + cs, W * co:W * co + cso] = self._w_sca_kio
            w_np = np.transpose(w_full, (2, 0, 1)).reshape(cout_p, K * cin_p)
            self._wmat_cache[W] = (w_np, CsP, cout_p)
        w_np, CsP, cout_p = self._wmat_cache[W]
        return jnp.asarray(w_np, dtype=jnp.bfloat16), CsP, cout_p

    def forward(self, vector, scalar):
        # vector: (N, H, W, dim_in); scalar: (N, H, sca_in)
        N, H, W, cv = vector.shape
        assert cv == self.dim_in
        assert scalar.shape == (N, H, self.sca_in)
        w_mat, CsP, cout_p = self._fused_weight(W)

        v2 = vector.reshape(N, H, W * cv)            # free minor-dim merge
        s2 = scalar
        if CsP != self.sca_in:
            s2 = jnp.pad(s2, ((0, 0), (0, 0), (0, CsP - self.sca_in)))

        # Lane-dense time axis (no-op for H already a multiple of 128).
        # Edge padding keeps the in-kernel replicate pads exactly correct.
        Hl = _round_up(H, 128)
        if Hl != H:
            v2 = jnp.pad(v2, ((0, 0), (0, Hl - H), (0, 0)), mode="edge")
            s2 = jnp.pad(s2, ((0, 0), (0, Hl - H), (0, 0)), mode="edge")

        Nb = _choose_nb(N, Hl)
        out2d = fused_conv1d_same_replicate(v2, s2, w_mat, self.K, Nb)

        out = out2d.T.reshape(N, Hl, cout_p)         # single NHWC transpose
        if Hl != H:
            out = out[:, :H, :]
        out_vec = out[:, :, :W * self.dim_out].reshape(N, H, W, self.dim_out)
        out_sca = out[:, :, W * self.dim_out:W * self.dim_out + self.sca_out]
        return out_vec, out_sca


# ---------------------------------------------------------------------------
# Pure-JAX f32 reference (independent of the kernel) for verification.
# ---------------------------------------------------------------------------
def _ref_conv_nhwc(x_nhwc, w_oihw):
    K = w_oihw.shape[2]
    lp = (K - 1) // 2
    rp = (K - 1) - lp
    xp = jnp.pad(x_nhwc, ((0, 0), (lp, rp), (0, 0), (0, 0)), mode="edge")
    return jax.lax.conv_general_dilated(
        xp, w_oihw, window_strides=(1, 1), padding="VALID",
        dimension_numbers=("NHWC", "OIHW", "NHWC"))


if __name__ == "__main__":
    key = jax.random.PRNGKey(0)
    k_param, k_vec, k_sca = jax.random.split(key, 3)

    # Small but lane-friendly shapes (TLIO windows are a few hundred samples).
    N, H, W = 2, 256, 2              # batch, time, vector-component axis
    dim_in, dim_out = 4, 8
    scalar_dim_in, scalar_dim_out = 3, 6

    module = Convolutional(dim_in, dim_out, scalar_dim_out, scalar_dim_in,
                           kernel=(16, 1), key=k_param)

    vector = jax.random.normal(k_vec, (N, H, W, dim_in), jnp.float32)
    scalar = jax.random.normal(k_sca, (N, H, scalar_dim_in), jnp.float32)

    fwd = jax.jit(module.forward)
    out_vec, out_sca = fwd(vector, scalar)
    out_vec = jax.block_until_ready(out_vec)
    out_sca = jax.block_until_ready(out_sca)

    # Verify against an independent JAX reference of the PyTorch semantics.
    ref_vec = _ref_conv_nhwc(vector, module.w_vec_oihw)
    ref_sca = _ref_conv_nhwc(scalar[:, :, None, :], module.w_sca_oihw)[:, :, 0, :]

    assert out_vec.shape == (N, H, W, dim_out)
    assert out_sca.shape == (N, H, scalar_dim_out)
    # bf16 MXU operands with f32 accumulation -> looser tolerance than pure f32.
    assert jnp.allclose(out_vec, ref_vec, atol=2e-2, rtol=2e-2)
    assert jnp.allclose(out_sca, ref_sca, atol=2e-2, rtol=2e-2)

    print("KERNEL_OK")
</pallas_src>

<mosaic_0001>
module attributes {stable_mosaic.version = 11 : i64} {
  func.func @_fused_conv1d_kernel(%arg0: i32, %arg1: memref<24x256xbf16, #tpu.memory_space<vmem>>, %arg2: memref<1x256x8xf32, #tpu.memory_space<vmem>>, %arg3: memref<1x256x8xf32, #tpu.memory_space<vmem>>, %arg4: memref<24x256xf32, #tpu.memory_space<vmem>>, %arg5: memref<271x16xf32, #tpu.memory_space<vmem>>, %arg6: memref<256x256xbf16, #tpu.memory_space<vmem>>) attributes {dimension_semantics = [#tpu.dimension_semantics<parallel>], iteration_bounds = array<i64: 2>, scalar_prefetch = 0 : i64, scratch_operands = 2 : i64, tpu.core_type = #tpu.core_type<tc>, window_params = [{pipeline_mode = #tpu.pipeline_mode<synchronous>, transform_indices = @transform_0, window_bounds = array<i64: 24, 256>}, {transform_indices = @transform_1, window_bounds = array<i64: 1, 256, 8>}, {transform_indices = @transform_2, window_bounds = array<i64: 1, 256, 8>}, {transform_indices = @transform_3, window_bounds = array<i64: 24, 256>}]} {
    %c0 = arith.constant 0 : index
    %c0_0 = arith.constant 0 : index
    %c0_1 = arith.constant 0 : index
    %0 = vector.load %arg2[%c0, %c0_0, %c0_1] : memref<1x256x8xf32, #tpu.memory_space<vmem>>, vector<1x256x8xf32>
    %1 = vector.shape_cast %0 : vector<1x256x8xf32> to vector<256x8xf32>
    %c0_2 = arith.constant 0 : index
    %c0_3 = arith.constant 0 : index
    %c0_4 = arith.constant 0 : index
    %2 = vector.load %arg3[%c0_2, %c0_3, %c0_4] : memref<1x256x8xf32, #tpu.memory_space<vmem>>, vector<1x256x8xf32>
    %3 = vector.shape_cast %2 : vector<1x256x8xf32> to vector<256x8xf32>
    %c7 = arith.constant 7 : index
    %c0_5 = arith.constant 0 : index
    %4 = vector.load %arg5[%c7, %c0_5] : memref<271x16xf32, #tpu.memory_space<vmem>>, vector<256x8xf32>
    tpu.vector_store %arg5[%c7, %c0_5], %1 {strides = array<i32>} : memref<271x16xf32, #tpu.memory_space<vmem>>, vector<256x8xf32>,
    %c7_6 = arith.constant 7 : index
    %c8 = arith.constant 8 : index
    %5 = vector.load %arg5[%c7_6, %c8] : memref<271x16xf32, #tpu.memory_space<vmem>>, vector<256x8xf32>
    tpu.vector_store %arg5[%c7_6, %c8], %3 {strides = array<i32>} : memref<271x16xf32, #tpu.memory_space<vmem>>, vector<256x8xf32>,
    %6 = vector.extract_strided_slice %1 {offsets = [0, 0], sizes = [1, 8], strides = [1, 1]} : vector<256x8xf32> to vector<1x8xf32>
    %7 = vector.shape_cast %6 : vector<1x8xf32> to vector<1x8xf32>
    %8 = vector.broadcast %7 : vector<1x8xf32> to vector<7x8xf32>
    %c0_7 = arith.constant 0 : index
    %c0_8 = arith.constant 0 : index
    %9 = vector.load %arg5[%c0_7, %c0_8] : memref<271x16xf32, #tpu.memory_space<vmem>>, vector<7x8xf32>
    tpu.vector_store %arg5[%c0_7, %c0_8], %8 {strides = array<i32>} : memref<271x16xf32, #tpu.memory_space<vmem>>, vector<7x8xf32>,
    %10 = vector.extract_strided_slice %3 {offsets = [0, 0], sizes = [1, 8], strides = [1, 1]} : vector<256x8xf32> to vector<1x8xf32>
    %11 = vector.shape_cast %10 : vector<1x8xf32> to vector<1x8xf32>
    %12 = vector.broadcast %11 : vector<1x8xf32> to vector<7x8xf32>
    %c0_9 = arith.constant 0 : index
    %c8_10 = arith.constant 8 : index
    %13 = vector.load %arg5[%c0_9, %c8_10] : memref<271x16xf32, #tpu.memory_space<vmem>>, vector<7x8xf32>
    tpu.vector_store %arg5[%c0_9, %c8_10], %12 {strides = array<i32>} : memref<271x16xf32, #tpu.memory_space<vmem>>, vector<7x8xf32>,
    %14 = vector.extract_strided_slice %1 {offsets = [255, 0], sizes = [1, 8], strides = [1, 1]} : vector<256x8xf32> to vector<1x8xf32>
    %15 = vector.shape_cast %14 : vector<1x8xf32> to vector<1x8xf32>
    %16 = vector.broadcast %15 : vector<1x8xf32> to vector<8x8xf32>
    %c263 = arith.constant 263 : index
    %c0_11 = arith.constant 0 : index
    %17 = vector.load %arg5[%c263, %c0_11] : memref<271x16xf32, #tpu.memory_space<vmem>>, vector<8x8xf32>
    tpu.vector_store %arg5[%c263, %c0_11], %16 {strides = array<i32>} : memref<271x16xf32, #tpu.memory_space<vmem>>, vector<8x8xf32>,
    %18 = vector.extract_strided_slice %3 {offsets = [255, 0], sizes = [1, 8], strides = [1, 1]} : vector<256x8xf32> to vector<1x8xf32>
    %19 = vector.shape_cast %18 : vector<1x8xf32> to vector<1x8xf32>
    %20 = vector.broadcast %19 : vector<1x8xf32> to vector<8x8xf32>
    %c263_12 = arith.constant 263 : index
    %c8_13 = arith.constant 8 : index
    %21 = vector.load %arg5[%c263_12, %c8_13] : memref<271x16xf32, #tpu.memory_space<vmem>>, vector<8x8xf32>
    tpu.vector_store %arg5[%c263_12, %c8_13], %20 {strides = array<i32>} : memref<271x16xf32, #tpu.memory_space<vmem>>, vector<8x8xf32>,
    %c0_14 = arith.constant 0 : index
    %c0_15 = arith.constant 0 : index
    %22 = vector.load %arg5[%c0_14, %c0_15] : memref<271x16xf32, #tpu.memory_space<vmem>>, vector<256x16xf32>
    %23 = arith.truncf %22 : vector<256x16xf32> to vector<256x16xbf16>
    %c0_16 = arith.constant 0 : index
    %c0_17 = arith.constant 0 : index
    %24 = vector.load %arg6[%c0_16, %c0_17] : memref<256x256xbf16, #tpu.memory_space<vmem>>, vector<256x16xbf16>
    tpu.vector_store %arg6[%c0_16, %c0_17], %23 {strides = array<i32>} : memref<256x256xbf16, #tpu.memory_space<vmem>>, vector<256x16xbf16>,
    %c1 = arith.constant 1 : index
    %c0_18 = arith.constant 0 : index
    %25 = vector.load %arg5[%c1, %c0_18] : memref<271x16xf32, #tpu.memory_space<vmem>>, vector<256x16xf32>
    %26 = arith.truncf %25 : vector<256x16xf32> to vector<256x16xbf16>
    %c0_19 = arith.constant 0 : index
    %c16 = arith.constant 16 : index
    %27 = vector.load %arg6[%c0_19, %c16] : memref<256x256xbf16, #tpu.memory_space<vmem>>, vector<256x16xbf16>
    tpu.vector_store %arg6[%c0_19, %c16], %26 {strides = array<i32>} : memref<256x256xbf16, #tpu.memory_space<vmem>>, vector<256x16xbf16>,
    %c2 = arith.constant 2 : index
    %c0_20 = arith.constant 0 : index
    %28 = vector.load %arg5[%c2, %c0_20] : memref<271x16xf32, #tpu.memory_space<vmem>>, vector<256x16xf32>
    %29 = arith.truncf %28 : vector<256x16xf32> to vector<256x16xbf16>
    %c0_21 = arith.constant 0 : index
    %c32 = arith.constant 32 : index
    %30 = vector.load %arg6[%c0_21, %c32] : memref<256x256xbf16, #tpu.memory_space<vmem>>, vector<256x16xbf16>
    tpu.vector_store %arg6[%c0_21, %c32], %29 {strides = array<i32>} : memref<256x256xbf16, #tpu.memory_space<vmem>>, vector<256x16xbf16>,
    %c3 = arith.constant 3 : index
    %c0_22 = arith.constant 0 : index
    %31 = vector.load %arg5[%c3, %c0_22] : memref<271x16xf32, #tpu.memory_space<vmem>>, vector<256x16xf32>
    %32 = arith.truncf %31 : vector<256x16xf32> to vector<256x16xbf16>
    %c0_23 = arith.constant 0 : index
    %c48 = arith.constant 48 : index
    %33 = vector.load %arg6[%c0_23, %c48] : memref<256x256xbf16, #tpu.memory_space<vmem>>, vector<256x16xbf16>
    tpu.vector_store %arg6[%c0_23, %c48], %32 {strides = array<i32>} : memref<256x256xbf16, #tpu.memory_space<vmem>>, vector<256x16xbf16>,
    %c4 = arith.constant 4 : index
    %c0_24 = arith.constant 0 : index
    %34 = vector.load %arg5[%c4, %c0_24] : memref<271x16xf32, #tpu.memory_space<vmem>>, vector<256x16xf32>
    %35 = arith.truncf %34 : vector<256x16xf32> to vector<256x16xbf16>
    %c0_25 = arith.constant 0 : index
    %c64 = arith.constant 64 : index
    %36 = vector.load %arg6[%c0_25, %c64] : memref<256x256xbf16, #tpu.memory_space<vmem>>, vector<256x16xbf16>
    tpu.vector_store %arg6[%c0_25, %c64], %35 {strides = array<i32>} : memref<256x256xbf16, #tpu.memory_space<vmem>>, vector<256x16xbf16>,
    %c5 = arith.constant 5 : index
    %c0_26 = arith.constant 0 : index
    %37 = vector.load %arg5[%c5, %c0_26] : memref<271x16xf32, #tpu.memory_space<vmem>>, vector<256x16xf32>
    %38 = arith.truncf %37 : vector<256x16xf32> to vector<256x16xbf16>
    %c0_27 = arith.constant 0 : index
    %c80 = arith.constant 80 : index
    %39 = vector.load %arg6[%c0_27, %c80] : memref<256x256xbf16, #tpu.memory_space<vmem>>, vector<256x16xbf16>
    tpu.vector_store %arg6[%c0_27, %c80], %38 {strides = array<i32>} : memref<256x256xbf16, #tpu.memory_space<vmem>>, vector<256x16xbf16>,
    %c6 = arith.constant 6 : index
    %c0_28 = arith.constant 0 : index
    %40 = vector.load %arg5[%c6, %c0_28] : memref<271x16xf32, #tpu.memory_space<vmem>>, vector<256x16xf32>
    %41 = arith.truncf %40 : vector<256x16xf32> to vector<256x16xbf16>
    %c0_29 = arith.constant 0 : index
    %c96 = arith.constant 96 : index
    %42 = vector.load %arg6[%c0_29, %c96] : memref<256x256xbf16, #tpu.memory_space<vmem>>, vector<256x16xbf16>
    tpu.vector_store %arg6[%c0_29, %c96], %41 {strides = array<i32>} : memref<256x256xbf16, #tpu.memory_space<vmem>>, vector<256x16xbf16>,
    %c7_30 = arith.constant 7 : index
    %c0_31 = arith.constant 0 : index
    %43 = vector.load %arg5[%c7_30, %c0_31] : memref<271x16xf32, #tpu.memory_space<vmem>>, vector<256x16xf32>
    %44 = arith.truncf %43 : vector<256x16xf32> to vector<256x16xbf16>
    %c0_32 = arith.constant 0 : index
    %c112 = arith.constant 112 : index
    %45 = vector.load %arg6[%c0_32, %c112] : memref<256x256xbf16, #tpu.memory_space<vmem>>, vector<256x16xbf16>
    tpu.vector_store %arg6[%c0_32, %c112], %44 {strides = array<i32>} : memref<256x256xbf16, #tpu.memory_space<vmem>>, vector<256x16xbf16>,
    %c8_33 = arith.constant 8 : index
    %c0_34 = arith.constant 0 : index
    %46 = vector.load %arg5[%c8_33, %c0_34] : memref<271x16xf32, #tpu.memory_space<vmem>>, vector<256x16xf32>
    %47 = arith.truncf %46 : vector<256x16xf32> to vector<256x16xbf16>
    %c0_35 = arith.constant 0 : index
    %c128 = arith.constant 128 : index
    %48 = vector.load %arg6[%c0_35, %c128] : memref<256x256xbf16, #tpu.memory_space<vmem>>, vector<256x16xbf16>
    tpu.vector_store %arg6[%c0_35, %c128], %47 {strides = array<i32>} : memref<256x256xbf16, #tpu.memory_space<vmem>>, vector<256x16xbf16>,
    %c9 = arith.constant 9 : index
    %c0_36 = arith.constant 0 : index
    %49 = vector.load %arg5[%c9, %c0_36] : memref<271x16xf32, #tpu.memory_space<vmem>>, vector<256x16xf32>
    %50 = arith.truncf %49 : vector<256x16xf32> to vector<256x16xbf16>
    %c0_37 = arith.constant 0 : index
    %c144 = arith.constant 144 : index
    %51 = vector.load %arg6[%c0_37, %c144] : memref<256x256xbf16, #tpu.memory_space<vmem>>, vector<256x16xbf16>
    tpu.vector_store %arg6[%c0_37, %c144], %50 {strides = array<i32>} : memref<256x256xbf16, #tpu.memory_space<vmem>>, vector<256x16xbf16>,
    %c10 = arith.constant 10 : index
    %c0_38 = arith.constant 0 : index
    %52 = vector.load %arg5[%c10, %c0_38] : memref<271x16xf32, #tpu.memory_space<vmem>>, vector<256x16xf32>
    %53 = arith.truncf %52 : vector<256x16xf32> to vector<256x16xbf16>
    %c0_39 = arith.constant 0 : index
    %c160 = arith.constant 160 : index
    %54 = vector.load %arg6[%c0_39, %c160] : memref<256x256xbf16, #tpu.memory_space<vmem>>, vector<256x16xbf16>
    tpu.vector_store %arg6[%c0_39, %c160], %53 {strides = array<i32>} : memref<256x256xbf16, #tpu.memory_space<vmem>>, vector<256x16xbf16>,
    %c11 = arith.constant 11 : index
    %c0_40 = arith.constant 0 : index
    %55 = vector.load %arg5[%c11, %c0_40] : memref<271x16xf32, #tpu.memory_space<vmem>>, vector<256x16xf32>
    %56 = arith.truncf %55 : vector<256x16xf32> to vector<256x16xbf16>
    %c0_41 = arith.constant 0 : index
    %c176 = arith.constant 176 : index
    %57 = vector.load %arg6[%c0_41, %c176] : memref<256x256xbf16, #tpu.memory_space<vmem>>, vector<256x16xbf16>
    tpu.vector_store %arg6[%c0_41, %c176], %56 {strides = array<i32>} : memref<256x256xbf16, #tpu.memory_space<vmem>>, vector<256x16xbf16>,
    %c12 = arith.constant 12 : index
    %c0_42 = arith.constant 0 : index
    %58 = vector.load %arg5[%c12, %c0_42] : memref<271x16xf32, #tpu.memory_space<vmem>>, vector<256x16xf32>
    %59 = arith.truncf %58 : vector<256x16xf32> to vector<256x16xbf16>
    %c0_43 = arith.constant 0 : index
    %c192 = arith.constant 192 : index
    %60 = vector.load %arg6[%c0_43, %c192] : memref<256x256xbf16, #tpu.memory_space<vmem>>, vector<256x16xbf16>
    tpu.vector_store %arg6[%c0_43, %c192], %59 {strides = array<i32>} : memref<256x256xbf16, #tpu.memory_space<vmem>>, vector<256x16xbf16>,
    %c13 = arith.constant 13 : index
    %c0_44 = arith.constant 0 : index
    %61 = vector.load %arg5[%c13, %c0_44] : memref<271x16xf32, #tpu.memory_space<vmem>>, vector<256x16xf32>
    %62 = arith.truncf %61 : vector<256x16xf32> to vector<256x16xbf16>
    %c0_45 = arith.constant 0 : index
    %c208 = arith.constant 208 : index
    %63 = vector.load %arg6[%c0_45, %c208] : memref<256x256xbf16, #tpu.memory_space<vmem>>, vector<256x16xbf16>
    tpu.vector_store %arg6[%c0_45, %c208], %62 {strides = array<i32>} : memref<256x256xbf16, #tpu.memory_space<vmem>>, vector<256x16xbf16>,
    %c14 = arith.constant 14 : index
    %c0_46 = arith.constant 0 : index
    %64 = vector.load %arg5[%c14, %c0_46] : memref<271x16xf32, #tpu.memory_space<vmem>>, vector<256x16xf32>
    %65 = arith.truncf %64 : vector<256x16xf32> to vector<256x16xbf16>
    %c0_47 = arith.constant 0 : index
    %c224 = arith.constant 224 : index
    %66 = vector.load %arg6[%c0_47, %c224] : memref<256x256xbf16, #tpu.memory_space<vmem>>, vector<256x16xbf16>
    tpu.vector_store %arg6[%c0_47, %c224], %65 {strides = array<i32>} : memref<256x256xbf16, #tpu.memory_space<vmem>>, vector<256x16xbf16>,
    %c15 = arith.constant 15 : index
    %c0_48 = arith.constant 0 : index
    %67 = vector.load %arg5[%c15, %c0_48] : memref<271x16xf32, #tpu.memory_space<vmem>>, vector<256x16xf32>
    %68 = arith.truncf %67 : vector<256x16xf32> to vector<256x16xbf16>
    %c0_49 = arith.constant 0 : index
    %c240 = arith.constant 240 : index
    %69 = vector.load %arg6[%c0_49, %c240] : memref<256x256xbf16, #tpu.memory_space<vmem>>, vector<256x16xbf16>
    tpu.vector_store %arg6[%c0_49, %c240], %68 {strides = array<i32>} : memref<256x256xbf16, #tpu.memory_space<vmem>>, vector<256x16xbf16>,
    %c0_50 = arith.constant 0 : index
    %c0_51 = arith.constant 0 : index
    %70 = vector.load %arg1[%c0_50, %c0_51] : memref<24x256xbf16, #tpu.memory_space<vmem>>, vector<24x256xbf16>
    %c0_52 = arith.constant 0 : index
    %c0_53 = arith.constant 0 : index
    %71 = vector.load %arg6[%c0_52, %c0_53] : memref<256x256xbf16, #tpu.memory_space<vmem>>, vector<256x256xbf16>
    %cst = arith.constant dense<0.000000e+00> : vector<24x256xf32>
    %72 = tpu.matmul %70, %71, %cst {dimension_numbers = #tpu.dot_dimension_numbers<[1], [1], [0], [0], [0, 0, 1, 0], [], []>} : vector<24x256xbf16>, vector<256x256xbf16>, vector<24x256xf32> -> vector<24x256xf32>
    %c0_54 = arith.constant 0 : index
    %c0_55 = arith.constant 0 : index
    %73 = vector.load %arg4[%c0_54, %c0_55] : memref<24x256xf32, #tpu.memory_space<vmem>>, vector<24x256xf32>
    tpu.vector_store %arg4[%c0_54, %c0_55], %72 {strides = array<i32>} : memref<24x256xf32, #tpu.memory_space<vmem>>, vector<24x256xf32>,
    return
  }
  func.func @transform_0(%arg0: i32) -> (i32, i32) {
    %c0_i32 = arith.constant 0 : i32
    %c0_i32_0 = arith.constant 0 : i32
    %c0_i32_1 = arith.constant 0 : i32
    return %c0_i32, %c0_i32_0 : i32, i32
  }
  func.func @transform_1(%arg0: i32) -> (i32, i32, i32) {
    %c0_i32 = arith.constant 0 : i32
    %c0_i32_0 = arith.constant 0 : i32
    %c0_i32_1 = arith.constant 0 : i32
    return %arg0, %c0_i32, %c0_i32_0 : i32, i32, i32
  }
  func.func @transform_2(%arg0: i32) -> (i32, i32, i32) {
    %c0_i32 = arith.constant 0 : i32
    %c0_i32_0 = arith.constant 0 : i32
    %c0_i32_1 = arith.constant 0 : i32
    return %arg0, %c0_i32, %c0_i32_0 : i32, i32, i32
  }
  func.func @transform_3(%arg0: i32) -> (i32, i32) {
    %c0_i32 = arith.constant 0 : i32
    %c0_i32_0 = arith.constant 0 : i32
    return %c0_i32, %arg0 : i32, i32
  }
}

</mosaic_0001>

<llo_original>
// kernel: forward.1
$region0: #{forward.1}
  #allocation0 [shape = 'u32[]', space=smem, size = 0x4, offset = 0x4, fixed_abs, tag = 'smem constant byte address 0x4 - core index']
  #allocation1 [shape = 'u32[72,128]{1,0:T(1,128)}', space=vmem, size = 0x9000, scoped, tag = 'internal scratch']
  #allocation2 [shape = 'f32[271,16]{1,0:T(8,128)}', space=vmem, size = 0x22000, scoped, tag = 'scratch operand']
  #allocation3 [shape = 'bf16[256,256]{1,0:T(8,128)(2,1)}', space=vmem, size = 0x20000, scoped, tag = 'scratch operand']
  %s0 = inlined_call_operand.vmem [shape: bf16[24,256], index: 0, kind: input, shape index: {}]
  %s1 = inlined_call_operand.vmem [shape: f32[2,256,8], index: 1, kind: input, shape index: {}]
  %s2 = inlined_call_operand.vmem [shape: f32[2,256,8], index: 2, kind: input, shape index: {}]
  %s3 = inlined_call_operand.vmem [shape: f32[24,512], index: 3, kind: output, shape index: {}]
  %s4 = sld [smem:[#allocation0]]
  $region64: #{forward.1} parent=0
    _
  %s6 = ssub.s32 1, %s4
  %s7 = scalar_select 0, %s6, %s4
  $region1: #{forward.1} parent=0
    #allocation4 [shape = 'u8[49152]{0}', space=vmem, size = 0xc000, scoped, tag = 'output window, operand 0']
    loop: start=0, step=1, limit=4
    $region2: #{forward.1} parent=1 // loop_pre_header
      _
    $region3: #{forward.1} parent=1 // loop_header
      %s9 = sphi 0, %s13
      %p10 = scmp.ge.s32.totalorder %s9, 4
      %s17 = sphi 0, %s17
      %s19 = sphi 0, %s17
      %s20 = sphi 0, %s19
      %s34 = sphi 0, %s20
      %s40 = sphi 0, %s42
      %s43 = sphi 0, %s40
      %s44 = sphi 0, %s43
      %s60 = sphi 0, %s44
      %s66 = sphi 0, %s68
      %s69 = sphi 0, %s66
      %s70 = sphi 0, %s69
      %s86 = sphi 0, %s70
      %s92 = sphi 0, %s94
      %s95 = sphi 0, %s92
      %s96 = sphi 0, %s95
      %s112 = sphi 0, %s96
    $region4: #{forward.1} parent=1 // loop_header_branch
      %12 = sbr.rel (%p10) target = $region8
    $region5: #{forward.1} parent=1 // loop_body
      %s14 = ssub.s32 %s9, 1
      %s15 = ssub.s32 %s9, 2
      %s16 = sadd.s32 %s9, 1
      %s18 = sadd.s32 %s17, 1
      %p21 = scmp.eq.s32.totalorder %s9, 1
      %p22 = scmp.ne.s32.totalorder %s17, %s19
      %p23 = scmp.eq.s32.totalorder %s9, 0
      %p24 = por %p22, %p23
      %p25 = scmp.ne.s32.totalorder %s17, %s19
      %p26 = scmp.eq.s32.totalorder %s14, 1
      %p27 = por %p25, %p26
      %p28 = scmp.ne.s32.totalorder %s19, %s20
      %p29 = scmp.eq.s32.totalorder %s14, 0
      %p30 = por %p28, %p29
      %p31 = scmp.ne.s32.totalorder %s19, %s20
      %p32 = scmp.eq.s32.totalorder %s15, 1
      %p33 = por %p31, %p32
      %p35 = scmp.ne.s32.totalorder %s20, %s34
      %p36 = scmp.eq.s32.totalorder %s15, 0
      %p37 = por %p35, %p36
      %s38 = ssub.s32 %s9, %s16
      %p39 = scmp.eq.s32.totalorder %s38, 0
      %s41 = sadd.s32 %s40, 1
      %s42 = scalar_select %p39, %s40, %s41
      %p45 = pneg %p39
      %p46 = scmp.eq.s32.totalorder %s9, 1
      %p47 = por %p45, %p46
      %p48 = scmp.ne.s32.totalorder %s40, %s43
      %p49 = scmp.eq.s32.totalorder %s9, 0
      %p50 = por %p48, %p49
      %p51 = scmp.ne.s32.totalorder %s40, %s43
      %p52 = scmp.eq.s32.totalorder %s14, 1
      %p53 = por %p51, %p52
      %p54 = scmp.ne.s32.totalorder %s43, %s44
      %p55 = scmp.eq.s32.totalorder %s14, 0
      %p56 = por %p54, %p55
      %p57 = scmp.ne.s32.totalorder %s43, %s44
      %p58 = scmp.eq.s32.totalorder %s15, 1
      %p59 = por %p57, %p58
      %p61 = scmp.ne.s32.totalorder %s44, %s60
      %p62 = scmp.eq.s32.totalorder %s15, 0
      %p63 = por %p61, %p62
      %s64 = ssub.s32 %s9, %s16
      %p65 = scmp.eq.s32.totalorder %s64, 0
      %s67 = sadd.s32 %s66, 1
      %s68 = scalar_select %p65, %s66, %s67
      %p71 = pneg %p65
      %p72 = scmp.eq.s32.totalorder %s9, 1
      %p73 = por %p71, %p72
      %p74 = scmp.ne.s32.totalorder %s66, %s69
      %p75 = scmp.eq.s32.totalorder %s9, 0
      %p76 = por %p74, %p75
      %p77 = scmp.ne.s32.totalorder %s66, %s69
      %p78 = scmp.eq.s32.totalorder %s14, 1
      %p79 = por %p77, %p78
      %p80 = scmp.ne.s32.totalorder %s69, %s70
      %p81 = scmp.eq.s32.totalorder %s14, 0
      %p82 = por %p80, %p81
      %p83 = scmp.ne.s32.totalorder %s69, %s70
      %p84 = scmp.eq.s32.totalorder %s15, 1
      %p85 = por %p83, %p84
      %p87 = scmp.ne.s32.totalorder %s70, %s86
      %p88 = scmp.eq.s32.totalorder %s15, 0
      %p89 = por %p87, %p88
      %s90 = ssub.s32 %s9, %s16
      %p91 = scmp.eq.s32.totalorder %s90, 0
      %s93 = sadd.s32 %s92, 1
      %s94 = scalar_select %p91, %s92, %s93
      %p97 = pneg %p91
      %p98 = scmp.eq.s32.totalorder %s9, 1
      %p99 = por %p97, %p98
      %p100 = scmp.ne.s32.totalorder %s92, %s95
      %p101 = scmp.eq.s32.totalorder %s9, 0
      %p102 = por %p100, %p101
      %p103 = scmp.ne.s32.totalorder %s92, %s95
      %p104 = scmp.eq.s32.totalorder %s14, 1
      %p105 = por %p103, %p104
      %p106 = scmp.ne.s32.totalorder %s95, %s96
      %p107 = scmp.eq.s32.totalorder %s14, 0
      %p108 = por %p106, %p107
      %p109 = scmp.ne.s32.totalorder %s95, %s96
      %p110 = scmp.eq.s32.totalorder %s15, 1
      %p111 = por %p109, %p110
      %p113 = scmp.ne.s32.totalorder %s96, %s112
      %p114 = scmp.eq.s32.totalorder %s15, 0
      %p115 = por %p113, %p114
      %p116 = scmp.le.s32.totalorder 1, %s9
      %p117 = scmp.lt.s32.totalorder %s9, 3
      %p118 = pnand %p116, %p117
      %p119 = pneg %p118
      // Predicated region
      $region9: #{forward.1} parent=5 // pred_check
        _
      $region10: #{forward.1} parent=5 // pred_check_branch
        %121 = sbr.rel (%p118) target = $region12
      $region11: #{forward.1} parent=5 // pred_region
        %s122 = ssub.s32 %s9, 1
        // Predicated region
        $region13: #{forward.1} parent=11 // pred_check
          %p123 = pneg %p30
        $region14: #{forward.1} parent=11 // pred_check_branch
          %125 = sbr.rel (%p123) target = $region16
        $region15: #{forward.1} parent=11 // pred_region
          _
        $region16: #{forward.1} parent=11 // pred_fallthru
          _
      $region12: #{forward.1} parent=5 // pred_fallthru
        _
      %p126 = scmp.lt.s32.totalorder %s9, 2
      // Predicated region
      $region17: #{forward.1} parent=5 // pred_check
        %p127 = pneg %p126
      $region18: #{forward.1} parent=5 // pred_check_branch
        %129 = sbr.rel (%p127) target = $region20
      $region19: #{forward.1} parent=5 // pred_region
        // Predicated region
        $region21: #{forward.1} parent=19 // pred_check
          %p130 = pneg %p50
        $region22: #{forward.1} parent=19 // pred_check_branch
          %132 = sbr.rel (%p130) target = $region24
        $region23: #{forward.1} parent=19 // pred_region
          %p133 = scmp.lt.s32.totalorder %s9, 1
          %s134 = scalar_select %p133, %s9, 1
          %s135 = smul.addr %s134, 32
          %s136 = smul.addr %s135, 8
          %s137 = scalar_lea.vmem %s1, %s136
        $region24: #{forward.1} parent=19 // pred_fallthru
          _
        // Predicated region
        $region25: #{forward.1} parent=19 // pred_check
          %p138 = pneg %p76
        $region26: #{forward.1} parent=19 // pred_check_branch
          %140 = sbr.rel (%p138) target = $region28
        $region27: #{forward.1} parent=19 // pred_region
          %p141 = scmp.lt.s32.totalorder %s9, 1
          %s142 = scalar_select %p141, %s9, 1
          %s143 = smul.addr %s142, 32
          %s144 = smul.addr %s143, 8
          %s145 = scalar_lea.vmem %s2, %s144
        $region28: #{forward.1} parent=19 // pred_fallthru
          _
      $region20: #{forward.1} parent=5 // pred_fallthru
        _
      %p146 = scmp.le.s32.totalorder 1, %s9
      %p147 = scmp.lt.s32.totalorder %s9, 3
      %p148 = pnand %p146, %p147
      %p149 = pneg %p148
      // Predicated region
      $region29: #{forward.1} parent=5 // pred_check
        _
      $region30: #{forward.1} parent=5 // pred_check_branch
        %151 = sbr.rel (%p148) target = $region32
      $region31: #{forward.1} parent=5 // pred_region
        %s152 = ssub.s32 %s9, 1
        %p153 = pneg %p30
        %p154 = pneg %p27
        %p155 = scmp.lt.s32.totalorder %s14, 1
        %s156 = scalar_select %p155, %s14, 1
        %s157 = smul.addr %s156, 32
        %s158 = smul.addr %s157, 8
        %s159 = scalar_lea.vmem %s1, %s158
        %p160 = pneg %p56
        %p161 = pneg %p53
        %p162 = scmp.lt.s32.totalorder %s14, 1
        %s163 = scalar_select %p162, %s14, 1
        %s164 = smul.addr %s163, 32
        %s165 = smul.addr %s164, 8
        %s166 = scalar_lea.vmem %s2, %s165
        %p167 = pneg %p82
        %p168 = pneg %p79
        %p169 = pneg %p108
        %p170 = pneg %p105
        %s171 = sand.u32 %s95, 1
        %s172 = sand.u32 %s95, 1
        %s173 = smul.addr %s172, 48
        %s174 = scalar_lea.vmem [#allocation4], %s173
        %p175 = scmp.lt.s32.totalorder %s14, 1
        %s176 = scalar_select %p175, %s14, 1
        %s177 = smul.addr %s176, 32
        %s178 = smul.addr %s177, 8
        %s179 = scalar_lea.vmem %s1, %s178
        %p180 = scmp.lt.s32.totalorder %s14, 1
        %s181 = scalar_select %p180, %s14, 1
        %s182 = smul.addr %s181, 32
        %s183 = smul.addr %s182, 8
        %s184 = scalar_lea.vmem %s2, %s183
        %s185 = smul.u32 2, %s14
        %v186 = vld [vmem:[%s179] sm:$0xff]
        %v187 = vld [vmem:[%s179 + $0x8] sm:$0xff]
        %v188 = vld [vmem:[%s179 + $0x10] sm:$0xff]
        %v189 = vld [vmem:[%s179 + $0x18] sm:$0xff]
        %v190 = vld [vmem:[%s179 + $0x20] sm:$0xff]
        %v191 = vld [vmem:[%s179 + $0x28] sm:$0xff]
        %v192 = vld [vmem:[%s179 + $0x30] sm:$0xff]
        %v193 = vld [vmem:[%s179 + $0x38] sm:$0xff]
        %v194 = vld [vmem:[%s179 + $0x40] sm:$0xff]
        %v195 = vld [vmem:[%s179 + $0x48] sm:$0xff]
        %v196 = vld [vmem:[%s179 + $0x50] sm:$0xff]
        %v197 = vld [vmem:[%s179 + $0x58] sm:$0xff]
        %v198 = vld [vmem:[%s179 + $0x60] sm:$0xff]
        %v199 = vld [vmem:[%s179 + $0x68] sm:$0xff]
        %v200 = vld [vmem:[%s179 + $0x70] sm:$0xff]
        %v201 = vld [vmem:[%s179 + $0x78] sm:$0xff]
        %v202 = vld [vmem:[%s179 + $0x80] sm:$0xff]
        %v203 = vld [vmem:[%s179 + $0x88] sm:$0xff]
        %v204 = vld [vmem:[%s179 + $0x90] sm:$0xff]
        %v205 = vld [vmem:[%s179 + $0x98] sm:$0xff]
        %v206 = vld [vmem:[%s179 + $0xa0] sm:$0xff]
        %v207 = vld [vmem:[%s179 + $0xa8] sm:$0xff]
        %v208 = vld [vmem:[%s179 + $0xb0] sm:$0xff]
        %v209 = vld [vmem:[%s179 + $0xb8] sm:$0xff]
        %v210 = vld [vmem:[%s179 + $0xc0] sm:$0xff]
        %v211 = vld [vmem:[%s179 + $0xc8] sm:$0xff]
        %v212 = vld [vmem:[%s179 + $0xd0] sm:$0xff]
        %v213 = vld [vmem:[%s179 + $0xd8] sm:$0xff]
        %v214 = vld [vmem:[%s179 + $0xe0] sm:$0xff]
        %v215 = vld [vmem:[%s179 + $0xe8] sm:$0xff]
        %v216 = vld [vmem:[%s179 + $0xf0] sm:$0xff]
        %v217 = vld [vmem:[%s179 + $0xf8] sm:$0xff]
        %v218 = vld [vmem:[%s184] sm:$0xff]
        %v219 = vld [vmem:[%s184 + $0x8] sm:$0xff]
        %v220 = vld [vmem:[%s184 + $0x10] sm:$0xff]
        %v221 = vld [vmem:[%s184 + $0x18] sm:$0xff]
        %v222 = vld [vmem:[%s184 + $0x20] sm:$0xff]
        %v223 = vld [vmem:[%s184 + $0x28] sm:$0xff]
        %v224 = vld [vmem:[%s184 + $0x30] sm:$0xff]
        %v225 = vld [vmem:[%s184 + $0x38] sm:$0xff]
        %v226 = vld [vmem:[%s184 + $0x40] sm:$0xff]
        %v227 = vld [vmem:[%s184 + $0x48] sm:$0xff]
        %v228 = vld [vmem:[%s184 + $0x50] sm:$0xff]
        %v229 = vld [vmem:[%s184 + $0x58] sm:$0xff]
        %v230 = vld [vmem:[%s184 + $0x60] sm:$0xff]
        %v231 = vld [vmem:[%s184 + $0x68] sm:$0xff]
        %v232 = vld [vmem:[%s184 + $0x70] sm:$0xff]
        %v233 = vld [vmem:[%s184 + $0x78] sm:$0xff]
        %v234 = vld [vmem:[%s184 + $0x80] sm:$0xff]
        %v235 = vld [vmem:[%s184 + $0x88] sm:$0xff]
        %v236 = vld [vmem:[%s184 + $0x90] sm:$0xff]
        %v237 = vld [vmem:[%s184 + $0x98] sm:$0xff]
        %v238 = vld [vmem:[%s184 + $0xa0] sm:$0xff]
        %v239 = vld [vmem:[%s184 + $0xa8] sm:$0xff]
        %v240 = vld [vmem:[%s184 + $0xb0] sm:$0xff]
        %v241 = vld [vmem:[%s184 + $0xb8] sm:$0xff]
        %v242 = vld [vmem:[%s184 + $0xc0] sm:$0xff]
        %v243 = vld [vmem:[%s184 + $0xc8] sm:$0xff]
        %v244 = vld [vmem:[%s184 + $0xd0] sm:$0xff]
        %v245 = vld [vmem:[%s184 + $0xd8] sm:$0xff]
        %v246 = vld [vmem:[%s184 + $0xe0] sm:$0xff]
        %v247 = vld [vmem:[%s184 + $0xe8] sm:$0xff]
        %v248 = vld [vmem:[%s184 + $0xf0] sm:$0xff]
        %v249 = vld [vmem:[%s184 + $0xf8] sm:$0xff]
        %vm250 = vcmask 64512
        %251 = vst.msk [vmem:[#allocation2 + $0x7] sm:$0xff] %vm250, %v186
        %252 = vst.msk [vmem:[#allocation2 + $0xf] sm:$0xff] %vm250, %v187
        %253 = vst.msk [vmem:[#allocation2 + $0x17] sm:$0xff] %vm250, %v188
        %254 = vst.msk [vmem:[#allocation2 + $0x1f] sm:$0xff] %vm250, %v189
        %255 = vst.msk [vmem:[#allocation2 + $0x27] sm:$0xff] %vm250, %v190
        %256 = vst.msk [vmem:[#allocation2 + $0x2f] sm:$0xff] %vm250, %v191
        %257 = vst.msk [vmem:[#allocation2 + $0x37] sm:$0xff] %vm250, %v192
        %258 = vst.msk [vmem:[#allocation2 + $0x3f] sm:$0xff] %vm250, %v193
        %259 = vst.msk [vmem:[#allocation2 + $0x47] sm:$0xff] %vm250, %v194
        %260 = vst.msk [vmem:[#allocation2 + $0x4f] sm:$0xff] %vm250, %v195
        %261 = vst.msk [vmem:[#allocation2 + $0x57] sm:$0xff] %vm250, %v196
        %262 = vst.msk [vmem:[#allocation2 + $0x5f] sm:$0xff] %vm250, %v197
        %263 = vst.msk [vmem:[#allocation2 + $0x67] sm:$0xff] %vm250, %v198
        %264 = vst.msk [vmem:[#allocation2 + $0x6f] sm:$0xff] %vm250, %v199
        %265 = vst.msk [vmem:[#allocation2 + $0x77] sm:$0xff] %vm250, %v200
        %266 = vst.msk [vmem:[#allocation2 + $0x7f] sm:$0xff] %vm250, %v201
        %267 = vst.msk [vmem:[#allocation2 + $0x87] sm:$0xff] %vm250, %v202
        %268 = vst.msk [vmem:[#allocation2 + $0x8f] sm:$0xff] %vm250, %v203
        %269 = vst.msk [vmem:[#allocation2 + $0x97] sm:$0xff] %vm250, %v204
        %270 = vst.msk [vmem:[#allocation2 + $0x9f] sm:$0xff] %vm250, %v205
        %271 = vst.msk [vmem:[#allocation2 + $0xa7] sm:$0xff] %vm250, %v206
        %272 = vst.msk [vmem:[#allocation2 + $0xaf] sm:$0xff] %vm250, %v207
        %273 = vst.msk [vmem:[#allocation2 + $0xb7] sm:$0xff] %vm250, %v208
        %274 = vst.msk [vmem:[#allocation2 + $0xbf] sm:$0xff] %vm250, %v209
        %275 = vst.msk [vmem:[#allocation2 + $0xc7] sm:$0xff] %vm250, %v210
        %276 = vst.msk [vmem:[#allocation2 + $0xcf] sm:$0xff] %vm250, %v211
        %277 = vst.msk [vmem:[#allocation2 + $0xd7] sm:$0xff] %vm250, %v212
        %278 = vst.msk [vmem:[#allocation2 + $0xdf] sm:$0xff] %vm250, %v213
        %279 = vst.msk [vmem:[#allocation2 + $0xe7] sm:$0xff] %vm250, %v214
        %280 = vst.msk [vmem:[#allocation2 + $0xef] sm:$0xff] %vm250, %v215
        %281 = vst.msk [vmem:[#allocation2 + $0xf7] sm:$0xff] %vm250, %v216
        %282 = vst.msk [vmem:[#allocation2 + $0xff] sm:$0xff] %vm250, %v217
        %315 = vrot.lane.b32.xlu0 %v218, 8
        %v316 = vpop.permute.xlu0 %315
        %317 = vrot.lane.b32.xlu0 %v219, 8
        %v318 = vpop.permute.xlu0 %317
        %319 = vrot.lane.b32.xlu0 %v220, 8
        %v320 = vpop.permute.xlu0 %319
        %321 = vrot.lane.b32.xlu0 %v221, 8
        %v322 = vpop.permute.xlu0 %321
        %323 = vrot.lane.b32.xlu0 %v222, 8
        %v324 = vpop.permute.xlu0 %323
        %325 = vrot.lane.b32.xlu0 %v223, 8
        %v326 = vpop.permute.xlu0 %325
        %327 = vrot.lane.b32.xlu0 %v224, 8
        %v328 = vpop.permute.xlu0 %327
        %329 = vrot.lane.b32.xlu0 %v225, 8
        %v330 = vpop.permute.xlu0 %329
        %331 = vrot.lane.b32.xlu0 %v226, 8
        %v332 = vpop.permute.xlu0 %331
        %333 = vrot.lane.b32.xlu0 %v227, 8
        %v334 = vpop.permute.xlu0 %333
        %335 = vrot.lane.b32.xlu0 %v228, 8
        %v336 = vpop.permute.xlu0 %335
        %337 = vrot.lane.b32.xlu0 %v229, 8
        %v338 = vpop.permute.xlu0 %337
        %339 = vrot.lane.b32.xlu0 %v230, 8
        %v340 = vpop.permute.xlu0 %339
        %341 = vrot.lane.b32.xlu0 %v231, 8
        %v342 = vpop.permute.xlu0 %341
        %343 = vrot.lane.b32.xlu0 %v232, 8
        %v344 = vpop.permute.xlu0 %343
        %345 = vrot.lane.b32.xlu0 %v233, 8
        %v346 = vpop.permute.xlu0 %345
        %347 = vrot.lane.b32.xlu0 %v234, 8
        %v348 = vpop.permute.xlu0 %347
        %349 = vrot.lane.b32.xlu0 %v235, 8
        %v350 = vpop.permute.xlu0 %349
        %351 = vrot.lane.b32.xlu0 %v236, 8
        %v352 = vpop.permute.xlu0 %351
        %353 = vrot.lane.b32.xlu0 %v237, 8
        %v354 = vpop.permute.xlu0 %353
        %355 = vrot.lane.b32.xlu0 %v238, 8
        %v356 = vpop.permute.xlu0 %355
        %357 = vrot.lane.b32.xlu0 %v239, 8
        %v358 = vpop.permute.xlu0 %357
        %359 = vrot.lane.b32.xlu0 %v240, 8
        %v360 = vpop.permute.xlu0 %359
        %361 = vrot.lane.b32.xlu0 %v241, 8
        %v362 = vpop.permute.xlu0 %361
        %363 = vrot.lane.b32.xlu0 %v242, 8
        %v364 = vpop.permute.xlu0 %363
        %365 = vrot.lane.b32.xlu0 %v243, 8
        %v366 = vpop.permute.xlu0 %365
        %367 = vrot.lane.b32.xlu0 %v244, 8
        %v368 = vpop.permute.xlu0 %367
        %369 = vrot.lane.b32.xlu0 %v245, 8
        %v370 = vpop.permute.xlu0 %369
        %371 = vrot.lane.b32.xlu0 %v246, 8
        %v372 = vpop.permute.xlu0 %371
        %373 = vrot.lane.b32.xlu0 %v247, 8
        %v374 = vpop.permute.xlu0 %373
        %375 = vrot.lane.b32.xlu0 %v248, 8
        %v376 = vpop.permute.xlu0 %375
        %377 = vrot.lane.b32.xlu0 %v249, 8
        %v378 = vpop.permute.xlu0 %377
        %vm411 = vcmask 130112
        %412 = vst.msk [vmem:[#allocation2 + $0x7] sm:$0xff] %vm411, %v316
        %413 = vst.msk [vmem:[#allocation2 + $0xf] sm:$0xff] %vm411, %v318
        %414 = vst.msk [vmem:[#allocation2 + $0x17] sm:$0xff] %vm411, %v320
        %415 = vst.msk [vmem:[#allocation2 + $0x1f] sm:$0xff] %vm411, %v322
        %416 = vst.msk [vmem:[#allocation2 + $0x27] sm:$0xff] %vm411, %v324
        %417 = vst.msk [vmem:[#allocation2 + $0x2f] sm:$0xff] %vm411, %v326
        %418 = vst.msk [vmem:[#allocation2 + $0x37] sm:$0xff] %vm411, %v328
        %419 = vst.msk [vmem:[#allocation2 + $0x3f] sm:$0xff] %vm411, %v330
        %420 = vst.msk [vmem:[#allocation2 + $0x47] sm:$0xff] %vm411, %v332
        %421 = vst.msk [vmem:[#allocation2 + $0x4f] sm:$0xff] %vm411, %v334
        %422 = vst.msk [vmem:[#allocation2 + $0x57] sm:$0xff] %vm411, %v336
        %423 = vst.msk [vmem:[#allocation2 + $0x5f] sm:$0xff] %vm411, %v338
        %424 = vst.msk [vmem:[#allocation2 + $0x67] sm:$0xff] %vm411, %v340
        %425 = vst.msk [vmem:[#allocation2 + $0x6f] sm:$0xff] %vm411, %v342
        %426 = vst.msk [vmem:[#allocation2 + $0x77] sm:$0xff] %vm411, %v344
        %427 = vst.msk [vmem:[#allocation2 + $0x7f] sm:$0xff] %vm411, %v346
        %428 = vst.msk [vmem:[#allocation2 + $0x87] sm:$0xff] %vm411, %v348
        %429 = vst.msk [vmem:[#allocation2 + $0x8f] sm:$0xff] %vm411, %v350
        %430 = vst.msk [vmem:[#allocation2 + $0x97] sm:$0xff] %vm411, %v352
        %431 = vst.msk [vmem:[#allocation2 + $0x9f] sm:$0xff] %vm411, %v354
        %432 = vst.msk [vmem:[#allocation2 + $0xa7] sm:$0xff] %vm411, %v356
        %433 = vst.msk [vmem:[#allocation2 + $0xaf] sm:$0xff] %vm411, %v358
        %434 = vst.msk [vmem:[#allocation2 + $0xb7] sm:$0xff] %vm411, %v360
        %435 = vst.msk [vmem:[#allocation2 + $0xbf] sm:$0xff] %vm411, %v362
        %436 = vst.msk [vmem:[#allocation2 + $0xc7] sm:$0xff] %vm411, %v364
        %437 = vst.msk [vmem:[#allocation2 + $0xcf] sm:$0xff] %vm411, %v366
        %438 = vst.msk [vmem:[#allocation2 + $0xd7] sm:$0xff] %vm411, %v368
        %439 = vst.msk [vmem:[#allocation2 + $0xdf] sm:$0xff] %vm411, %v370
        %440 = vst.msk [vmem:[#allocation2 + $0xe7] sm:$0xff] %vm411, %v372
        %441 = vst.msk [vmem:[#allocation2 + $0xef] sm:$0xff] %vm411, %v374
        %442 = vst.msk [vmem:[#allocation2 + $0xf7] sm:$0xff] %vm411, %v376
        %443 = vst.msk [vmem:[#allocation2 + $0xff] sm:$0xff] %vm411, %v378
        %v444 = vperm.slane %v186, 0
        %vm445 = vcmask 63488
        %446 = vst.msk [vmem:[#allocation2] sm:$0x7f] %vm445, %v444
        %v447 = vperm.slane %v218, 0
        %449 = vrot.lane.b32.xlu0 %v447, 8
        %v450 = vpop.permute.xlu0 %449
        %vm452 = vcmask 129088
        %453 = vst.msk [vmem:[#allocation2] sm:$0x7f] %vm452, %v450
        %v454 = vperm.slane %v217, 7
        %455 = vst.msk [vmem:[#allocation2 + $0x107] sm:$0xff] %vm250, %v454
        %v456 = vperm.slane %v249, 7
        %458 = vrot.lane.b32.xlu0 %v456, 8
        %v459 = vpop.permute.xlu0 %458
        %461 = vst.msk [vmem:[#allocation2 + $0x107] sm:$0xff] %vm411, %v459
        %v462 = vld [vmem:[#allocation2] sm:$0xff]
        %v463 = vld [vmem:[#allocation2 + $0x8] sm:$0xff]
        %v464 = vld [vmem:[#allocation2 + $0x10] sm:$0xff]
        %v465 = vld [vmem:[#allocation2 + $0x18] sm:$0xff]
        %v466 = vld [vmem:[#allocation2 + $0x20] sm:$0xff]
        %v467 = vld [vmem:[#allocation2 + $0x28] sm:$0xff]
        %v468 = vld [vmem:[#allocation2 + $0x30] sm:$0xff]
        %v469 = vld [vmem:[#allocation2 + $0x38] sm:$0xff]
        %v470 = vld [vmem:[#allocation2 + $0x40] sm:$0xff]
        %v471 = vld [vmem:[#allocation2 + $0x48] sm:$0xff]
        %v472 = vld [vmem:[#allocation2 + $0x50] sm:$0xff]
        %v473 = vld [vmem:[#allocation2 + $0x58] sm:$0xff]
        %v474 = vld [vmem:[#allocation2 + $0x60] sm:$0xff]
        %v475 = vld [vmem:[#allocation2 + $0x68] sm:$0xff]
        %v476 = vld [vmem:[#allocation2 + $0x70] sm:$0xff]
        %v477 = vld [vmem:[#allocation2 + $0x78] sm:$0xff]
        %v478 = vld [vmem:[#allocation2 + $0x80] sm:$0xff]
        %v479 = vld [vmem:[#allocation2 + $0x88] sm:$0xff]
        %v480 = vld [vmem:[#allocation2 + $0x90] sm:$0xff]
        %v481 = vld [vmem:[#allocation2 + $0x98] sm:$0xff]
        %v482 = vld [vmem:[#allocation2 + $0xa0] sm:$0xff]
        %v483 = vld [vmem:[#allocation2 + $0xa8] sm:$0xff]
        %v484 = vld [vmem:[#allocation2 + $0xb0] sm:$0xff]
        %v485 = vld [vmem:[#allocation2 + $0xb8] sm:$0xff]
        %v486 = vld [vmem:[#allocation2 + $0xc0] sm:$0xff]
        %v487 = vld [vmem:[#allocation2 + $0xc8] sm:$0xff]
        %v488 = vld [vmem:[#allocation2 + $0xd0] sm:$0xff]
        %v489 = vld [vmem:[#allocation2 + $0xd8] sm:$0xff]
        %v490 = vld [vmem:[#allocation2 + $0xe0] sm:$0xff]
        %v491 = vld [vmem:[#allocation2 + $0xe8] sm:$0xff]
        %v492 = vld [vmem:[#allocation2 + $0xf0] sm:$0xff]
        %v493 = vld [vmem:[#allocation2 + $0xf8] sm:$0xff]
        %v494 = vpack.c.bf16 %v462, %v462
        %v495 = vpack.c.bf16 %v463, %v463
        %v496 = vpack.c.bf16 %v464, %v464
        %v497 = vpack.c.bf16 %v465, %v465
        %v498 = vpack.c.bf16 %v466, %v466
        %v499 = vpack.c.bf16 %v467, %v467
        %v500 = vpack.c.bf16 %v468, %v468
        %v501 = vpack.c.bf16 %v469, %v469
        %v502 = vpack.c.bf16 %v470, %v470
        %v503 = vpack.c.bf16 %v471, %v471
        %v504 = vpack.c.bf16 %v472, %v472
        %v505 = vpack.c.bf16 %v473, %v473
        %v506 = vpack.c.bf16 %v474, %v474
        %v507 = vpack.c.bf16 %v475, %v475
        %v508 = vpack.c.bf16 %v476, %v476
        %v509 = vpack.c.bf16 %v477, %v477
        %v510 = vpack.c.bf16 %v478, %v478
        %v511 = vpack.c.bf16 %v479, %v479
        %v512 = vpack.c.bf16 %v480, %v480
        %v513 = vpack.c.bf16 %v481, %v481
        %v514 = vpack.c.bf16 %v482, %v482
        %v515 = vpack.c.bf16 %v483, %v483
        %v516 = vpack.c.bf16 %v484, %v484
        %v517 = vpack.c.bf16 %v485, %v485
        %v518 = vpack.c.bf16 %v486, %v486
        %v519 = vpack.c.bf16 %v487, %v487
        %v520 = vpack.c.bf16 %v488, %v488
        %v521 = vpack.c.bf16 %v489, %v489
        %v522 = vpack.c.bf16 %v490, %v490
        %v523 = vpack.c.bf16 %v491, %v491
        %v524 = vpack.c.bf16 %v492, %v492
        %v525 = vpack.c.bf16 %v493, %v493
        %vm526 = vcmask 125952
        %527 = vst.msk [vmem:[#allocation3] sm:$0xf] %vm526, %v494
        %528 = vst.msk [vmem:[#allocation3 + $0x8] sm:$0xf] %vm526, %v495
        %529 = vst.msk [vmem:[#allocation3 + $0x10] sm:$0xf] %vm526, %v496
        %530 = vst.msk [vmem:[#allocation3 + $0x18] sm:$0xf] %vm526, %v497
        %531 = vst.msk [vmem:[#allocation3 + $0x20] sm:$0xf] %vm526, %v498
        %532 = vst.msk [vmem:[#allocation3 + $0x28] sm:$0xf] %vm526, %v499
        %533 = vst.msk [vmem:[#allocation3 + $0x30] sm:$0xf] %vm526, %v500
        %534 = vst.msk [vmem:[#allocation3 + $0x38] sm:$0xf] %vm526, %v501
        %535 = vst.msk [vmem:[#allocation3 + $0x40] sm:$0xf] %vm526, %v502
        %536 = vst.msk [vmem:[#allocation3 + $0x48] sm:$0xf] %vm526, %v503
        %537 = vst.msk [vmem:[#allocation3 + $0x50] sm:$0xf] %vm526, %v504
        %538 = vst.msk [vmem:[#allocation3 + $0x58] sm:$0xf] %vm526, %v505
        %539 = vst.msk [vmem:[#allocation3 + $0x60] sm:$0xf] %vm526, %v506
        %540 = vst.msk [vmem:[#allocation3 + $0x68] sm:$0xf] %vm526, %v507
        %541 = vst.msk [vmem:[#allocation3 + $0x70] sm:$0xf] %vm526, %v508
        %542 = vst.msk [vmem:[#allocation3 + $0x78] sm:$0xf] %vm526, %v509
        %543 = vst.msk [vmem:[#allocation3 + $0x80] sm:$0xf] %vm526, %v510
        %544 = vst.msk [vmem:[#allocation3 + $0x88] sm:$0xf] %vm526, %v511
        %545 = vst.msk [vmem:[#allocation3 + $0x90] sm:$0xf] %vm526, %v512
        %546 = vst.msk [vmem:[#allocation3 + $0x98] sm:$0xf] %vm526, %v513
        %547 = vst.msk [vmem:[#allocation3 + $0xa0] sm:$0xf] %vm526, %v514
        %548 = vst.msk [vmem:[#allocation3 + $0xa8] sm:$0xf] %vm526, %v515
        %549 = vst.msk [vmem:[#allocation3 + $0xb0] sm:$0xf] %vm526, %v516
        %550 = vst.msk [vmem:[#allocation3 + $0xb8] sm:$0xf] %vm526, %v517
        %551 = vst.msk [vmem:[#allocation3 + $0xc0] sm:$0xf] %vm526, %v518
        %552 = vst.msk [vmem:[#allocation3 + $0xc8] sm:$0xf] %vm526, %v519
        %553 = vst.msk [vmem:[#allocation3 + $0xd0] sm:$0xf] %vm526, %v520
        %554 = vst.msk [vmem:[#allocation3 + $0xd8] sm:$0xf] %vm526, %v521
        %555 = vst.msk [vmem:[#allocation3 + $0xe0] sm:$0xf] %vm526, %v522
        %556 = vst.msk [vmem:[#allocation3 + $0xe8] sm:$0xf] %vm526, %v523
        %557 = vst.msk [vmem:[#allocation3 + $0xf0] sm:$0xf] %vm526, %v524
        %558 = vst.msk [vmem:[#allocation3 + $0xf8] sm:$0xf] %vm526, %v525
        %v559 = vld [vmem:[#allocation2 + $0x1] sm:$0xff]
        %v560 = vld [vmem:[#allocation2 + $0x9] sm:$0xff]
        %v561 = vld [vmem:[#allocation2 + $0x11] sm:$0xff]
        %v562 = vld [vmem:[#allocation2 + $0x19] sm:$0xff]
        %v563 = vld [vmem:[#allocation2 + $0x21] sm:$0xff]
        %v564 = vld [vmem:[#allocation2 + $0x29] sm:$0xff]
        %v565 = vld [vmem:[#allocation2 + $0x31] sm:$0xff]
        %v566 = vld [vmem:[#allocation2 + $0x39] sm:$0xff]
        %v567 = vld [vmem:[#allocation2 + $0x41] sm:$0xff]
        %v568 = vld [vmem:[#allocation2 + $0x49] sm:$0xff]
        %v569 = vld [vmem:[#allocation2 + $0x51] sm:$0xff]
        %v570 = vld [vmem:[#allocation2 + $0x59] sm:$0xff]
        %v571 = vld [vmem:[#allocation2 + $0x61] sm:$0xff]
        %v572 = vld [vmem:[#allocation2 + $0x69] sm:$0xff]
        %v573 = vld [vmem:[#allocation2 + $0x71] sm:$0xff]
        %v574 = vld [vmem:[#allocation2 + $0x79] sm:$0xff]
        %v575 = vld [vmem:[#allocation2 + $0x81] sm:$0xff]
        %v576 = vld [vmem:[#allocation2 + $0x89] sm:$0xff]
        %v577 = vld [vmem:[#allocation2 + $0x91] sm:$0xff]
        %v578 = vld [vmem:[#allocation2 + $0x99] sm:$0xff]
        %v579 = vld [vmem:[#allocation2 + $0xa1] sm:$0xff]
        %v580 = vld [vmem:[#allocation2 + $0xa9] sm:$0xff]
        %v581 = vld [vmem:[#allocation2 + $0xb1] sm:$0xff]
        %v582 = vld [vmem:[#allocation2 + $0xb9] sm:$0xff]
        %v583 = vld [vmem:[#allocation2 + $0xc1] sm:$0xff]
        %v584 = vld [vmem:[#allocation2 + $0xc9] sm:$0xff]
        %v585 = vld [vmem:[#allocation2 + $0xd1] sm:$0xff]
        %v586 = vld [vmem:[#allocation2 + $0xd9] sm:$0xff]
        %v587 = vld [vmem:[#allocation2 + $0xe1] sm:$0xff]
        %v588 = vld [vmem:[#allocation2 + $0xe9] sm:$0xff]
        %v589 = vld [vmem:[#allocation2 + $0xf1] sm:$0xff]
        %v590 = vld [vmem:[#allocation2 + $0xf9] sm:$0xff]
        %v591 = vpack.c.bf16 %v559, %v559
        %v592 = vpack.c.bf16 %v560, %v560
        %v593 = vpack.c.bf16 %v561, %v561
        %v594 = vpack.c.bf16 %v562, %v562
        %v595 = vpack.c.bf16 %v563, %v563
        %v596 = vpack.c.bf16 %v564, %v564
        %v597 = vpack.c.bf16 %v565, %v565
        %v598 = vpack.c.bf16 %v566, %v566
        %v599 = vpack.c.bf16 %v567, %v567
        %v600 = vpack.c.bf16 %v568, %v568
        %v601 = vpack.c.bf16 %v569, %v569
        %v602 = vpack.c.bf16 %v570, %v570
        %v603 = vpack.c.bf16 %v571, %v571
        %v604 = vpack.c.bf16 %v572, %v572
        %v605 = vpack.c.bf16 %v573, %v573
        %v606 = vpack.c.bf16 %v574, %v574
        %v607 = vpack.c.bf16 %v575, %v575
        %v608 = vpack.c.bf16 %v576, %v576
        %v609 = vpack.c.bf16 %v577, %v577
        %v610 = vpack.c.bf16 %v578, %v578
        %v611 = vpack.c.bf16 %v579, %v579
        %v612 = vpack.c.bf16 %v580, %v580
        %v613 = vpack.c.bf16 %v581, %v581
        %v614 = vpack.c.bf16 %v582, %v582
        %v615 = vpack.c.bf16 %v583, %v583
        %v616 = vpack.c.bf16 %v584, %v584
        %v617 = vpack.c.bf16 %v585, %v585
        %v618 = vpack.c.bf16 %v586, %v586
        %v619 = vpack.c.bf16 %v587, %v587
        %v620 = vpack.c.bf16 %v588, %v588
        %v621 = vpack.c.bf16 %v589, %v589
        %v622 = vpack.c.bf16 %v590, %v590
        %655 = vrot.lane.b32.xlu0 %v591, 16
        %v656 = vpop.permute.xlu0 %655
        %657 = vrot.lane.b32.xlu0 %v592, 16
        %v658 = vpop.permute.xlu0 %657
        %659 = vrot.lane.b32.xlu0 %v593, 16
        %v660 = vpop.permute.xlu0 %659
        %661 = vrot.lane.b32.xlu0 %v594, 16
        %v662 = vpop.permute.xlu0 %661
        %663 = vrot.lane.b32.xlu0 %v595, 16
        %v664 = vpop.permute.xlu0 %663
        %665 = vrot.lane.b32.xlu0 %v596, 16
        %v666 = vpop.permute.xlu0 %665
        %667 = vrot.lane.b32.xlu0 %v597, 16
        %v668 = vpop.permute.xlu0 %667
        %669 = vrot.lane.b32.xlu0 %v598, 16
        %v670 = vpop.permute.xlu0 %669
        %671 = vrot.lane.b32.xlu0 %v599, 16
        %v672 = vpop.permute.xlu0 %671
        %673 = vrot.lane.b32.xlu0 %v600, 16
        %v674 = vpop.permute.xlu0 %673
        %675 = vrot.lane.b32.xlu0 %v601, 16
        %v676 = vpop.permute.xlu0 %675
        %677 = vrot.lane.b32.xlu0 %v602, 16
        %v678 = vpop.permute.xlu0 %677
        %679 = vrot.lane.b32.xlu0 %v603, 16
        %v680 = vpop.permute.xlu0 %679
        %681 = vrot.lane.b32.xlu0 %v604, 16
        %v682 = vpop.permute.xlu0 %681
        %683 = vrot.lane.b32.xlu0 %v605, 16
        %v684 = vpop.permute.xlu0 %683
        %685 = vrot.lane.b32.xlu0 %v606, 16
        %v686 = vpop.permute.xlu0 %685
        %687 = vrot.lane.b32.xlu0 %v607, 16
        %v688 = vpop.permute.xlu0 %687
        %689 = vrot.lane.b32.xlu0 %v608, 16
        %v690 = vpop.permute.xlu0 %689
        %691 = vrot.lane.b32.xlu0 %v609, 16
        %v692 = vpop.permute.xlu0 %691
        %693 = vrot.lane.b32.xlu0 %v610, 16
        %v694 = vpop.permute.xlu0 %693
        %695 = vrot.lane.b32.xlu0 %v611, 16
        %v696 = vpop.permute.xlu0 %695
        %697 = vrot.lane.b32.xlu0 %v612, 16
        %v698 = vpop.permute.xlu0 %697
        %699 = vrot.lane.b32.xlu0 %v613, 16
        %v700 = vpop.permute.xlu0 %699
        %701 = vrot.lane.b32.xlu0 %v614, 16
        %v702 = vpop.permute.xlu0 %701
        %703 = vrot.lane.b32.xlu0 %v615, 16
        %v704 = vpop.permute.xlu0 %703
        %705 = vrot.lane.b32.xlu0 %v616, 16
        %v706 = vpop.permute.xlu0 %705
        %707 = vrot.lane.b32.xlu0 %v617, 16
        %v708 = vpop.permute.xlu0 %707
        %709 = vrot.lane.b32.xlu0 %v618, 16
        %v710 = vpop.permute.xlu0 %709
        %711 = vrot.lane.b32.xlu0 %v619, 16
        %v712 = vpop.permute.xlu0 %711
        %713 = vrot.lane.b32.xlu0 %v620, 16
        %v714 = vpop.permute.xlu0 %713
        %715 = vrot.lane.b32.xlu0 %v621, 16
        %v716 = vpop.permute.xlu0 %715
        %717 = vrot.lane.b32.xlu0 %v622, 16
        %v718 = vpop.permute.xlu0 %717
        %vm751 = vcmask 257152
        %752 = vst.msk [vmem:[#allocation3] sm:$0xf] %vm751, %v656
        %753 = vst.msk [vmem:[#allocation3 + $0x8] sm:$0xf] %vm751, %v658
        %754 = vst.msk [vmem:[#allocation3 + $0x10] sm:$0xf] %vm751, %v660
        %755 = vst.msk [vmem:[#allocation3 + $0x18] sm:$0xf] %vm751, %v662
        %756 = vst.msk [vmem:[#allocation3 + $0x20] sm:$0xf] %vm751, %v664
        %757 = vst.msk [vmem:[#allocation3 + $0x28] sm:$0xf] %vm751, %v666
        %758 = vst.msk [vmem:[#allocation3 + $0x30] sm:$0xf] %vm751, %v668
        %759 = vst.msk [vmem:[#allocation3 + $0x38] sm:$0xf] %vm751, %v670
        %760 = vst.msk [vmem:[#allocation3 + $0x40] sm:$0xf] %vm751, %v672
        %761 = vst.msk [vmem:[#allocation3 + $0x48] sm:$0xf] %vm751, %v674
        %762 = vst.msk [vmem:[#allocation3 + $0x50] sm:$0xf] %vm751, %v676
        %763 = vst.msk [vmem:[#allocation3 + $0x58] sm:$0xf] %vm751, %v678
        %764 = vst.msk [vmem:[#allocation3 + $0x60] sm:$0xf] %vm751, %v680
        %765 = vst.msk [vmem:[#allocation3 + $0x68] sm:$0xf] %vm751, %v682
        %766 = vst.msk [vmem:[#allocation3 + $0x70] sm:$0xf] %vm751, %v684
        %767 = vst.msk [vmem:[#allocation3 + $0x78] sm:$0xf] %vm751, %v686
        %768 = vst.msk [vmem:[#allocation3 + $0x80] sm:$0xf] %vm751, %v688
        %769 = vst.msk [vmem:[#allocation3 + $0x88] sm:$0xf] %vm751, %v690
        %770 = vst.msk [vmem:[#allocation3 + $0x90] sm:$0xf] %vm751, %v692
        %771 = vst.msk [vmem:[#allocation3 + $0x98] sm:$0xf] %vm751, %v694
        %772 = vst.msk [vmem:[#allocation3 + $0xa0] sm:$0xf] %vm751, %v696
        %773 = vst.msk [vmem:[#allocation3 + $0xa8] sm:$0xf] %vm751, %v698
        %774 = vst.msk [vmem:[#allocation3 + $0xb0] sm:$0xf] %vm751, %v700
        %775 = vst.msk [vmem:[#allocation3 + $0xb8] sm:$0xf] %vm751, %v702
        %776 = vst.msk [vmem:[#allocation3 + $0xc0] sm:$0xf] %vm751, %v704
        %777 = vst.msk [vmem:[#allocation3 + $0xc8] sm:$0xf] %vm751, %v706
        %778 = vst.msk [vmem:[#allocation3 + $0xd0] sm:$0xf] %vm751, %v708
        %779 = vst.msk [vmem:[#allocation3 + $0xd8] sm:$0xf] %vm751, %v710
        %780 = vst.msk [vmem:[#allocation3 + $0xe0] sm:$0xf] %vm751, %v712
        %781 = vst.msk [vmem:[#allocation3 + $0xe8] sm:$0xf] %vm751, %v714
        %782 = vst.msk [vmem:[#allocation3 + $0xf0] sm:$0xf] %vm751, %v716
        %783 = vst.msk [vmem:[#allocation3 + $0xf8] sm:$0xf] %vm751, %v718
        %v784 = vld [vmem:[#allocation2 + $0x2] sm:$0xff]
        %v785 = vld [vmem:[#allocation2 + $0xa] sm:$0xff]
        %v786 = vld [vmem:[#allocation2 + $0x12] sm:$0xff]
        %v787 = vld [vmem:[#allocation2 + $0x1a] sm:$0xff]
        %v788 = vld [vmem:[#allocation2 + $0x22] sm:$0xff]
        %v789 = vld [vmem:[#allocation2 + $0x2a] sm:$0xff]
        %v790 = vld [vmem:[#allocation2 + $0x32] sm:$0xff]
        %v791 = vld [vmem:[#allocation2 + $0x3a] sm:$0xff]
        %v792 = vld [vmem:[#allocation2 + $0x42] sm:$0xff]
        %v793 = vld [vmem:[#allocation2 + $0x4a] sm:$0xff]
        %v794 = vld [vmem:[#allocation2 + $0x52] sm:$0xff]
        %v795 = vld [vmem:[#allocation2 + $0x5a] sm:$0xff]
        %v796 = vld [vmem:[#allocation2 + $0x62] sm:$0xff]
        %v797 = vld [vmem:[#allocation2 + $0x6a] sm:$0xff]
        %v798 = vld [vmem:[#allocation2 + $0x72] sm:$0xff]
        %v799 = vld [vmem:[#allocation2 + $0x7a] sm:$0xff]
        %v800 = vld [vmem:[#allocation2 + $0x82] sm:$0xff]
        %v801 = vld [vmem:[#allocation2 + $0x8a] sm:$0xff]
        %v802 = vld [vmem:[#allocation2 + $0x92] sm:$0xff]
        %v803 = vld [vmem:[#allocation2 + $0x9a] sm:$0xff]
        %v804 = vld [vmem:[#allocation2 + $0xa2] sm:$0xff]
        %v805 = vld [vmem:[#allocation2 + $0xaa] sm:$0xff]
        %v806 = vld [vmem:[#allocation2 + $0xb2] sm:$0xff]
        %v807 = vld [vmem:[#allocation2 + $0xba] sm:$0xff]
        %v808 = vld [vmem:[#allocation2 + $0xc2] sm:$0xff]
        %v809 = vld [vmem:[#allocation2 + $0xca] sm:$0xff]
        %v810 = vld [vmem:[#allocation2 + $0xd2] sm:$0xff]
        %v811 = vld [vmem:[#allocation2 + $0xda] sm:$0xff]
        %v812 = vld [vmem:[#allocation2 + $0xe2] sm:$0xff]
        %v813 = vld [vmem:[#allocation2 + $0xea] sm:$0xff]
        %v814 = vld [vmem:[#allocation2 + $0xf2] sm:$0xff]
        %v815 = vld [vmem:[#allocation2 + $0xfa] sm:$0xff]
        %v816 = vpack.c.bf16 %v784, %v784
        %v817 = vpack.c.bf16 %v785, %v785
        %v818 = vpack.c.bf16 %v786, %v786
        %v819 = vpack.c.bf16 %v787, %v787
        %v820 = vpack.c.bf16 %v788, %v788
        %v821 = vpack.c.bf16 %v789, %v789
        %v822 = vpack.c.bf16 %v790, %v790
        %v823 = vpack.c.bf16 %v791, %v791
        %v824 = vpack.c.bf16 %v792, %v792
        %v825 = vpack.c.bf16 %v793, %v793
        %v826 = vpack.c.bf16 %v794, %v794
        %v827 = vpack.c.bf16 %v795, %v795
        %v828 = vpack.c.bf16 %v796, %v796
        %v829 = vpack.c.bf16 %v797, %v797
        %v830 = vpack.c.bf16 %v798, %v798
        %v831 = vpack.c.bf16 %v799, %v799
        %v832 = vpack.c.bf16 %v800, %v800
        %v833 = vpack.c.bf16 %v801, %v801
        %v834 = vpack.c.bf16 %v802, %v802
        %v835 = vpack.c.bf16 %v803, %v803
        %v836 = vpack.c.bf16 %v804, %v804
        %v837 = vpack.c.bf16 %v805, %v805
        %v838 = vpack.c.bf16 %v806, %v806
        %v839 = vpack.c.bf16 %v807, %v807
        %v840 = vpack.c.bf16 %v808, %v808
        %v841 = vpack.c.bf16 %v809, %v809
        %v842 = vpack.c.bf16 %v810, %v810
        %v843 = vpack.c.bf16 %v811, %v811
        %v844 = vpack.c.bf16 %v812, %v812
        %v845 = vpack.c.bf16 %v813, %v813
        %v846 = vpack.c.bf16 %v814, %v814
        %v847 = vpack.c.bf16 %v815, %v815
        %880 = vrot.lane.b32.xlu0 %v816, 32
        %v881 = vpop.permute.xlu0 %880
        %882 = vrot.lane.b32.xlu0 %v817, 32
        %v883 = vpop.permute.xlu0 %882
        %884 = vrot.lane.b32.xlu0 %v818, 32
        %v885 = vpop.permute.xlu0 %884
        %886 = vrot.lane.b32.xlu0 %v819, 32
        %v887 = vpop.permute.xlu0 %886
        %888 = vrot.lane.b32.xlu0 %v820, 32
        %v889 = vpop.permute.xlu0 %888
        %890 = vrot.lane.b32.xlu0 %v821, 32
        %v891 = vpop.permute.xlu0 %890
        %892 = vrot.lane.b32.xlu0 %v822, 32
        %v893 = vpop.permute.xlu0 %892
        %894 = vrot.lane.b32.xlu0 %v823, 32
        %v895 = vpop.permute.xlu0 %894
        %896 = vrot.lane.b32.xlu0 %v824, 32
        %v897 = vpop.permute.xlu0 %896
        %898 = vrot.lane.b32.xlu0 %v825, 32
        %v899 = vpop.permute.xlu0 %898
        %900 = vrot.lane.b32.xlu0 %v826, 32
        %v901 = vpop.permute.xlu0 %900
        %902 = vrot.lane.b32.xlu0 %v827, 32
        %v903 = vpop.permute.xlu0 %902
        %904 = vrot.lane.b32.xlu0 %v828, 32
        %v905 = vpop.permute.xlu0 %904
        %906 = vrot.lane.b32.xlu0 %v829, 32
        %v907 = vpop.permute.xlu0 %906
        %908 = vrot.lane.b32.xlu0 %v830, 32
        %v909 = vpop.permute.xlu0 %908
        %910 = vrot.lane.b32.xlu0 %v831, 32
        %v911 = vpop.permute.xlu0 %910
        %912 = vrot.lane.b32.xlu0 %v832, 32
        %v913 = vpop.permute.xlu0 %912
        %914 = vrot.lane.b32.xlu0 %v833, 32
        %v915 = vpop.permute.xlu0 %914
        %916 = vrot.lane.b32.xlu0 %v834, 32
        %v917 = vpop.permute.xlu0 %916
        %918 = vrot.lane.b32.xlu0 %v835, 32
        %v919 = vpop.permute.xlu0 %918
        %920 = vrot.lane.b32.xlu0 %v836, 32
        %v921 = vpop.permute.xlu0 %920
        %922 = vrot.lane.b32.xlu0 %v837, 32
        %v923 = vpop.permute.xlu0 %922
        %924 = vrot.lane.b32.xlu0 %v838, 32
        %v925 = vpop.permute.xlu0 %924
        %926 = vrot.lane.b32.xlu0 %v839, 32
        %v927 = vpop.permute.xlu0 %926
        %928 = vrot.lane.b32.xlu0 %v840, 32
        %v929 = vpop.permute.xlu0 %928
        %930 = vrot.lane.b32.xlu0 %v841, 32
        %v931 = vpop.permute.xlu0 %930
        %932 = vrot.lane.b32.xlu0 %v842, 32
        %v933 = vpop.permute.xlu0 %932
        %934 = vrot.lane.b32.xlu0 %v843, 32
        %v935 = vpop.permute.xlu0 %934
        %936 = vrot.lane.b32.xlu0 %v844, 32
        %v937 = vpop.permute.xlu0 %936
        %938 = vrot.lane.b32.xlu0 %v845, 32
        %v939 = vpop.permute.xlu0 %938
        %940 = vrot.lane.b32.xlu0 %v846, 32
        %v941 = vpop.permute.xlu0 %940
        %942 = vrot.lane.b32.xlu0 %v847, 32
        %v943 = vpop.permute.xlu0 %942
        %vm976 = vcmask 388352
        %977 = vst.msk [vmem:[#allocation3] sm:$0xf] %vm976, %v881
        %978 = vst.msk [vmem:[#allocation3 + $0x8] sm:$0xf] %vm976, %v883
        %979 = vst.msk [vmem:[#allocation3 + $0x10] sm:$0xf] %vm976, %v885
        %980 = vst.msk [vmem:[#allocation3 + $0x18] sm:$0xf] %vm976, %v887
        %981 = vst.msk [vmem:[#allocation3 + $0x20] sm:$0xf] %vm976, %v889
        %982 = vst.msk [vmem:[#allocation3 + $0x28] sm:$0xf] %vm976, %v891
        %983 = vst.msk [vmem:[#allocation3 + $0x30] sm:$0xf] %vm976, %v893
        %984 = vst.msk [vmem:[#allocation3 + $0x38] sm:$0xf] %vm976, %v895
        %985 = vst.msk [vmem:[#allocation3 + $0x40] sm:$0xf] %vm976, %v897
        %986 = vst.msk [vmem:[#allocation3 + $0x48] sm:$0xf] %vm976, %v899
        %987 = vst.msk [vmem:[#allocation3 + $0x50] sm:$0xf] %vm976, %v901
        %988 = vst.msk [vmem:[#allocation3 + $0x58] sm:$0xf] %vm976, %v903
        %989 = vst.msk [vmem:[#allocation3 + $0x60] sm:$0xf] %vm976, %v905
        %990 = vst.msk [vmem:[#allocation3 + $0x68] sm:$0xf] %vm976, %v907
        %991 = vst.msk [vmem:[#allocation3 + $0x70] sm:$0xf] %vm976, %v909
        %992 = vst.msk [vmem:[#allocation3 + $0x78] sm:$0xf] %vm976, %v911
        %993 = vst.msk [vmem:[#allocation3 + $0x80] sm:$0xf] %vm976, %v913
        %994 = vst.msk [vmem:[#allocation3 + $0x88] sm:$0xf] %vm976, %v915
        %995 = vst.msk [vmem:[#allocation3 + $0x90] sm:$0xf] %vm976, %v917
        %996 = vst.msk [vmem:[#allocation3 + $0x98] sm:$0xf] %vm976, %v919
        %997 = vst.msk [vmem:[#allocation3 + $0xa0] sm:$0xf] %vm976, %v921
        %998 = vst.msk [vmem:[#allocation3 + $0xa8] sm:$0xf] %vm976, %v923
        %999 = vst.msk [vmem:[#allocation3 + $0xb0] sm:$0xf] %vm976, %v925
        %1000 = vst.msk [vmem:[#allocation3 + $0xb8] sm:$0xf] %vm976, %v927
        %1001 = vst.msk [vmem:[#allocation3 + $0xc0] sm:$0xf] %vm976, %v929
        %1002 = vst.msk [vmem:[#allocation3 + $0xc8] sm:$0xf] %vm976, %v931
        %1003 = vst.msk [vmem:[#allocation3 + $0xd0] sm:$0xf] %vm976, %v933
        %1004 = vst.msk [vmem:[#allocation3 + $0xd8] sm:$0xf] %vm976, %v935
        %1005 = vst.msk [vmem:[#allocation3 + $0xe0] sm:$0xf] %vm976, %v937
        %1006 = vst.msk [vmem:[#allocation3 + $0xe8] sm:$0xf] %vm976, %v939
        %1007 = vst.msk [vmem:[#allocation3 + $0xf0] sm:$0xf] %vm976, %v941
        %1008 = vst.msk [vmem:[#allocation3 + $0xf8] sm:$0xf] %vm976, %v943
        %v1009 = vld [vmem:[#allocation2 + $0x3] sm:$0xff]
        %v1010 = vld [vmem:[#allocation2 + $0xb] sm:$0xff]
        %v1011 = vld [vmem:[#allocation2 + $0x13] sm:$0xff]
        %v1012 = vld [vmem:[#allocation2 + $0x1b] sm:$0xff]
        %v1013 = vld [vmem:[#allocation2 + $0x23] sm:$0xff]
        %v1014 = vld [vmem:[#allocation2 + $0x2b] sm:$0xff]
        %v1015 = vld [vmem:[#allocation2 + $0x33] sm:$0xff]
        %v1016 = vld [vmem:[#allocation2 + $0x3b] sm:$0xff]
        %v1017 = vld [vmem:[#allocation2 + $0x43] sm:$0xff]
        %v1018 = vld [vmem:[#allocation2 + $0x4b] sm:$0xff]
        %v1019 = vld [vmem:[#allocation2 + $0x53] sm:$0xff]
        %v1020 = vld [vmem:[#allocation2 + $0x5b] sm:$0xff]
        %v1021 = vld [vmem:[#allocation2 + $0x63] sm:$0xff]
        %v1022 = vld [vmem:[#allocation2 + $0x6b] sm:$0xff]
        %v1023 = vld [vmem:[#allocation2 + $0x73] sm:$0xff]
        %v1024 = vld [vmem:[#allocation2 + $0x7b] sm:$0xff]
        %v1025 = vld [vmem:[#allocation2 + $0x83] sm:$0xff]
        %v1026 = vld [vmem:[#allocation2 + $0x8b] sm:$0xff]
        %v1027 = vld [vmem:[#allocation2 + $0x93] sm:$0xff]
        %v1028 = vld [vmem:[#allocation2 + $0x9b] sm:$0xff]
        %v1029 = vld [vmem:[#allocation2 + $0xa3] sm:$0xff]
        %v1030 = vld [vmem:[#allocation2 + $0xab] sm:$0xff]
        %v1031 = vld [vmem:[#allocation2 + $0xb3] sm:$0xff]
        %v1032 = vld [vmem:[#allocation2 + $0xbb] sm:$0xff]
        %v1033 = vld [vmem:[#allocation2 + $0xc3] sm:$0xff]
        %v1034 = vld [vmem:[#allocation2 + $0xcb] sm:$0xff]
        %v1035 = vld [vmem:[#allocation2 + $0xd3] sm:$0xff]
        %v1036 = vld [vmem:[#allocation2 + $0xdb] sm:$0xff]
        %v1037 = vld [vmem:[#allocation2 + $0xe3] sm:$0xff]
        %v1038 = vld [vmem:[#allocation2 + $0xeb] sm:$0xff]
        %v1039 = vld [vmem:[#allocation2 + $0xf3] sm:$0xff]
        %v1040 = vld [vmem:[#allocation2 + $0xfb] sm:$0xff]
        %v1041 = vpack.c.bf16 %v1009, %v1009
        %v1042 = vpack.c.bf16 %v1010, %v1010
        %v1043 = vpack.c.bf16 %v1011, %v1011
        %v1044 = vpack.c.bf16 %v1012, %v1012
        %v1045 = vpack.c.bf16 %v1013, %v1013
        %v1046 = vpack.c.bf16 %v1014, %v1014
        %v1047 = vpack.c.bf16 %v1015, %v1015
        %v1048 = vpack.c.bf16 %v1016, %v1016
        %v1049 = vpack.c.bf16 %v1017, %v1017
        %v1050 = vpack.c.bf16 %v1018, %v1018
        %v1051 = vpack.c.bf16 %v1019, %v1019
        %v1052 = vpack.c.bf16 %v1020, %v1020
        %v1053 = vpack.c.bf16 %v1021, %v1021
        %v1054 = vpack.c.bf16 %v1022, %v1022
        %v1055 = vpack.c.bf16 %v1023, %v1023
        %v1056 = vpack.c.bf16 %v1024, %v1024
        %v1057 = vpack.c.bf16 %v1025, %v1025
        %v1058 = vpack.c.bf16 %v1026, %v1026
        %v1059 = vpack.c.bf16 %v1027, %v1027
        %v1060 = vpack.c.bf16 %v1028, %v1028
        %v1061 = vpack.c.bf16 %v1029, %v1029
        %v1062 = vpack.c.bf16 %v1030, %v1030
        %v1063 = vpack.c.bf16 %v1031, %v1031
        %v1064 = vpack.c.bf16 %v1032, %v1032
        %v1065 = vpack.c.bf16 %v1033, %v1033
        %v1066 = vpack.c.bf16 %v1034, %v1034
        %v1067 = vpack.c.bf16 %v1035, %v1035
        %v1068 = vpack.c.bf16 %v1036, %v1036
        %v1069 = vpack.c.bf16 %v1037, %v1037
        %v1070 = vpack.c.bf16 %v1038, %v1038
        %v1071 = vpack.c.bf16 %v1039, %v1039
        %v1072 = vpack.c.bf16 %v1040, %v1040
        %1105 = vrot.lane.b32.xlu0 %v1041, 48
        %v1106 = vpop.permute.xlu0 %1105
        %1107 = vrot.lane.b32.xlu0 %v1042, 48
        %v1108 = vpop.permute.xlu0 %1107
        %1109 = vrot.lane.b32.xlu0 %v1043, 48
        %v1110 = vpop.permute.xlu0 %1109
        %1111 = vrot.lane.b32.xlu0 %v1044, 48
        %v1112 = vpop.permute.xlu0 %1111
        %1113 = vrot.lane.b32.xlu0 %v1045, 48
        %v1114 = vpop.permute.xlu0 %1113
        %1115 = vrot.lane.b32.xlu0 %v1046, 48
        %v1116 = vpop.permute.xlu0 %1115
        %1117 = vrot.lane.b32.xlu0 %v1047, 48
        %v1118 = vpop.permute.xlu0 %1117
        %1119 = vrot.lane.b32.xlu0 %v1048, 48
        %v1120 = vpop.permute.xlu0 %1119
        %1121 = vrot.lane.b32.xlu0 %v1049, 48
        %v1122 = vpop.permute.xlu0 %1121
        %1123 = vrot.lane.b32.xlu0 %v1050, 48
        %v1124 = vpop.permute.xlu0 %1123
        %1125 = vrot.lane.b32.xlu0 %v1051, 48
        %v1126 = vpop.permute.xlu0 %1125
        %1127 = vrot.lane.b32.xlu0 %v1052, 48
        %v1128 = vpop.permute.xlu0 %1127
        %1129 = vrot.lane.b32.xlu0 %v1053, 48
        %v1130 = vpop.permute.xlu0 %1129
        %1131 = vrot.lane.b32.xlu0 %v1054, 48
        %v1132 = vpop.permute.xlu0 %1131
        %1133 = vrot.lane.b32.xlu0 %v1055, 48
        %v1134 = vpop.permute.xlu0 %1133
        %1135 = vrot.lane.b32.xlu0 %v1056, 48
        %v1136 = vpop.permute.xlu0 %1135
        %1137 = vrot.lane.b32.xlu0 %v1057, 48
        %v1138 = vpop.permute.xlu0 %1137
        %1139 = vrot.lane.b32.xlu0 %v1058, 48
        %v1140 = vpop.permute.xlu0 %1139
        %1141 = vrot.lane.b32.xlu0 %v1059, 48
        %v1142 = vpop.permute.xlu0 %1141
        %1143 = vrot.lane.b32.xlu0 %v1060, 48
        %v1144 = vpop.permute.xlu0 %1143
        %1145 = vrot.lane.b32.xlu0 %v1061, 48
        %v1146 = vpop.permute.xlu0 %1145
        %1147 = vrot.lane.b32.xlu0 %v1062, 48
        %v1148 = vpop.permute.xlu0 %1147
        %1149 = vrot.lane.b32.xlu0 %v1063, 48
        %v1150 = vpop.permute.xlu0 %1149
        %1151 = vrot.lane.b32.xlu0 %v1064, 48
        %v1152 = vpop.permute.xlu0 %1151
        %1153 = vrot.lane.b32.xlu0 %v1065, 48
        %v1154 = vpop.permute.xlu0 %1153
        %1155 = vrot.lane.b32.xlu0 %v1066, 48
        %v1156 = vpop.permute.xlu0 %1155
        %1157 = vrot.lane.b32.xlu0 %v1067, 48
        %v1158 = vpop.permute.xlu0 %1157
        %1159 = vrot.lane.b32.xlu0 %v1068, 48
        %v1160 = vpop.permute.xlu0 %1159
        %1161 = vrot.lane.b32.xlu0 %v1069, 48
        %v1162 = vpop.permute.xlu0 %1161
        %1163 = vrot.lane.b32.xlu0 %v1070, 48
        %v1164 = vpop.permute.xlu0 %1163
        %1165 = vrot.lane.b32.xlu0 %v1071, 48
        %v1166 = vpop.permute.xlu0 %1165
        %1167 = vrot.lane.b32.xlu0 %v1072, 48
        %v1168 = vpop.permute.xlu0 %1167
        %vm1201 = vcmask 519552
        %1202 = vst.msk [vmem:[#allocation3] sm:$0xf] %vm1201, %v1106
        %1203 = vst.msk [vmem:[#allocation3 + $0x8] sm:$0xf] %vm1201, %v1108
        %1204 = vst.msk [vmem:[#allocation3 + $0x10] sm:$0xf] %vm1201, %v1110
        %1205 = vst.msk [vmem:[#allocation3 + $0x18] sm:$0xf] %vm1201, %v1112
        %1206 = vst.msk [vmem:[#allocation3 + $0x20] sm:$0xf] %vm1201, %v1114
        %1207 = vst.msk [vmem:[#allocation3 + $0x28] sm:$0xf] %vm1201, %v1116
        %1208 = vst.msk [vmem:[#allocation3 + $0x30] sm:$0xf] %vm1201, %v1118
        %1209 = vst.msk [vmem:[#allocation3 + $0x38] sm:$0xf] %vm1201, %v1120
        %1210 = vst.msk [vmem:[#allocation3 + $0x40] sm:$0xf] %vm1201, %v1122
        %1211 = vst.msk [vmem:[#allocation3 + $0x48] sm:$0xf] %vm1201, %v1124
        %1212 = vst.msk [vmem:[#allocation3 + $0x50] sm:$0xf] %vm1201, %v1126
        %1213 = vst.msk [vmem:[#allocation3 + $0x58] sm:$0xf] %vm1201, %v1128
        %1214 = vst.msk [vmem:[#allocation3 + $0x60] sm:$0xf] %vm1201, %v1130
        %1215 = vst.msk [vmem:[#allocation3 + $0x68] sm:$0xf] %vm1201, %v1132
        %1216 = vst.msk [vmem:[#allocation3 + $0x70] sm:$0xf] %vm1201, %v1134
        %1217 = vst.msk [vmem:[#allocation3 + $0x78] sm:$0xf] %vm1201, %v1136
        %1218 = vst.msk [vmem:[#allocation3 + $0x80] sm:$0xf] %vm1201, %v1138
        %1219 = vst.msk [vmem:[#allocation3 + $0x88] sm:$0xf] %vm1201, %v1140
        %1220 = vst.msk [vmem:[#allocation3 + $0x90] sm:$0xf] %vm1201, %v1142
        %1221 = vst.msk [vmem:[#allocation3 + $0x98] sm:$0xf] %vm1201, %v1144
        %1222 = vst.msk [vmem:[#allocation3 + $0xa0] sm:$0xf] %vm1201, %v1146
        %1223 = vst.msk [vmem:[#allocation3 + $0xa8] sm:$0xf] %vm1201, %v1148
        %1224 = vst.msk [vmem:[#allocation3 + $0xb0] sm:$0xf] %vm1201, %v1150
        %1225 = vst.msk [vmem:[#allocation3 + $0xb8] sm:$0xf] %vm1201, %v1152
        %1226 = vst.msk [vmem:[#allocation3 + $0xc0] sm:$0xf] %vm1201, %v1154
        %1227 = vst.msk [vmem:[#allocation3 + $0xc8] sm:$0xf] %vm1201, %v1156
        %1228 = vst.msk [vmem:[#allocation3 + $0xd0] sm:$0xf] %vm1201, %v1158
        %1229 = vst.msk [vmem:[#allocation3 + $0xd8] sm:$0xf] %vm1201, %v1160
        %1230 = vst.msk [vmem:[#allocation3 + $0xe0] sm:$0xf] %vm1201, %v1162
        %1231 = vst.msk [vmem:[#allocation3 + $0xe8] sm:$0xf] %vm1201, %v1164
        %1232 = vst.msk [vmem:[#allocation3 + $0xf0] sm:$0xf] %vm1201, %v1166
        %1233 = vst.msk [vmem:[#allocation3 + $0xf8] sm:$0xf] %vm1201, %v1168
        %v1234 = vld [vmem:[#allocation2 + $0x4] sm:$0xff]
        %v1235 = vld [vmem:[#allocation2 + $0xc] sm:$0xff]
        %v1236 = vld [vmem:[#allocation2 + $0x14] sm:$0xff]
        %v1237 = vld [vmem:[#allocation2 + $0x1c] sm:$0xff]
        %v1238 = vld [vmem:[#allocation2 + $0x24] sm:$0xff]
        %v1239 = vld [vmem:[#allocation2 + $0x2c] sm:$0xff]
        %v1240 = vld [vmem:[#allocation2 + $0x34] sm:$0xff]
        %v1241 = vld [vmem:[#allocation2 + $0x3c] sm:$0xff]
        %v1242 = vld [vmem:[#allocation2 + $0x44] sm:$0xff]
        %v1243 = vld [vmem:[#allocation2 + $0x4c] sm:$0xff]
        %v1244 = vld [vmem:[#allocation2 + $0x54] sm:$0xff]
        %v1245 = vld [vmem:[#allocation2 + $0x5c] sm:$0xff]
        %v1246 = vld [vmem:[#allocation2 + $0x64] sm:$0xff]
        %v1247 = vld [vmem:[#allocation2 + $0x6c] sm:$0xff]
        %v1248 = vld [vmem:[#allocation2 + $0x74] sm:$0xff]
        %v1249 = vld [vmem:[#allocation2 + $0x7c] sm:$0xff]
        %v1250 = vld [vmem:[#allocation2 + $0x84] sm:$0xff]
        %v1251 = vld [vmem:[#allocation2 + $0x8c] sm:$0xff]
        %v1252 = vld [vmem:[#allocation2 + $0x94] sm:$0xff]
        %v1253 = vld [vmem:[#allocation2 + $0x9c] sm:$0xff]
        %v1254 = vld [vmem:[#allocation2 + $0xa4] sm:$0xff]
        %v1255 = vld [vmem:[#allocation2 + $0xac] sm:$0xff]
        %v1256 = vld [vmem:[#allocation2 + $0xb4] sm:$0xff]
        %v1257 = vld [vmem:[#allocation2 + $0xbc] sm:$0xff]
        %v1258 = vld [vmem:[#allocation2 + $0xc4] sm:$0xff]
        %v1259 = vld [vmem:[#allocation2 + $0xcc] sm:$0xff]
        %v1260 = vld [vmem:[#allocation2 + $0xd4] sm:$0xff]
        %v1261 = vld [vmem:[#allocation2 + $0xdc] sm:$0xff]
        %v1262 = vld [vmem:[#allocation2 + $0xe4] sm:$0xff]
        %v1263 = vld [vmem:[#allocation2 + $0xec] sm:$0xff]
        %v1264 = vld [vmem:[#allocation2 + $0xf4] sm:$0xff]
        %v1265 = vld [vmem:[#allocation2 + $0xfc] sm:$0xff]
        %v1266 = vpack.c.bf16 %v1234, %v1234
        %v1267 = vpack.c.bf16 %v1235, %v1235
        %v1268 = vpack.c.bf16 %v1236, %v1236
        %v1269 = vpack.c.bf16 %v1237, %v1237
        %v1270 = vpack.c.bf16 %v1238, %v1238
        %v1271 = vpack.c.bf16 %v1239, %v1239
        %v1272 = vpack.c.bf16 %v1240, %v1240
        %v1273 = vpack.c.bf16 %v1241, %v1241
        %v1274 = vpack.c.bf16 %v1242, %v1242
        %v1275 = vpack.c.bf16 %v1243, %v1243
        %v1276 = vpack.c.bf16 %v1244, %v1244
        %v1277 = vpack.c.bf16 %v1245, %v1245
        %v1278 = vpack.c.bf16 %v1246, %v1246
        %v1279 = vpack.c.bf16 %v1247, %v1247
        %v1280 = vpack.c.bf16 %v1248, %v1248
        %v1281 = vpack.c.bf16 %v1249, %v1249
        %v1282 = vpack.c.bf16 %v1250, %v1250
        %v1283 = vpack.c.bf16 %v1251, %v1251
        %v1284 = vpack.c.bf16 %v1252, %v1252
        %v1285 = vpack.c.bf16 %v1253, %v1253
        %v1286 = vpack.c.bf16 %v1254, %v1254
        %v1287 = vpack.c.bf16 %v1255, %v1255
        %v1288 = vpack.c.bf16 %v1256, %v1256
        %v1289 = vpack.c.bf16 %v1257, %v1257
        %v1290 = vpack.c.bf16 %v1258, %v1258
        %v1291 = vpack.c.bf16 %v1259, %v1259
        %v1292 = vpack.c.bf16 %v1260, %v1260
        %v1293 = vpack.c.bf16 %v1261, %v1261
        %v1294 = vpack.c.bf16 %v1262, %v1262
        %v1295 = vpack.c.bf16 %v1263, %v1263
        %v1296 = vpack.c.bf16 %v1264, %v1264
        %v1297 = vpack.c.bf16 %v1265, %v1265
        %1330 = vrot.lane.b32.xlu0 %v1266, 64
        %v1331 = vpop.permute.xlu0 %1330
        %1332 = vrot.lane.b32.xlu0 %v1267, 64
        %v1333 = vpop.permute.xlu0 %1332
        %1334 = vrot.lane.b32.xlu0 %v1268, 64
        %v1335 = vpop.permute.xlu0 %1334
        %1336 = vrot.lane.b32.xlu0 %v1269, 64
        %v1337 = vpop.permute.xlu0 %1336
        %1338 = vrot.lane.b32.xlu0 %v1270, 64
        %v1339 = vpop.permute.xlu0 %1338
        %1340 = vrot.lane.b32.xlu0 %v1271, 64
        %v1341 = vpop.permute.xlu0 %1340
        %1342 = vrot.lane.b32.xlu0 %v1272, 64
        %v1343 = vpop.permute.xlu0 %1342
        %1344 = vrot.lane.b32.xlu0 %v1273, 64
        %v1345 = vpop.permute.xlu0 %1344
        %1346 = vrot.lane.b32.xlu0 %v1274, 64
        %v1347 = vpop.permute.xlu0 %1346
        %1348 = vrot.lane.b32.xlu0 %v1275, 64
        %v1349 = vpop.permute.xlu0 %1348
        %1350 = vrot.lane.b32.xlu0 %v1276, 64
        %v1351 = vpop.permute.xlu0 %1350
        %1352 = vrot.lane.b32.xlu0 %v1277, 64
        %v1353 = vpop.permute.xlu0 %1352
        %1354 = vrot.lane.b32.xlu0 %v1278, 64
        %v1355 = vpop.permute.xlu0 %1354
        %1356 = vrot.lane.b32.xlu0 %v1279, 64
        %v1357 = vpop.permute.xlu0 %1356
        %1358 = vrot.lane.b32.xlu0 %v1280, 64
        %v1359 = vpop.permute.xlu0 %1358
        %1360 = vrot.lane.b32.xlu0 %v1281, 64
        %v1361 = vpop.permute.xlu0 %1360
        %1362 = vrot.lane.b32.xlu0 %v1282, 64
        %v1363 = vpop.permute.xlu0 %1362
        %1364 = vrot.lane.b32.xlu0 %v1283, 64
        %v1365 = vpop.permute.xlu0 %1364
        %1366 = vrot.lane.b32.xlu0 %v1284, 64
        %v1367 = vpop.permute.xlu0 %1366
        %1368 = vrot.lane.b32.xlu0 %v1285, 64
        %v1369 = vpop.permute.xlu0 %1368
        %1370 = vrot.lane.b32.xlu0 %v1286, 64
        %v1371 = vpop.permute.xlu0 %1370
        %1372 = vrot.lane.b32.xlu0 %v1287, 64
        %v1373 = vpop.permute.xlu0 %1372
        %1374 = vrot.lane.b32.xlu0 %v1288, 64
        %v1375 = vpop.permute.xlu0 %1374
        %1376 = vrot.lane.b32.xlu0 %v1289, 64
        %v1377 = vpop.permute.xlu0 %1376
        %1378 = vrot.lane.b32.xlu0 %v1290, 64
        %v1379 = vpop.permute.xlu0 %1378
        %1380 = vrot.lane.b32.xlu0 %v1291, 64
        %v1381 = vpop.permute.xlu0 %1380
        %1382 = vrot.lane.b32.xlu0 %v1292, 64
        %v1383 = vpop.permute.xlu0 %1382
        %1384 = vrot.lane.b32.xlu0 %v1293, 64
        %v1385 = vpop.permute.xlu0 %1384
        %1386 = vrot.lane.b32.xlu0 %v1294, 64
        %v1387 = vpop.permute.xlu0 %1386
        %1388 = vrot.lane.b32.xlu0 %v1295, 64
        %v1389 = vpop.permute.xlu0 %1388
        %1390 = vrot.lane.b32.xlu0 %v1296, 64
        %v1391 = vpop.permute.xlu0 %1390
        %1392 = vrot.lane.b32.xlu0 %v1297, 64
        %v1393 = vpop.permute.xlu0 %1392
        %vm1426 = vcmask 650752
        %1427 = vst.msk [vmem:[#allocation3] sm:$0xf] %vm1426, %v1331
        %1428 = vst.msk [vmem:[#allocation3 + $0x8] sm:$0xf] %vm1426, %v1333
        %1429 = vst.msk [vmem:[#allocation3 + $0x10] sm:$0xf] %vm1426, %v1335
        %1430 = vst.msk [vmem:[#allocation3 + $0x18] sm:$0xf] %vm1426, %v1337
        %1431 = vst.msk [vmem:[#allocation3 + $0x20] sm:$0xf] %vm1426, %v1339
        %1432 = vst.msk [vmem:[#allocation3 + $0x28] sm:$0xf] %vm1426, %v1341
        %1433 = vst.msk [vmem:[#allocation3 + $0x30] sm:$0xf] %vm1426, %v1343
        %1434 = vst.msk [vmem:[#allocation3 + $0x38] sm:$0xf] %vm1426, %v1345
        %1435 = vst.msk [vmem:[#allocation3 + $0x40] sm:$0xf] %vm1426, %v1347
        %1436 = vst.msk [vmem:[#allocation3 + $0x48] sm:$0xf] %vm1426, %v1349
        %1437 = vst.msk [vmem:[#allocation3 + $0x50] sm:$0xf] %vm1426, %v1351
        %1438 = vst.msk [vmem:[#allocation3 + $0x58] sm:$0xf] %vm1426, %v1353
        %1439 = vst.msk [vmem:[#allocation3 + $0x60] sm:$0xf] %vm1426, %v1355
        %1440 = vst.msk [vmem:[#allocation3 + $0x68] sm:$0xf] %vm1426, %v1357
        %1441 = vst.msk [vmem:[#allocation3 + $0x70] sm:$0xf] %vm1426, %v1359
        %1442 = vst.msk [vmem:[#allocation3 + $0x78] sm:$0xf] %vm1426, %v1361
        %1443 = vst.msk [vmem:[#allocation3 + $0x80] sm:$0xf] %vm1426, %v1363
        %1444 = vst.msk [vmem:[#allocation3 + $0x88] sm:$0xf] %vm1426, %v1365
        %1445 = vst.msk [vmem:[#allocation3 + $0x90] sm:$0xf] %vm1426, %v1367
        %1446 = vst.msk [vmem:[#allocation3 + $0x98] sm:$0xf] %vm1426, %v1369
        %1447 = vst.msk [vmem:[#allocation3 + $0xa0] sm:$0xf] %vm1426, %v1371
        %1448 = vst.msk [vmem:[#allocation3 + $0xa8] sm:$0xf] %vm1426, %v1373
        %1449 = vst.msk [vmem:[#allocation3 + $0xb0] sm:$0xf] %vm1426, %v1375
        %1450 = vst.msk [vmem:[#allocation3 + $0xb8] sm:$0xf] %vm1426, %v1377
        %1451 = vst.msk [vmem:[#allocation3 + $0xc0] sm:$0xf] %vm1426, %v1379
        %1452 = vst.msk [vmem:[#allocation3 + $0xc8] sm:$0xf] %vm1426, %v1381
        %1453 = vst.msk [vmem:[#allocation3 + $0xd0] sm:$0xf] %vm1426, %v1383
        %1454 = vst.msk [vmem:[#allocation3 + $0xd8] sm:$0xf] %vm1426, %v1385
        %1455 = vst.msk [vmem:[#allocation3 + $0xe0] sm:$0xf] %vm1426, %v1387
        %1456 = vst.msk [vmem:[#allocation3 + $0xe8] sm:$0xf] %vm1426, %v1389
        %1457 = vst.msk [vmem:[#allocation3 + $0xf0] sm:$0xf] %vm1426, %v1391
        %1458 = vst.msk [vmem:[#allocation3 + $0xf8] sm:$0xf] %vm1426, %v1393
        %v1459 = vld [vmem:[#allocation2 + $0x5] sm:$0xff]
        %v1460 = vld [vmem:[#allocation2 + $0xd] sm:$0xff]
        %v1461 = vld [vmem:[#allocation2 + $0x15] sm:$0xff]
        %v1462 = vld [vmem:[#allocation2 + $0x1d] sm:$0xff]
        %v1463 = vld [vmem:[#allocation2 + $0x25] sm:$0xff]
        %v1464 = vld [vmem:[#allocation2 + $0x2d] sm:$0xff]
        %v1465 = vld [vmem:[#allocation2 + $0x35] sm:$0xff]
        %v1466 = vld [vmem:[#allocation2 + $0x3d] sm:$0xff]
        %v1467 = vld [vmem:[#allocation2 + $0x45] sm:$0xff]
        %v1468 = vld [vmem:[#allocation2 + $0x4d] sm:$0xff]
        %v1469 = vld [vmem:[#allocation2 + $0x55] sm:$0xff]
        %v1470 = vld [vmem:[#allocation2 + $0x5d] sm:$0xff]
        %v1471 = vld [vmem:[#allocation2 + $0x65] sm:$0xff]
        %v1472 = vld [vmem:[#allocation2 + $0x6d] sm:$0xff]
        %v1473 = vld [vmem:[#allocation2 + $0x75] sm:$0xff]
        %v1474 = vld [vmem:[#allocation2 + $0x7d] sm:$0xff]
        %v1475 = vld [vmem:[#allocation2 + $0x85] sm:$0xff]
        %v1476 = vld [vmem:[#allocation2 + $0x8d] sm:$0xff]
        %v1477 = vld [vmem:[#allocation2 + $0x95] sm:$0xff]
        %v1478 = vld [vmem:[#allocation2 + $0x9d] sm:$0xff]
        %v1479 = vld [vmem:[#allocation2 + $0xa5] sm:$0xff]
        %v1480 = vld [vmem:[#allocation2 + $0xad] sm:$0xff]
        %v1481 = vld [vmem:[#allocation2 + $0xb5] sm:$0xff]
        %v1482 = vld [vmem:[#allocation2 + $0xbd] sm:$0xff]
        %v1483 = vld [vmem:[#allocation2 + $0xc5] sm:$0xff]
        %v1484 = vld [vmem:[#allocation2 + $0xcd] sm:$0xff]
        %v1485 = vld [vmem:[#allocation2 + $0xd5] sm:$0xff]
        %v1486 = vld [vmem:[#allocation2 + $0xdd] sm:$0xff]
        %v1487 = vld [vmem:[#allocation2 + $0xe5] sm:$0xff]
        %v1488 = vld [vmem:[#allocation2 + $0xed] sm:$0xff]
        %v1489 = vld [vmem:[#allocation2 + $0xf5] sm:$0xff]
        %v1490 = vld [vmem:[#allocation2 + $0xfd] sm:$0xff]
        %v1491 = vpack.c.bf16 %v1459, %v1459
        %v1492 = vpack.c.bf16 %v1460, %v1460
        %v1493 = vpack.c.bf16 %v1461, %v1461
        %v1494 = vpack.c.bf16 %v1462, %v1462
        %v1495 = vpack.c.bf16 %v1463, %v1463
        %v1496 = vpack.c.bf16 %v1464, %v1464
        %v1497 = vpack.c.bf16 %v1465, %v1465
        %v1498 = vpack.c.bf16 %v1466, %v1466
        %v1499 = vpack.c.bf16 %v1467, %v1467
        %v1500 = vpack.c.bf16 %v1468, %v1468
        %v1501 = vpack.c.bf16 %v1469, %v1469
        %v1502 = vpack.c.bf16 %v1470, %v1470
        %v1503 = vpack.c.bf16 %v1471, %v1471
        %v1504 = vpack.c.bf16 %v1472, %v1472
        %v1505 = vpack.c.bf16 %v1473, %v1473
        %v1506 = vpack.c.bf16 %v1474, %v1474
        %v1507 = vpack.c.bf16 %v1475, %v1475
        %v1508 = vpack.c.bf16 %v1476, %v1476
        %v1509 = vpack.c.bf16 %v1477, %v1477
        %v1510 = vpack.c.bf16 %v1478, %v1478
        %v1511 = vpack.c.bf16 %v1479, %v1479
        %v1512 = vpack.c.bf16 %v1480, %v1480
        %v1513 = vpack.c.bf16 %v1481, %v1481
        %v1514 = vpack.c.bf16 %v1482, %v1482
        %v1515 = vpack.c.bf16 %v1483, %v1483
        %v1516 = vpack.c.bf16 %v1484, %v1484
        %v1517 = vpack.c.bf16 %v1485, %v1485
        %v1518 = vpack.c.bf16 %v1486, %v1486
        %v1519 = vpack.c.bf16 %v1487, %v1487
        %v1520 = vpack.c.bf16 %v1488, %v1488
        %v1521 = vpack.c.bf16 %v1489, %v1489
        %v1522 = vpack.c.bf16 %v1490, %v1490
        %1555 = vrot.lane.b32.xlu0 %v1491, 80
        %v1556 = vpop.permute.xlu0 %1555
        %1557 = vrot.lane.b32.xlu0 %v1492, 80
        %v1558 = vpop.permute.xlu0 %1557
        %1559 = vrot.lane.b32.xlu0 %v1493, 80
        %v1560 = vpop.permute.xlu0 %1559
        %1561 = vrot.lane.b32.xlu0 %v1494, 80
        %v1562 = vpop.permute.xlu0 %1561
        %1563 = vrot.lane.b32.xlu0 %v1495, 80
        %v1564 = vpop.permute.xlu0 %1563
        %1565 = vrot.lane.b32.xlu0 %v1496, 80
        %v1566 = vpop.permute.xlu0 %1565
        %1567 = vrot.lane.b32.xlu0 %v1497, 80
        %v1568 = vpop.permute.xlu0 %1567
        %1569 = vrot.lane.b32.xlu0 %v1498, 80
        %v1570 = vpop.permute.xlu0 %1569
        %1571 = vrot.lane.b32.xlu0 %v1499, 80
        %v1572 = vpop.permute.xlu0 %1571
        %1573 = vrot.lane.b32.xlu0 %v1500, 80
        %v1574 = vpop.permute.xlu0 %1573
        %1575 = vrot.lane.b32.xlu0 %v1501, 80
        %v1576 = vpop.permute.xlu0 %1575
        %1577 = vrot.lane.b32.xlu0 %v1502, 80
        %v1578 = vpop.permute.xlu0 %1577
        %1579 = vrot.lane.b32.xlu0 %v1503, 80
        %v1580 = vpop.permute.xlu0 %1579
        %1581 = vrot.lane.b32.xlu0 %v1504, 80
        %v1582 = vpop.permute.xlu0 %1581
        %1583 = vrot.lane.b32.xlu0 %v1505, 80
        %v1584 = vpop.permute.xlu0 %1583
        %1585 = vrot.lane.b32.xlu0 %v1506, 80
        %v1586 = vpop.permute.xlu0 %1585
        %1587 = vrot.lane.b32.xlu0 %v1507, 80
        %v1588 = vpop.permute.xlu0 %1587
        %1589 = vrot.lane.b32.xlu0 %v1508, 80
        %v1590 = vpop.permute.xlu0 %1589
        %1591 = vrot.lane.b32.xlu0 %v1509, 80
        %v1592 = vpop.permute.xlu0 %1591
        %1593 = vrot.lane.b32.xlu0 %v1510, 80
        %v1594 = vpop.permute.xlu0 %1593
        %1595 = vrot.lane.b32.xlu0 %v1511, 80
        %v1596 = vpop.permute.xlu0 %1595
        %1597 = vrot.lane.b32.xlu0 %v1512, 80
        %v1598 = vpop.permute.xlu0 %1597
        %1599 = vrot.lane.b32.xlu0 %v1513, 80
        %v1600 = vpop.permute.xlu0 %1599
        %1601 = vrot.lane.b32.xlu0 %v1514, 80
        %v1602 = vpop.permute.xlu0 %1601
        %1603 = vrot.lane.b32.xlu0 %v1515, 80
        %v1604 = vpop.permute.xlu0 %1603
        %1605 = vrot.lane.b32.xlu0 %v1516, 80
        %v1606 = vpop.permute.xlu0 %1605
        %1607 = vrot.lane.b32.xlu0 %v1517, 80
        %v1608 = vpop.permute.xlu0 %1607
        %1609 = vrot.lane.b32.xlu0 %v1518, 80
        %v1610 = vpop.permute.xlu0 %1609
        %1611 = vrot.lane.b32.xlu0 %v1519, 80
        %v1612 = vpop.permute.xlu0 %1611
        %1613 = vrot.lane.b32.xlu0 %v1520, 80
        %v1614 = vpop.permute.xlu0 %1613
        %1615 = vrot.lane.b32.xlu0 %v1521, 80
        %v1616 = vpop.permute.xlu0 %1615
        %1617 = vrot.lane.b32.xlu0 %v1522, 80
        %v1618 = vpop.permute.xlu0 %1617
        %vm1651 = vcmask 781952
        %1652 = vst.msk [vmem:[#allocation3] sm:$0xf] %vm1651, %v1556
        %1653 = vst.msk [vmem:[#allocation3 + $0x8] sm:$0xf] %vm1651, %v1558
        %1654 = vst.msk [vmem:[#allocation3 + $0x10] sm:$0xf] %vm1651, %v1560
        %1655 = vst.msk [vmem:[#allocation3 + $0x18] sm:$0xf] %vm1651, %v1562
        %1656 = vst.msk [vmem:[#allocation3 + $0x20] sm:$0xf] %vm1651, %v1564
        %1657 = vst.msk [vmem:[#allocation3 + $0x28] sm:$0xf] %vm1651, %v1566
        %1658 = vst.msk [vmem:[#allocation3 + $0x30] sm:$0xf] %vm1651, %v1568
        %1659 = vst.msk [vmem:[#allocation3 + $0x38] sm:$0xf] %vm1651, %v1570
        %1660 = vst.msk [vmem:[#allocation3 + $0x40] sm:$0xf] %vm1651, %v1572
        %1661 = vst.msk [vmem:[#allocation3 + $0x48] sm:$0xf] %vm1651, %v1574
        %1662 = vst.msk [vmem:[#allocation3 + $0x50] sm:$0xf] %vm1651, %v1576
        %1663 = vst.msk [vmem:[#allocation3 + $0x58] sm:$0xf] %vm1651, %v1578
        %1664 = vst.msk [vmem:[#allocation3 + $0x60] sm:$0xf] %vm1651, %v1580
        %1665 = vst.msk [vmem:[#allocation3 + $0x68] sm:$0xf] %vm1651, %v1582
        %1666 = vst.msk [vmem:[#allocation3 + $0x70] sm:$0xf] %vm1651, %v1584
        %1667 = vst.msk [vmem:[#allocation3 + $0x78] sm:$0xf] %vm1651, %v1586
        %1668 = vst.msk [vmem:[#allocation3 + $0x80] sm:$0xf] %vm1651, %v1588
        %1669 = vst.msk [vmem:[#allocation3 + $0x88] sm:$0xf] %vm1651, %v1590
        %1670 = vst.msk [vmem:[#allocation3 + $0x90] sm:$0xf] %vm1651, %v1592
        %1671 = vst.msk [vmem:[#allocation3 + $0x98] sm:$0xf] %vm1651, %v1594
        %1672 = vst.msk [vmem:[#allocation3 + $0xa0] sm:$0xf] %vm1651, %v1596
        %1673 = vst.msk [vmem:[#allocation3 + $0xa8] sm:$0xf] %vm1651, %v1598
        %1674 = vst.msk [vmem:[#allocation3 + $0xb0] sm:$0xf] %vm1651, %v1600
        %1675 = vst.msk [vmem:[#allocation3 + $0xb8] sm:$0xf] %vm1651, %v1602
        %1676 = vst.msk [vmem:[#allocation3 + $0xc0] sm:$0xf] %vm1651, %v1604
        %1677 = vst.msk [vmem:[#allocation3 + $0xc8] sm:$0xf] %vm1651, %v1606
        %1678 = vst.msk [vmem:[#allocation3 + $0xd0] sm:$0xf] %vm1651, %v1608
        %1679 = vst.msk [vmem:[#allocation3 + $0xd8] sm:$0xf] %vm1651, %v1610
        %1680 = vst.msk [vmem:[#allocation3 + $0xe0] sm:$0xf] %vm1651, %v1612
        %1681 = vst.msk [vmem:[#allocation3 + $0xe8] sm:$0xf] %vm1651, %v1614
        %1682 = vst.msk [vmem:[#allocation3 + $0xf0] sm:$0xf] %vm1651, %v1616
        %1683 = vst.msk [vmem:[#allocation3 + $0xf8] sm:$0xf] %vm1651, %v1618
        %v1684 = vld [vmem:[#allocation2 + $0x6] sm:$0xff]
        %v1685 = vld [vmem:[#allocation2 + $0xe] sm:$0xff]
        %v1686 = vld [vmem:[#allocation2 + $0x16] sm:$0xff]
        %v1687 = vld [vmem:[#allocation2 + $0x1e] sm:$0xff]
        %v1688 = vld [vmem:[#allocation2 + $0x26] sm:$0xff]
        %v1689 = vld [vmem:[#allocation2 + $0x2e] sm:$0xff]
        %v1690 = vld [vmem:[#allocation2 + $0x36] sm:$0xff]
        %v1691 = vld [vmem:[#allocation2 + $0x3e] sm:$0xff]
        %v1692 = vld [vmem:[#allocation2 + $0x46] sm:$0xff]
        %v1693 = vld [vmem:[#allocation2 + $0x4e] sm:$0xff]
        %v1694 = vld [vmem:[#allocation2 + $0x56] sm:$0xff]
        %v1695 = vld [vmem:[#allocation2 + $0x5e] sm:$0xff]
        %v1696 = vld [vmem:[#allocation2 + $0x66] sm:$0xff]
        %v1697 = vld [vmem:[#allocation2 + $0x6e] sm:$0xff]
        %v1698 = vld [vmem:[#allocation2 + $0x76] sm:$0xff]
        %v1699 = vld [vmem:[#allocation2 + $0x7e] sm:$0xff]
        %v1700 = vld [vmem:[#allocation2 + $0x86] sm:$0xff]
        %v1701 = vld [vmem:[#allocation2 + $0x8e] sm:$0xff]
        %v1702 = vld [vmem:[#allocation2 + $0x96] sm:$0xff]
        %v1703 = vld [vmem:[#allocation2 + $0x9e] sm:$0xff]
        %v1704 = vld [vmem:[#allocation2 + $0xa6] sm:$0xff]
        %v1705 = vld [vmem:[#allocation2 + $0xae] sm:$0xff]
        %v1706 = vld [vmem:[#allocation2 + $0xb6] sm:$0xff]
        %v1707 = vld [vmem:[#allocation2 + $0xbe] sm:$0xff]
        %v1708 = vld [vmem:[#allocation2 + $0xc6] sm:$0xff]
        %v1709 = vld [vmem:[#allocation2 + $0xce] sm:$0xff]
        %v1710 = vld [vmem:[#allocation2 + $0xd6] sm:$0xff]
        %v1711 = vld [vmem:[#allocation2 + $0xde] sm:$0xff]
        %v1712 = vld [vmem:[#allocation2 + $0xe6] sm:$0xff]
        %v1713 = vld [vmem:[#allocation2 + $0xee] sm:$0xff]
        %v1714 = vld [vmem:[#allocation2 + $0xf6] sm:$0xff]
        %v1715 = vld [vmem:[#allocation2 + $0xfe] sm:$0xff]
        %v1716 = vpack.c.bf16 %v1684, %v1684
        %v1717 = vpack.c.bf16 %v1685, %v1685
        %v1718 = vpack.c.bf16 %v1686, %v1686
        %v1719 = vpack.c.bf16 %v1687, %v1687
        %v1720 = vpack.c.bf16 %v1688, %v1688
        %v1721 = vpack.c.bf16 %v1689, %v1689
        %v1722 = vpack.c.bf16 %v1690, %v1690
        %v1723 = vpack.c.bf16 %v1691, %v1691
        %v1724 = vpack.c.bf16 %v1692, %v1692
        %v1725 = vpack.c.bf16 %v1693, %v1693
        %v1726 = vpack.c.bf16 %v1694, %v1694
        %v1727 = vpack.c.bf16 %v1695, %v1695
        %v1728 = vpack.c.bf16 %v1696, %v1696
        %v1729 = vpack.c.bf16 %v1697, %v1697
        %v1730 = vpack.c.bf16 %v1698, %v1698
        %v1731 = vpack.c.bf16 %v1699, %v1699
        %v1732 = vpack.c.bf16 %v1700, %v1700
        %v1733 = vpack.c.bf16 %v1701, %v1701
        %v1734 = vpack.c.bf16 %v1702, %v1702
        %v1735 = vpack.c.bf16 %v1703, %v1703
        %v1736 = vpack.c.bf16 %v1704, %v1704
        %v1737 = vpack.c.bf16 %v1705, %v1705
        %v1738 = vpack.c.bf16 %v1706, %v1706
        %v1739 = vpack.c.bf16 %v1707, %v1707
        %v1740 = vpack.c.bf16 %v1708, %v1708
        %v1741 = vpack.c.bf16 %v1709, %v1709
        %v1742 = vpack.c.bf16 %v1710, %v1710
        %v1743 = vpack.c.bf16 %v1711, %v1711
        %v1744 = vpack.c.bf16 %v1712, %v1712
        %v1745 = vpack.c.bf16 %v1713, %v1713
        %v1746 = vpack.c.bf16 %v1714, %v1714
        %v1747 = vpack.c.bf16 %v1715, %v1715
        %1780 = vrot.lane.b32.xlu0 %v1716, 96
        %v1781 = vpop.permute.xlu0 %1780
        %1782 = vrot.lane.b32.xlu0 %v1717, 96
        %v1783 = vpop.permute.xlu0 %1782
        %1784 = vrot.lane.b32.xlu0 %v1718, 96
        %v1785 = vpop.permute.xlu0 %1784
        %1786 = vrot.lane.b32.xlu0 %v1719, 96
        %v1787 = vpop.permute.xlu0 %1786
        %1788 = vrot.lane.b32.xlu0 %v1720, 96
        %v1789 = vpop.permute.xlu0 %1788
        %1790 = vrot.lane.b32.xlu0 %v1721, 96
        %v1791 = vpop.permute.xlu0 %1790
        %1792 = vrot.lane.b32.xlu0 %v1722, 96
        %v1793 = vpop.permute.xlu0 %1792
        %1794 = vrot.lane.b32.xlu0 %v1723, 96
        %v1795 = vpop.permute.xlu0 %1794
        %1796 = vrot.lane.b32.xlu0 %v1724, 96
        %v1797 = vpop.permute.xlu0 %1796
        %1798 = vrot.lane.b32.xlu0 %v1725, 96
        %v1799 = vpop.permute.xlu0 %1798
        %1800 = vrot.lane.b32.xlu0 %v1726, 96
        %v1801 = vpop.permute.xlu0 %1800
        %1802 = vrot.lane.b32.xlu0 %v1727, 96
        %v1803 = vpop.permute.xlu0 %1802
        %1804 = vrot.lane.b32.xlu0 %v1728, 96
        %v1805 = vpop.permute.xlu0 %1804
        %1806 = vrot.lane.b32.xlu0 %v1729, 96
        %v1807 = vpop.permute.xlu0 %1806
        %1808 = vrot.lane.b32.xlu0 %v1730, 96
        %v1809 = vpop.permute.xlu0 %1808
        %1810 = vrot.lane.b32.xlu0 %v1731, 96
        %v1811 = vpop.permute.xlu0 %1810
        %1812 = vrot.lane.b32.xlu0 %v1732, 96
        %v1813 = vpop.permute.xlu0 %1812
        %1814 = vrot.lane.b32.xlu0 %v1733, 96
        %v1815 = vpop.permute.xlu0 %1814
        %1816 = vrot.lane.b32.xlu0 %v1734, 96
        %v1817 = vpop.permute.xlu0 %1816
        %1818 = vrot.lane.b32.xlu0 %v1735, 96
        %v1819 = vpop.permute.xlu0 %1818
        %1820 = vrot.lane.b32.xlu0 %v1736, 96
        %v1821 = vpop.permute.xlu0 %1820
        %1822 = vrot.lane.b32.xlu0 %v1737, 96
        %v1823 = vpop.permute.xlu0 %1822
        %1824 = vrot.lane.b32.xlu0 %v1738, 96
        %v1825 = vpop.permute.xlu0 %1824
        %1826 = vrot.lane.b32.xlu0 %v1739, 96
        %v1827 = vpop.permute.xlu0 %1826
        %1828 = vrot.lane.b32.xlu0 %v1740, 96
        %v1829 = vpop.permute.xlu0 %1828
        %1830 = vrot.lane.b32.xlu0 %v1741, 96
        %v1831 = vpop.permute.xlu0 %1830
        %1832 = vrot.lane.b32.xlu0 %v1742, 96
        %v1833 = vpop.permute.xlu0 %1832
        %1834 = vrot.lane.b32.xlu0 %v1743, 96
        %v1835 = vpop.permute.xlu0 %1834
        %1836 = vrot.lane.b32.xlu0 %v1744, 96
        %v1837 = vpop.permute.xlu0 %1836
        %1838 = vrot.lane.b32.xlu0 %v1745, 96
        %v1839 = vpop.permute.xlu0 %1838
        %1840 = vrot.lane.b32.xlu0 %v1746, 96
        %v1841 = vpop.permute.xlu0 %1840
        %1842 = vrot.lane.b32.xlu0 %v1747, 96
        %v1843 = vpop.permute.xlu0 %1842
        %vm1876 = vcmask 913152
        %1877 = vst.msk [vmem:[#allocation3] sm:$0xf] %vm1876, %v1781
        %1878 = vst.msk [vmem:[#allocation3 + $0x8] sm:$0xf] %vm1876, %v1783
        %1879 = vst.msk [vmem:[#allocation3 + $0x10] sm:$0xf] %vm1876, %v1785
        %1880 = vst.msk [vmem:[#allocation3 + $0x18] sm:$0xf] %vm1876, %v1787
        %1881 = vst.msk [vmem:[#allocation3 + $0x20] sm:$0xf] %vm1876, %v1789
        %1882 = vst.msk [vmem:[#allocation3 + $0x28] sm:$0xf] %vm1876, %v1791
        %1883 = vst.msk [vmem:[#allocation3 + $0x30] sm:$0xf] %vm1876, %v1793
        %1884 = vst.msk [vmem:[#allocation3 + $0x38] sm:$0xf] %vm1876, %v1795
        %1885 = vst.msk [vmem:[#allocation3 + $0x40] sm:$0xf] %vm1876, %v1797
        %1886 = vst.msk [vmem:[#allocation3 + $0x48] sm:$0xf] %vm1876, %v1799
        %1887 = vst.msk [vmem:[#allocation3 + $0x50] sm:$0xf] %vm1876, %v1801
        %1888 = vst.msk [vmem:[#allocation3 + $0x58] sm:$0xf] %vm1876, %v1803
        %1889 = vst.msk [vmem:[#allocation3 + $0x60] sm:$0xf] %vm1876, %v1805
        %1890 = vst.msk [vmem:[#allocation3 + $0x68] sm:$0xf] %vm1876, %v1807
        %1891 = vst.msk [vmem:[#allocation3 + $0x70] sm:$0xf] %vm1876, %v1809
        %1892 = vst.msk [vmem:[#allocation3 + $0x78] sm:$0xf] %vm1876, %v1811
        %1893 = vst.msk [vmem:[#allocation3 + $0x80] sm:$0xf] %vm1876, %v1813
        %1894 = vst.msk [vmem:[#allocation3 + $0x88] sm:$0xf] %vm1876, %v1815
        %1895 = vst.msk [vmem:[#allocation3 + $0x90] sm:$0xf] %vm1876, %v1817
        %1896 = vst.msk [vmem:[#allocation3 + $0x98] sm:$0xf] %vm1876, %v1819
        %1897 = vst.msk [vmem:[#allocation3 + $0xa0] sm:$0xf] %vm1876, %v1821
        %1898 = vst.msk [vmem:[#allocation3 + $0xa8] sm:$0xf] %vm1876, %v1823
        %1899 = vst.msk [vmem:[#allocation3 + $0xb0] sm:$0xf] %vm1876, %v1825
        %1900 = vst.msk [vmem:[#allocation3 + $0xb8] sm:$0xf] %vm1876, %v1827
        %1901 = vst.msk [vmem:[#allocation3 + $0xc0] sm:$0xf] %vm1876, %v1829
        %1902 = vst.msk [vmem:[#allocation3 + $0xc8] sm:$0xf] %vm1876, %v1831
        %1903 = vst.msk [vmem:[#allocation3 + $0xd0] sm:$0xf] %vm1876, %v1833
        %1904 = vst.msk [vmem:[#allocation3 + $0xd8] sm:$0xf] %vm1876, %v1835
        %1905 = vst.msk [vmem:[#allocation3 + $0xe0] sm:$0xf] %vm1876, %v1837
        %1906 = vst.msk [vmem:[#allocation3 + $0xe8] sm:$0xf] %vm1876, %v1839
        %1907 = vst.msk [vmem:[#allocation3 + $0xf0] sm:$0xf] %vm1876, %v1841
        %1908 = vst.msk [vmem:[#allocation3 + $0xf8] sm:$0xf] %vm1876, %v1843
        %v1909 = vld [vmem:[#allocation2 + $0x7] sm:$0xff]
        %v1910 = vld [vmem:[#allocation2 + $0xf] sm:$0xff]
        %v1911 = vld [vmem:[#allocation2 + $0x17] sm:$0xff]
        %v1912 = vld [vmem:[#allocation2 + $0x1f] sm:$0xff]
        %v1913 = vld [vmem:[#allocation2 + $0x27] sm:$0xff]
        %v1914 = vld [vmem:[#allocation2 + $0x2f] sm:$0xff]
        %v1915 = vld [vmem:[#allocation2 + $0x37] sm:$0xff]
        %v1916 = vld [vmem:[#allocation2 + $0x3f] sm:$0xff]
        %v1917 = vld [vmem:[#allocation2 + $0x47] sm:$0xff]
        %v1918 = vld [vmem:[#allocation2 + $0x4f] sm:$0xff]
        %v1919 = vld [vmem:[#allocation2 + $0x57] sm:$0xff]
        %v1920 = vld [vmem:[#allocation2 + $0x5f] sm:$0xff]
        %v1921 = vld [vmem:[#allocation2 + $0x67] sm:$0xff]
        %v1922 = vld [vmem:[#allocation2 + $0x6f] sm:$0xff]
        %v1923 = vld [vmem:[#allocation2 + $0x77] sm:$0xff]
        %v1924 = vld [vmem:[#allocation2 + $0x7f] sm:$0xff]
        %v1925 = vld [vmem:[#allocation2 + $0x87] sm:$0xff]
        %v1926 = vld [vmem:[#allocation2 + $0x8f] sm:$0xff]
        %v1927 = vld [vmem:[#allocation2 + $0x97] sm:$0xff]
        %v1928 = vld [vmem:[#allocation2 + $0x9f] sm:$0xff]
        %v1929 = vld [vmem:[#allocation2 + $0xa7] sm:$0xff]
        %v1930 = vld [vmem:[#allocation2 + $0xaf] sm:$0xff]
        %v1931 = vld [vmem:[#allocation2 + $0xb7] sm:$0xff]
        %v1932 = vld [vmem:[#allocation2 + $0xbf] sm:$0xff]
        %v1933 = vld [vmem:[#allocation2 + $0xc7] sm:$0xff]
        %v1934 = vld [vmem:[#allocation2 + $0xcf] sm:$0xff]
        %v1935 = vld [vmem:[#allocation2 + $0xd7] sm:$0xff]
        %v1936 = vld [vmem:[#allocation2 + $0xdf] sm:$0xff]
        %v1937 = vld [vmem:[#allocation2 + $0xe7] sm:$0xff]
        %v1938 = vld [vmem:[#allocation2 + $0xef] sm:$0xff]
        %v1939 = vld [vmem:[#allocation2 + $0xf7] sm:$0xff]
        %v1940 = vld [vmem:[#allocation2 + $0xff] sm:$0xff]
        %v1941 = vpack.c.bf16 %v1909, %v1909
        %v1942 = vpack.c.bf16 %v1910, %v1910
        %v1943 = vpack.c.bf16 %v1911, %v1911
        %v1944 = vpack.c.bf16 %v1912, %v1912
        %v1945 = vpack.c.bf16 %v1913, %v1913
        %v1946 = vpack.c.bf16 %v1914, %v1914
        %v1947 = vpack.c.bf16 %v1915, %v1915
        %v1948 = vpack.c.bf16 %v1916, %v1916
        %v1949 = vpack.c.bf16 %v1917, %v1917
        %v1950 = vpack.c.bf16 %v1918, %v1918
        %v1951 = vpack.c.bf16 %v1919, %v1919
        %v1952 = vpack.c.bf16 %v1920, %v1920
        %v1953 = vpack.c.bf16 %v1921, %v1921
        %v1954 = vpack.c.bf16 %v1922, %v1922
        %v1955 = vpack.c.bf16 %v1923, %v1923
        %v1956 = vpack.c.bf16 %v1924, %v1924
        %v1957 = vpack.c.bf16 %v1925, %v1925
        %v1958 = vpack.c.bf16 %v1926, %v1926
        %v1959 = vpack.c.bf16 %v1927, %v1927
        %v1960 = vpack.c.bf16 %v1928, %v1928
        %v1961 = vpack.c.bf16 %v1929, %v1929
        %v1962 = vpack.c.bf16 %v1930, %v1930
        %v1963 = vpack.c.bf16 %v1931, %v1931
        %v1964 = vpack.c.bf16 %v1932, %v1932
        %v1965 = vpack.c.bf16 %v1933, %v1933
        %v1966 = vpack.c.bf16 %v1934, %v1934
        %v1967 = vpack.c.bf16 %v1935, %v1935
        %v1968 = vpack.c.bf16 %v1936, %v1936
        %v1969 = vpack.c.bf16 %v1937, %v1937
        %v1970 = vpack.c.bf16 %v1938, %v1938
        %v1971 = vpack.c.bf16 %v1939, %v1939
        %v1972 = vpack.c.bf16 %v1940, %v1940
        %2005 = vrot.lane.b32.xlu0 %v1941, 112
        %v2006 = vpop.permute.xlu0 %2005
        %2007 = vrot.lane.b32.xlu0 %v1942, 112
        %v2008 = vpop.permute.xlu0 %2007
        %2009 = vrot.lane.b32.xlu0 %v1943, 112
        %v2010 = vpop.permute.xlu0 %2009
        %2011 = vrot.lane.b32.xlu0 %v1944, 112
        %v2012 = vpop.permute.xlu0 %2011
        %2013 = vrot.lane.b32.xlu0 %v1945, 112
        %v2014 = vpop.permute.xlu0 %2013
        %2015 = vrot.lane.b32.xlu0 %v1946, 112
        %v2016 = vpop.permute.xlu0 %2015
        %2017 = vrot.lane.b32.xlu0 %v1947, 112
        %v2018 = vpop.permute.xlu0 %2017
        %2019 = vrot.lane.b32.xlu0 %v1948, 112
        %v2020 = vpop.permute.xlu0 %2019
        %2021 = vrot.lane.b32.xlu0 %v1949, 112
        %v2022 = vpop.permute.xlu0 %2021
        %2023 = vrot.lane.b32.xlu0 %v1950, 112
        %v2024 = vpop.permute.xlu0 %2023
        %2025 = vrot.lane.b32.xlu0 %v1951, 112
        %v2026 = vpop.permute.xlu0 %2025
        %2027 = vrot.lane.b32.xlu0 %v1952, 112
        %v2028 = vpop.permute.xlu0 %2027
        %2029 = vrot.lane.b32.xlu0 %v1953, 112
        %v2030 = vpop.permute.xlu0 %2029
        %2031 = vrot.lane.b32.xlu0 %v1954, 112
        %v2032 = vpop.permute.xlu0 %2031
        %2033 = vrot.lane.b32.xlu0 %v1955, 112
        %v2034 = vpop.permute.xlu0 %2033
        %2035 = vrot.lane.b32.xlu0 %v1956, 112
        %v2036 = vpop.permute.xlu0 %2035
        %2037 = vrot.lane.b32.xlu0 %v1957, 112
        %v2038 = vpop.permute.xlu0 %2037
        %2039 = vrot.lane.b32.xlu0 %v1958, 112
        %v2040 = vpop.permute.xlu0 %2039
        %2041 = vrot.lane.b32.xlu0 %v1959, 112
        %v2042 = vpop.permute.xlu0 %2041
        %2043 = vrot.lane.b32.xlu0 %v1960, 112
        %v2044 = vpop.permute.xlu0 %2043
        %2045 = vrot.lane.b32.xlu0 %v1961, 112
        %v2046 = vpop.permute.xlu0 %2045
        %2047 = vrot.lane.b32.xlu0 %v1962, 112
        %v2048 = vpop.permute.xlu0 %2047
        %2049 = vrot.lane.b32.xlu0 %v1963, 112
        %v2050 = vpop.permute.xlu0 %2049
        %2051 = vrot.lane.b32.xlu0 %v1964, 112
        %v2052 = vpop.permute.xlu0 %2051
        %2053 = vrot.lane.b32.xlu0 %v1965, 112
        %v2054 = vpop.permute.xlu0 %2053
        %2055 = vrot.lane.b32.xlu0 %v1966, 112
        %v2056 = vpop.permute.xlu0 %2055
        %2057 = vrot.lane.b32.xlu0 %v1967, 112
        %v2058 = vpop.permute.xlu0 %2057
        %2059 = vrot.lane.b32.xlu0 %v1968, 112
        %v2060 = vpop.permute.xlu0 %2059
        %2061 = vrot.lane.b32.xlu0 %v1969, 112
        %v2062 = vpop.permute.xlu0 %2061
        %2063 = vrot.lane.b32.xlu0 %v1970, 112
        %v2064 = vpop.permute.xlu0 %2063
        %2065 = vrot.lane.b32.xlu0 %v1971, 112
        %v2066 = vpop.permute.xlu0 %2065
        %2067 = vrot.lane.b32.xlu0 %v1972, 112
        %v2068 = vpop.permute.xlu0 %2067
        %vm2101 = vcmask 1044352
        %2102 = vst.msk [vmem:[#allocation3] sm:$0xf] %vm2101, %v2006
        %2103 = vst.msk [vmem:[#allocation3 + $0x8] sm:$0xf] %vm2101, %v2008
        %2104 = vst.msk [vmem:[#allocation3 + $0x10] sm:$0xf] %vm2101, %v2010
        %2105 = vst.msk [vmem:[#allocation3 + $0x18] sm:$0xf] %vm2101, %v2012
        %2106 = vst.msk [vmem:[#allocation3 + $0x20] sm:$0xf] %vm2101, %v2014
        %2107 = vst.msk [vmem:[#allocation3 + $0x28] sm:$0xf] %vm2101, %v2016
        %2108 = vst.msk [vmem:[#allocation3 + $0x30] sm:$0xf] %vm2101, %v2018
        %2109 = vst.msk [vmem:[#allocation3 + $0x38] sm:$0xf] %vm2101, %v2020
        %2110 = vst.msk [vmem:[#allocation3 + $0x40] sm:$0xf] %vm2101, %v2022
        %2111 = vst.msk [vmem:[#allocation3 + $0x48] sm:$0xf] %vm2101, %v2024
        %2112 = vst.msk [vmem:[#allocation3 + $0x50] sm:$0xf] %vm2101, %v2026
        %2113 = vst.msk [vmem:[#allocation3 + $0x58] sm:$0xf] %vm2101, %v2028
        %2114 = vst.msk [vmem:[#allocation3 + $0x60] sm:$0xf] %vm2101, %v2030
        %2115 = vst.msk [vmem:[#allocation3 + $0x68] sm:$0xf] %vm2101, %v2032
        %2116 = vst.msk [vmem:[#allocation3 + $0x70] sm:$0xf] %vm2101, %v2034
        %2117 = vst.msk [vmem:[#allocation3 + $0x78] sm:$0xf] %vm2101, %v2036
        %2118 = vst.msk [vmem:[#allocation3 + $0x80] sm:$0xf] %vm2101, %v2038
        %2119 = vst.msk [vmem:[#allocation3 + $0x88] sm:$0xf] %vm2101, %v2040
        %2120 = vst.msk [vmem:[#allocation3 + $0x90] sm:$0xf] %vm2101, %v2042
        %2121 = vst.msk [vmem:[#allocation3 + $0x98] sm:$0xf] %vm2101, %v2044
        %2122 = vst.msk [vmem:[#allocation3 + $0xa0] sm:$0xf] %vm2101, %v2046
        %2123 = vst.msk [vmem:[#allocation3 + $0xa8] sm:$0xf] %vm2101, %v2048
        %2124 = vst.msk [vmem:[#allocation3 + $0xb0] sm:$0xf] %vm2101, %v2050
        %2125 = vst.msk [vmem:[#allocation3 + $0xb8] sm:$0xf] %vm2101, %v2052
        %2126 = vst.msk [vmem:[#allocation3 + $0xc0] sm:$0xf] %vm2101, %v2054
        %2127 = vst.msk [vmem:[#allocation3 + $0xc8] sm:$0xf] %vm2101, %v2056
        %2128 = vst.msk [vmem:[#allocation3 + $0xd0] sm:$0xf] %vm2101, %v2058
        %2129 = vst.msk [vmem:[#allocation3 + $0xd8] sm:$0xf] %vm2101, %v2060
        %2130 = vst.msk [vmem:[#allocation3 + $0xe0] sm:$0xf] %vm2101, %v2062
        %2131 = vst.msk [vmem:[#allocation3 + $0xe8] sm:$0xf] %vm2101, %v2064
        %2132 = vst.msk [vmem:[#allocation3 + $0xf0] sm:$0xf] %vm2101, %v2066
        %2133 = vst.msk [vmem:[#allocation3 + $0xf8] sm:$0xf] %vm2101, %v2068
        %v2134 = vld [vmem:[#allocation2 + $0x8] sm:$0xff]
        %v2135 = vld [vmem:[#allocation2 + $0x10] sm:$0xff]
        %v2136 = vld [vmem:[#allocation2 + $0x18] sm:$0xff]
        %v2137 = vld [vmem:[#allocation2 + $0x20] sm:$0xff]
        %v2138 = vld [vmem:[#allocation2 + $0x28] sm:$0xff]
        %v2139 = vld [vmem:[#allocation2 + $0x30] sm:$0xff]
        %v2140 = vld [vmem:[#allocation2 + $0x38] sm:$0xff]
        %v2141 = vld [vmem:[#allocation2 + $0x40] sm:$0xff]
        %v2142 = vld [vmem:[#allocation2 + $0x48] sm:$0xff]
        %v2143 = vld [vmem:[#allocation2 + $0x50] sm:$0xff]
        %v2144 = vld [vmem:[#allocation2 + $0x58] sm:$0xff]
        %v2145 = vld [vmem:[#allocation2 + $0x60] sm:$0xff]
        %v2146 = vld [vmem:[#allocation2 + $0x68] sm:$0xff]
        %v2147 = vld [vmem:[#allocation2 + $0x70] sm:$0xff]
        %v2148 = vld [vmem:[#allocation2 + $0x78] sm:$0xff]
        %v2149 = vld [vmem:[#allocation2 + $0x80] sm:$0xff]
        %v2150 = vld [vmem:[#allocation2 + $0x88] sm:$0xff]
        %v2151 = vld [vmem:[#allocation2 + $0x90] sm:$0xff]
        %v2152 = vld [vmem:[#allocation2 + $0x98] sm:$0xff]
        %v2153 = vld [vmem:[#allocation2 + $0xa0] sm:$0xff]
        %v2154 = vld [vmem:[#allocation2 + $0xa8] sm:$0xff]
        %v2155 = vld [vmem:[#allocation2 + $0xb0] sm:$0xff]
        %v2156 = vld [vmem:[#allocation2 + $0xb8] sm:$0xff]
        %v2157 = vld [vmem:[#allocation2 + $0xc0] sm:$0xff]
        %v2158 = vld [vmem:[#allocation2 + $0xc8] sm:$0xff]
        %v2159 = vld [vmem:[#allocation2 + $0xd0] sm:$0xff]
        %v2160 = vld [vmem:[#allocation2 + $0xd8] sm:$0xff]
        %v2161 = vld [vmem:[#allocation2 + $0xe0] sm:$0xff]
        %v2162 = vld [vmem:[#allocation2 + $0xe8] sm:$0xff]
        %v2163 = vld [vmem:[#allocation2 + $0xf0] sm:$0xff]
        %v2164 = vld [vmem:[#allocation2 + $0xf8] sm:$0xff]
        %v2165 = vld [vmem:[#allocation2 + $0x100] sm:$0xff]
        %v2166 = vpack.c.bf16 %v2134, %v2134
        %v2167 = vpack.c.bf16 %v2135, %v2135
        %v2168 = vpack.c.bf16 %v2136, %v2136
        %v2169 = vpack.c.bf16 %v2137, %v2137
        %v2170 = vpack.c.bf16 %v2138, %v2138
        %v2171 = vpack.c.bf16 %v2139, %v2139
        %v2172 = vpack.c.bf16 %v2140, %v2140
        %v2173 = vpack.c.bf16 %v2141, %v2141
        %v2174 = vpack.c.bf16 %v2142, %v2142
        %v2175 = vpack.c.bf16 %v2143, %v2143
        %v2176 = vpack.c.bf16 %v2144, %v2144
        %v2177 = vpack.c.bf16 %v2145, %v2145
        %v2178 = vpack.c.bf16 %v2146, %v2146
        %v2179 = vpack.c.bf16 %v2147, %v2147
        %v2180 = vpack.c.bf16 %v2148, %v2148
        %v2181 = vpack.c.bf16 %v2149, %v2149
        %v2182 = vpack.c.bf16 %v2150, %v2150
        %v2183 = vpack.c.bf16 %v2151, %v2151
        %v2184 = vpack.c.bf16 %v2152, %v2152
        %v2185 = vpack.c.bf16 %v2153, %v2153
        %v2186 = vpack.c.bf16 %v2154, %v2154
        %v2187 = vpack.c.bf16 %v2155, %v2155
        %v2188 = vpack.c.bf16 %v2156, %v2156
        %v2189 = vpack.c.bf16 %v2157, %v2157
        %v2190 = vpack.c.bf16 %v2158, %v2158
        %v2191 = vpack.c.bf16 %v2159, %v2159
        %v2192 = vpack.c.bf16 %v2160, %v2160
        %v2193 = vpack.c.bf16 %v2161, %v2161
        %v2194 = vpack.c.bf16 %v2162, %v2162
        %v2195 = vpack.c.bf16 %v2163, %v2163
        %v2196 = vpack.c.bf16 %v2164, %v2164
        %v2197 = vpack.c.bf16 %v2165, %v2165
        %2198 = vst.msk [vmem:[#allocation3 + $0x4] sm:$0xf] %vm526, %v2166
        %2199 = vst.msk [vmem:[#allocation3 + $0xc] sm:$0xf] %vm526, %v2167
        %2200 = vst.msk [vmem:[#allocation3 + $0x14] sm:$0xf] %vm526, %v2168
        %2201 = vst.msk [vmem:[#allocation3 + $0x1c] sm:$0xf] %vm526, %v2169
        %2202 = vst.msk [vmem:[#allocation3 + $0x24] sm:$0xf] %vm526, %v2170
        %2203 = vst.msk [vmem:[#allocation3 + $0x2c] sm:$0xf] %vm526, %v2171
        %2204 = vst.msk [vmem:[#allocation3 + $0x34] sm:$0xf] %vm526, %v2172
        %2205 = vst.msk [vmem:[#allocation3 + $0x3c] sm:$0xf] %vm526, %v2173
        %2206 = vst.msk [vmem:[#allocation3 + $0x44] sm:$0xf] %vm526, %v2174
        %2207 = vst.msk [vmem:[#allocation3 + $0x4c] sm:$0xf] %vm526, %v2175
        %2208 = vst.msk [vmem:[#allocation3 + $0x54] sm:$0xf] %vm526, %v2176
        %2209 = vst.msk [vmem:[#allocation3 + $0x5c] sm:$0xf] %vm526, %v2177
        %2210 = vst.msk [vmem:[#allocation3 + $0x64] sm:$0xf] %vm526, %v2178
        %2211 = vst.msk [vmem:[#allocation3 + $0x6c] sm:$0xf] %vm526, %v2179
        %2212 = vst.msk [vmem:[#allocation3 + $0x74] sm:$0xf] %vm526, %v2180
        %2213 = vst.msk [vmem:[#allocation3 + $0x7c] sm:$0xf] %vm526, %v2181
        %2214 = vst.msk [vmem:[#allocation3 + $0x84] sm:$0xf] %vm526, %v2182
        %2215 = vst.msk [vmem:[#allocation3 + $0x8c] sm:$0xf] %vm526, %v2183
        %2216 = vst.msk [vmem:[#allocation3 + $0x94] sm:$0xf] %vm526, %v2184
        %2217 = vst.msk [vmem:[#allocation3 + $0x9c] sm:$0xf] %vm526, %v2185
        %2218 = vst.msk [vmem:[#allocation3 + $0xa4] sm:$0xf] %vm526, %v2186
        %2219 = vst.msk [vmem:[#allocation3 + $0xac] sm:$0xf] %vm526, %v2187
        %2220 = vst.msk [vmem:[#allocation3 + $0xb4] sm:$0xf] %vm526, %v2188
        %2221 = vst.msk [vmem:[#allocation3 + $0xbc] sm:$0xf] %vm526, %v2189
        %2222 = vst.msk [vmem:[#allocation3 + $0xc4] sm:$0xf] %vm526, %v2190
        %2223 = vst.msk [vmem:[#allocation3 + $0xcc] sm:$0xf] %vm526, %v2191
        %2224 = vst.msk [vmem:[#allocation3 + $0xd4] sm:$0xf] %vm526, %v2192
        %2225 = vst.msk [vmem:[#allocation3 + $0xdc] sm:$0xf] %vm526, %v2193
        %2226 = vst.msk [vmem:[#allocation3 + $0xe4] sm:$0xf] %vm526, %v2194
        %2227 = vst.msk [vmem:[#allocation3 + $0xec] sm:$0xf] %vm526, %v2195
        %2228 = vst.msk [vmem:[#allocation3 + $0xf4] sm:$0xf] %vm526, %v2196
        %2229 = vst.msk [vmem:[#allocation3 + $0xfc] sm:$0xf] %vm526, %v2197
        %v2230 = vld [vmem:[#allocation2 + $0x9] sm:$0xff]
        %v2231 = vld [vmem:[#allocation2 + $0x11] sm:$0xff]
        %v2232 = vld [vmem:[#allocation2 + $0x19] sm:$0xff]
        %v2233 = vld [vmem:[#allocation2 + $0x21] sm:$0xff]
        %v2234 = vld [vmem:[#allocation2 + $0x29] sm:$0xff]
        %v2235 = vld [vmem:[#allocation2 + $0x31] sm:$0xff]
        %v2236 = vld [vmem:[#allocation2 + $0x39] sm:$0xff]
        %v2237 = vld [vmem:[#allocation2 + $0x41] sm:$0xff]
        %v2238 = vld [vmem:[#allocation2 + $0x49] sm:$0xff]
        %v2239 = vld [vmem:[#allocation2 + $0x51] sm:$0xff]
        %v2240 = vld [vmem:[#allocation2 + $0x59] sm:$0xff]
        %v2241 = vld [vmem:[#allocation2 + $0x61] sm:$0xff]
        %v2242 = vld [vmem:[#allocation2 + $0x69] sm:$0xff]
        %v2243 = vld [vmem:[#allocation2 + $0x71] sm:$0xff]
        %v2244 = vld [vmem:[#allocation2 + $0x79] sm:$0xff]
        %v2245 = vld [vmem:[#allocation2 + $0x81] sm:$0xff]
        %v2246 = vld [vmem:[#allocation2 + $0x89] sm:$0xff]
        %v2247 = vld [vmem:[#allocation2 + $0x91] sm:$0xff]
        %v2248 = vld [vmem:[#allocation2 + $0x99] sm:$0xff]
        %v2249 = vld [vmem:[#allocation2 + $0xa1] sm:$0xff]
        %v2250 = vld [vmem:[#allocation2 + $0xa9] sm:$0xff]
        %v2251 = vld [vmem:[#allocation2 + $0xb1] sm:$0xff]
        %v2252 = vld [vmem:[#allocation2 + $0xb9] sm:$0xff]
        %v2253 = vld [vmem:[#allocation2 + $0xc1] sm:$0xff]
        %v2254 = vld [vmem:[#allocation2 + $0xc9] sm:$0xff]
        %v2255 = vld [vmem:[#allocation2 + $0xd1] sm:$0xff]
        %v2256 = vld [vmem:[#allocation2 + $0xd9] sm:$0xff]
        %v2257 = vld [vmem:[#allocation2 + $0xe1] sm:$0xff]
        %v2258 = vld [vmem:[#allocation2 + $0xe9] sm:$0xff]
        %v2259 = vld [vmem:[#allocation2 + $0xf1] sm:$0xff]
        %v2260 = vld [vmem:[#allocation2 + $0xf9] sm:$0xff]
        %v2261 = vld [vmem:[#allocation2 + $0x101] sm:$0xff]
        %v2262 = vpack.c.bf16 %v2230, %v2230
        %v2263 = vpack.c.bf16 %v2231, %v2231
        %v2264 = vpack.c.bf16 %v2232, %v2232
        %v2265 = vpack.c.bf16 %v2233, %v2233
        %v2266 = vpack.c.bf16 %v2234, %v2234
        %v2267 = vpack.c.bf16 %v2235, %v2235
        %v2268 = vpack.c.bf16 %v2236, %v2236
        %v2269 = vpack.c.bf16 %v2237, %v2237
        %v2270 = vpack.c.bf16 %v2238, %v2238
        %v2271 = vpack.c.bf16 %v2239, %v2239
        %v2272 = vpack.c.bf16 %v2240, %v2240
        %v2273 = vpack.c.bf16 %v2241, %v2241
        %v2274 = vpack.c.bf16 %v2242, %v2242
        %v2275 = vpack.c.bf16 %v2243, %v2243
        %v2276 = vpack.c.bf16 %v2244, %v2244
        %v2277 = vpack.c.bf16 %v2245, %v2245
        %v2278 = vpack.c.bf16 %v2246, %v2246
        %v2279 = vpack.c.bf16 %v2247, %v2247
        %v2280 = vpack.c.bf16 %v2248, %v2248
        %v2281 = vpack.c.bf16 %v2249, %v2249
        %v2282 = vpack.c.bf16 %v2250, %v2250
        %v2283 = vpack.c.bf16 %v2251, %v2251
        %v2284 = vpack.c.bf16 %v2252, %v2252
        %v2285 = vpack.c.bf16 %v2253, %v2253
        %v2286 = vpack.c.bf16 %v2254, %v2254
        %v2287 = vpack.c.bf16 %v2255, %v2255
        %v2288 = vpack.c.bf16 %v2256, %v2256
        %v2289 = vpack.c.bf16 %v2257, %v2257
        %v2290 = vpack.c.bf16 %v2258, %v2258
        %v2291 = vpack.c.bf16 %v2259, %v2259
        %v2292 = vpack.c.bf16 %v2260, %v2260
        %v2293 = vpack.c.bf16 %v2261, %v2261
        %2326 = vrot.lane.b32.xlu0 %v2262, 16
        %v2327 = vpop.permute.xlu0 %2326
        %2328 = vrot.lane.b32.xlu0 %v2263, 16
        %v2329 = vpop.permute.xlu0 %2328
        %2330 = vrot.lane.b32.xlu0 %v2264, 16
        %v2331 = vpop.permute.xlu0 %2330
        %2332 = vrot.lane.b32.xlu0 %v2265, 16
        %v2333 = vpop.permute.xlu0 %2332
        %2334 = vrot.lane.b32.xlu0 %v2266, 16
        %v2335 = vpop.permute.xlu0 %2334
        %2336 = vrot.lane.b32.xlu0 %v2267, 16
        %v2337 = vpop.permute.xlu0 %2336
        %2338 = vrot.lane.b32.xlu0 %v2268, 16
        %v2339 = vpop.permute.xlu0 %2338
        %2340 = vrot.lane.b32.xlu0 %v2269, 16
        %v2341 = vpop.permute.xlu0 %2340
        %2342 = vrot.lane.b32.xlu0 %v2270, 16
        %v2343 = vpop.permute.xlu0 %2342
        %2344 = vrot.lane.b32.xlu0 %v2271, 16
        %v2345 = vpop.permute.xlu0 %2344
        %2346 = vrot.lane.b32.xlu0 %v2272, 16
        %v2347 = vpop.permute.xlu0 %2346
        %2348 = vrot.lane.b32.xlu0 %v2273, 16
        %v2349 = vpop.permute.xlu0 %2348
        %2350 = vrot.lane.b32.xlu0 %v2274, 16
        %v2351 = vpop.permute.xlu0 %2350
        %2352 = vrot.lane.b32.xlu0 %v2275, 16
        %v2353 = vpop.permute.xlu0 %2352
        %2354 = vrot.lane.b32.xlu0 %v2276, 16
        %v2355 = vpop.permute.xlu0 %2354
        %2356 = vrot.lane.b32.xlu0 %v2277, 16
        %v2357 = vpop.permute.xlu0 %2356
        %2358 = vrot.lane.b32.xlu0 %v2278, 16
        %v2359 = vpop.permute.xlu0 %2358
        %2360 = vrot.lane.b32.xlu0 %v2279, 16
        %v2361 = vpop.permute.xlu0 %2360
        %2362 = vrot.lane.b32.xlu0 %v2280, 16
        %v2363 = vpop.permute.xlu0 %2362
        %2364 = vrot.lane.b32.xlu0 %v2281, 16
        %v2365 = vpop.permute.xlu0 %2364
        %2366 = vrot.lane.b32.xlu0 %v2282, 16
        %v2367 = vpop.permute.xlu0 %2366
        %2368 = vrot.lane.b32.xlu0 %v2283, 16
        %v2369 = vpop.permute.xlu0 %2368
        %2370 = vrot.lane.b32.xlu0 %v2284, 16
        %v2371 = vpop.permute.xlu0 %2370
        %2372 = vrot.lane.b32.xlu0 %v2285, 16
        %v2373 = vpop.permute.xlu0 %2372
        %2374 = vrot.lane.b32.xlu0 %v2286, 16
        %v2375 = vpop.permute.xlu0 %2374
        %2376 = vrot.lane.b32.xlu0 %v2287, 16
        %v2377 = vpop.permute.xlu0 %2376
        %2378 = vrot.lane.b32.xlu0 %v2288, 16
        %v2379 = vpop.permute.xlu0 %2378
        %2380 = vrot.lane.b32.xlu0 %v2289, 16
        %v2381 = vpop.permute.xlu0 %2380
        %2382 = vrot.lane.b32.xlu0 %v2290, 16
        %v2383 = vpop.permute.xlu0 %2382
        %2384 = vrot.lane.b32.xlu0 %v2291, 16
        %v2385 = vpop.permute.xlu0 %2384
        %2386 = vrot.lane.b32.xlu0 %v2292, 16
        %v2387 = vpop.permute.xlu0 %2386
        %2388 = vrot.lane.b32.xlu0 %v2293, 16
        %v2389 = vpop.permute.xlu0 %2388
        %2422 = vst.msk [vmem:[#allocation3 + $0x4] sm:$0xf] %vm751, %v2327
        %2423 = vst.msk [vmem:[#allocation3 + $0xc] sm:$0xf] %vm751, %v2329
        %2424 = vst.msk [vmem:[#allocation3 + $0x14] sm:$0xf] %vm751, %v2331
        %2425 = vst.msk [vmem:[#allocation3 + $0x1c] sm:$0xf] %vm751, %v2333
        %2426 = vst.msk [vmem:[#allocation3 + $0x24] sm:$0xf] %vm751, %v2335
        %2427 = vst.msk [vmem:[#allocation3 + $0x2c] sm:$0xf] %vm751, %v2337
        %2428 = vst.msk [vmem:[#allocation3 + $0x34] sm:$0xf] %vm751, %v2339
        %2429 = vst.msk [vmem:[#allocation3 + $0x3c] sm:$0xf] %vm751, %v2341
        %2430 = vst.msk [vmem:[#allocation3 + $0x44] sm:$0xf] %vm751, %v2343
        %2431 = vst.msk [vmem:[#allocation3 + $0x4c] sm:$0xf] %vm751, %v2345
        %2432 = vst.msk [vmem:[#allocation3 + $0x54] sm:$0xf] %vm751, %v2347
        %2433 = vst.msk [vmem:[#allocation3 + $0x5c] sm:$0xf] %vm751, %v2349
        %2434 = vst.msk [vmem:[#allocation3 + $0x64] sm:$0xf] %vm751, %v2351
        %2435 = vst.msk [vmem:[#allocation3 + $0x6c] sm:$0xf] %vm751, %v2353
        %2436 = vst.msk [vmem:[#allocation3 + $0x74] sm:$0xf] %vm751, %v2355
        %2437 = vst.msk [vmem:[#allocation3 + $0x7c] sm:$0xf] %vm751, %v2357
        %2438 = vst.msk [vmem:[#allocation3 + $0x84] sm:$0xf] %vm751, %v2359
        %2439 = vst.msk [vmem:[#allocation3 + $0x8c] sm:$0xf] %vm751, %v2361
        %2440 = vst.msk [vmem:[#allocation3 + $0x94] sm:$0xf] %vm751, %v2363
        %2441 = vst.msk [vmem:[#allocation3 + $0x9c] sm:$0xf] %vm751, %v2365
        %2442 = vst.msk [vmem:[#allocation3 + $0xa4] sm:$0xf] %vm751, %v2367
        %2443 = vst.msk [vmem:[#allocation3 + $0xac] sm:$0xf] %vm751, %v2369
        %2444 = vst.msk [vmem:[#allocation3 + $0xb4] sm:$0xf] %vm751, %v2371
        %2445 = vst.msk [vmem:[#allocation3 + $0xbc] sm:$0xf] %vm751, %v2373
        %2446 = vst.msk [vmem:[#allocation3 + $0xc4] sm:$0xf] %vm751, %v2375
        %2447 = vst.msk [vmem:[#allocation3 + $0xcc] sm:$0xf] %vm751, %v2377
        %2448 = vst.msk [vmem:[#allocation3 + $0xd4] sm:$0xf] %vm751, %v2379
        %2449 = vst.msk [vmem:[#allocation3 + $0xdc] sm:$0xf] %vm751, %v2381
        %2450 = vst.msk [vmem:[#allocation3 + $0xe4] sm:$0xf] %vm751, %v2383
        %2451 = vst.msk [vmem:[#allocation3 + $0xec] sm:$0xf] %vm751, %v2385
        %2452 = vst.msk [vmem:[#allocation3 + $0xf4] sm:$0xf] %vm751, %v2387
        %2453 = vst.msk [vmem:[#allocation3 + $0xfc] sm:$0xf] %vm751, %v2389
        %v2454 = vld [vmem:[#allocation2 + $0xa] sm:$0xff]
        %v2455 = vld [vmem:[#allocation2 + $0x12] sm:$0xff]
        %v2456 = vld [vmem:[#allocation2 + $0x1a] sm:$0xff]
        %v2457 = vld [vmem:[#allocation2 + $0x22] sm:$0xff]
        %v2458 = vld [vmem:[#allocation2 + $0x2a] sm:$0xff]
        %v2459 = vld [vmem:[#allocation2 + $0x32] sm:$0xff]
        %v2460 = vld [vmem:[#allocation2 + $0x3a] sm:$0xff]
        %v2461 = vld [vmem:[#allocation2 + $0x42] sm:$0xff]
        %v2462 = vld [vmem:[#allocation2 + $0x4a] sm:$0xff]
        %v2463 = vld [vmem:[#allocation2 + $0x52] sm:$0xff]
        %v2464 = vld [vmem:[#allocation2 + $0x5a] sm:$0xff]
        %v2465 = vld [vmem:[#allocation2 + $0x62] sm:$0xff]
        %v2466 = vld [vmem:[#allocation2 + $0x6a] sm:$0xff]
        %v2467 = vld [vmem:[#allocation2 + $0x72] sm:$0xff]
        %v2468 = vld [vmem:[#allocation2 + $0x7a] sm:$0xff]
        %v2469 = vld [vmem:[#allocation2 + $0x82] sm:$0xff]
        %v2470 = vld [vmem:[#allocation2 + $0x8a] sm:$0xff]
        %v2471 = vld [vmem:[#allocation2 + $0x92] sm:$0xff]
        %v2472 = vld [vmem:[#allocation2 + $0x9a] sm:$0xff]
        %v2473 = vld [vmem:[#allocation2 + $0xa2] sm:$0xff]
        %v2474 = vld [vmem:[#allocation2 + $0xaa] sm:$0xff]
        %v2475 = vld [vmem:[#allocation2 + $0xb2] sm:$0xff]
        %v2476 = vld [vmem:[#allocation2 + $0xba] sm:$0xff]
        %v2477 = vld [vmem:[#allocation2 + $0xc2] sm:$0xff]
        %v2478 = vld [vmem:[#allocation2 + $0xca] sm:$0xff]
        %v2479 = vld [vmem:[#allocation2 + $0xd2] sm:$0xff]
        %v2480 = vld [vmem:[#allocation2 + $0xda] sm:$0xff]
        %v2481 = vld [vmem:[#allocation2 + $0xe2] sm:$0xff]
        %v2482 = vld [vmem:[#allocation2 + $0xea] sm:$0xff]
        %v2483 = vld [vmem:[#allocation2 + $0xf2] sm:$0xff]
        %v2484 = vld [vmem:[#allocation2 + $0xfa] sm:$0xff]
        %v2485 = vld [vmem:[#allocation2 + $0x102] sm:$0xff]
        %v2486 = vpack.c.bf16 %v2454, %v2454
        %v2487 = vpack.c.bf16 %v2455, %v2455
        %v2488 = vpack.c.bf16 %v2456, %v2456
        %v2489 = vpack.c.bf16 %v2457, %v2457
        %v2490 = vpack.c.bf16 %v2458, %v2458
        %v2491 = vpack.c.bf16 %v2459, %v2459
        %v2492 = vpack.c.bf16 %v2460, %v2460
        %v2493 = vpack.c.bf16 %v2461, %v2461
        %v2494 = vpack.c.bf16 %v2462, %v2462
        %v2495 = vpack.c.bf16 %v2463, %v2463
        %v2496 = vpack.c.bf16 %v2464, %v2464
        %v2497 = vpack.c.bf16 %v2465, %v2465
        %v2498 = vpack.c.bf16 %v2466, %v2466
        %v2499 = vpack.c.bf16 %v2467, %v2467
        %v2500 = vpack.c.bf16 %v2468, %v2468
        %v2501 = vpack.c.bf16 %v2469, %v2469
        %v2502 = vpack.c.bf16 %v2470, %v2470
        %v2503 = vpack.c.bf16 %v2471, %v2471
        %v2504 = vpack.c.bf16 %v2472, %v2472
        %v2505 = vpack.c.bf16 %v2473, %v2473
        %v2506 = vpack.c.bf16 %v2474, %v2474
        %v2507 = vpack.c.bf16 %v2475, %v2475
        %v2508 = vpack.c.bf16 %v2476, %v2476
        %v2509 = vpack.c.bf16 %v2477, %v2477
        %v2510 = vpack.c.bf16 %v2478, %v2478
        %v2511 = vpack.c.bf16 %v2479, %v2479
        %v2512 = vpack.c.bf16 %v2480, %v2480
        %v2513 = vpack.c.bf16 %v2481, %v2481
        %v2514 = vpack.c.bf16 %v2482, %v2482
        %v2515 = vpack.c.bf16 %v2483, %v2483
        %v2516 = vpack.c.bf16 %v2484, %v2484
        %v2517 = vpack.c.bf16 %v2485, %v2485
        %2550 = vrot.lane.b32.xlu0 %v2486, 32
        %v2551 = vpop.permute.xlu0 %2550
        %2552 = vrot.lane.b32.xlu0 %v2487, 32
        %v2553 = vpop.permute.xlu0 %2552
        %2554 = vrot.lane.b32.xlu0 %v2488, 32
        %v2555 = vpop.permute.xlu0 %2554
        %2556 = vrot.lane.b32.xlu0 %v2489, 32
        %v2557 = vpop.permute.xlu0 %2556
        %2558 = vrot.lane.b32.xlu0 %v2490, 32
        %v2559 = vpop.permute.xlu0 %2558
        %2560 = vrot.lane.b32.xlu0 %v2491, 32
        %v2561 = vpop.permute.xlu0 %2560
        %2562 = vrot.lane.b32.xlu0 %v2492, 32
        %v2563 = vpop.permute.xlu0 %2562
        %2564 = vrot.lane.b32.xlu0 %v2493, 32
        %v2565 = vpop.permute.xlu0 %2564
        %2566 = vrot.lane.b32.xlu0 %v2494, 32
        %v2567 = vpop.permute.xlu0 %2566
        %2568 = vrot.lane.b32.xlu0 %v2495, 32
        %v2569 = vpop.permute.xlu0 %2568
        %2570 = vrot.lane.b32.xlu0 %v2496, 32
        %v2571 = vpop.permute.xlu0 %2570
        %2572 = vrot.lane.b32.xlu0 %v2497, 32
        %v2573 = vpop.permute.xlu0 %2572
        %2574 = vrot.lane.b32.xlu0 %v2498, 32
        %v2575 = vpop.permute.xlu0 %2574
        %2576 = vrot.lane.b32.xlu0 %v2499, 32
        %v2577 = vpop.permute.xlu0 %2576
        %2578 = vrot.lane.b32.xlu0 %v2500, 32
        %v2579 = vpop.permute.xlu0 %2578
        %2580 = vrot.lane.b32.xlu0 %v2501, 32
        %v2581 = vpop.permute.xlu0 %2580
        %2582 = vrot.lane.b32.xlu0 %v2502, 32
        %v2583 = vpop.permute.xlu0 %2582
        %2584 = vrot.lane.b32.xlu0 %v2503, 32
        %v2585 = vpop.permute.xlu0 %2584
        %2586 = vrot.lane.b32.xlu0 %v2504, 32
        %v2587 = vpop.permute.xlu0 %2586
        %2588 = vrot.lane.b32.xlu0 %v2505, 32
        %v2589 = vpop.permute.xlu0 %2588
        %2590 = vrot.lane.b32.xlu0 %v2506, 32
        %v2591 = vpop.permute.xlu0 %2590
        %2592 = vrot.lane.b32.xlu0 %v2507, 32
        %v2593 = vpop.permute.xlu0 %2592
        %2594 = vrot.lane.b32.xlu0 %v2508, 32
        %v2595 = vpop.permute.xlu0 %2594
        %2596 = vrot.lane.b32.xlu0 %v2509, 32
        %v2597 = vpop.permute.xlu0 %2596
        %2598 = vrot.lane.b32.xlu0 %v2510, 32
        %v2599 = vpop.permute.xlu0 %2598
        %2600 = vrot.lane.b32.xlu0 %v2511, 32
        %v2601 = vpop.permute.xlu0 %2600
        %2602 = vrot.lane.b32.xlu0 %v2512, 32
        %v2603 = vpop.permute.xlu0 %2602
        %2604 = vrot.lane.b32.xlu0 %v2513, 32
        %v2605 = vpop.permute.xlu0 %2604
        %2606 = vrot.lane.b32.xlu0 %v2514, 32
        %v2607 = vpop.permute.xlu0 %2606
        %2608 = vrot.lane.b32.xlu0 %v2515, 32
        %v2609 = vpop.permute.xlu0 %2608
        %2610 = vrot.lane.b32.xlu0 %v2516, 32
        %v2611 = vpop.permute.xlu0 %2610
        %2612 = vrot.lane.b32.xlu0 %v2517, 32
        %v2613 = vpop.permute.xlu0 %2612
        %2646 = vst.msk [vmem:[#allocation3 + $0x4] sm:$0xf] %vm976, %v2551
        %2647 = vst.msk [vmem:[#allocation3 + $0xc] sm:$0xf] %vm976, %v2553
        %2648 = vst.msk [vmem:[#allocation3 + $0x14] sm:$0xf] %vm976, %v2555
        %2649 = vst.msk [vmem:[#allocation3 + $0x1c] sm:$0xf] %vm976, %v2557
        %2650 = vst.msk [vmem:[#allocation3 + $0x24] sm:$0xf] %vm976, %v2559
        %2651 = vst.msk [vmem:[#allocation3 + $0x2c] sm:$0xf] %vm976, %v2561
        %2652 = vst.msk [vmem:[#allocation3 + $0x34] sm:$0xf] %vm976, %v2563
        %2653 = vst.msk [vmem:[#allocation3 + $0x3c] sm:$0xf] %vm976, %v2565
        %2654 = vst.msk [vmem:[#allocation3 + $0x44] sm:$0xf] %vm976, %v2567
        %2655 = vst.msk [vmem:[#allocation3 + $0x4c] sm:$0xf] %vm976, %v2569
        %2656 = vst.msk [vmem:[#allocation3 + $0x54] sm:$0xf] %vm976, %v2571
        %2657 = vst.msk [vmem:[#allocation3 + $0x5c] sm:$0xf] %vm976, %v2573
        %2658 = vst.msk [vmem:[#allocation3 + $0x64] sm:$0xf] %vm976, %v2575
        %2659 = vst.msk [vmem:[#allocation3 + $0x6c] sm:$0xf] %vm976, %v2577
        %2660 = vst.msk [vmem:[#allocation3 + $0x74] sm:$0xf] %vm976, %v2579
        %2661 = vst.msk [vmem:[#allocation3 + $0x7c] sm:$0xf] %vm976, %v2581
        %2662 = vst.msk [vmem:[#allocation3 + $0x84] sm:$0xf] %vm976, %v2583
        %2663 = vst.msk [vmem:[#allocation3 + $0x8c] sm:$0xf] %vm976, %v2585
        %2664 = vst.msk [vmem:[#allocation3 + $0x94] sm:$0xf] %vm976, %v2587
        %2665 = vst.msk [vmem:[#allocation3 + $0x9c] sm:$0xf] %vm976, %v2589
        %2666 = vst.msk [vmem:[#allocation3 + $0xa4] sm:$0xf] %vm976, %v2591
        %2667 = vst.msk [vmem:[#allocation3 + $0xac] sm:$0xf] %vm976, %v2593
        %2668 = vst.msk [vmem:[#allocation3 + $0xb4] sm:$0xf] %vm976, %v2595
        %2669 = vst.msk [vmem:[#allocation3 + $0xbc] sm:$0xf] %vm976, %v2597
        %2670 = vst.msk [vmem:[#allocation3 + $0xc4] sm:$0xf] %vm976, %v2599
        %2671 = vst.msk [vmem:[#allocation3 + $0xcc] sm:$0xf] %vm976, %v2601
        %2672 = vst.msk [vmem:[#allocation3 + $0xd4] sm:$0xf] %vm976, %v2603
        %2673 = vst.msk [vmem:[#allocation3 + $0xdc] sm:$0xf] %vm976, %v2605
        %2674 = vst.msk [vmem:[#allocation3 + $0xe4] sm:$0xf] %vm976, %v2607
        %2675 = vst.msk [vmem:[#allocation3 + $0xec] sm:$0xf] %vm976, %v2609
        %2676 = vst.msk [vmem:[#allocation3 + $0xf4] sm:$0xf] %vm976, %v2611
        %2677 = vst.msk [vmem:[#allocation3 + $0xfc] sm:$0xf] %vm976, %v2613
        %v2678 = vld [vmem:[#allocation2 + $0xb] sm:$0xff]
        %v2679 = vld [vmem:[#allocation2 + $0x13] sm:$0xff]
        %v2680 = vld [vmem:[#allocation2 + $0x1b] sm:$0xff]
        %v2681 = vld [vmem:[#allocation2 + $0x23] sm:$0xff]
        %v2682 = vld [vmem:[#allocation2 + $0x2b] sm:$0xff]
        %v2683 = vld [vmem:[#allocation2 + $0x33] sm:$0xff]
        %v2684 = vld [vmem:[#allocation2 + $0x3b] sm:$0xff]
        %v2685 = vld [vmem:[#allocation2 + $0x43] sm:$0xff]
        %v2686 = vld [vmem:[#allocation2 + $0x4b] sm:$0xff]
        %v2687 = vld [vmem:[#allocation2 + $0x53] sm:$0xff]
        %v2688 = vld [vmem:[#allocation2 + $0x5b] sm:$0xff]
        %v2689 = vld [vmem:[#allocation2 + $0x63] sm:$0xff]
        %v2690 = vld [vmem:[#allocation2 + $0x6b] sm:$0xff]
        %v2691 = vld [vmem:[#allocation2 + $0x73] sm:$0xff]
        %v2692 = vld [vmem:[#allocation2 + $0x7b] sm:$0xff]
        %v2693 = vld [vmem:[#allocation2 + $0x83] sm:$0xff]
        %v2694 = vld [vmem:[#allocation2 + $0x8b] sm:$0xff]
        %v2695 = vld [vmem:[#allocation2 + $0x93] sm:$0xff]
        %v2696 = vld [vmem:[#allocation2 + $0x9b] sm:$0xff]
        %v2697 = vld [vmem:[#allocation2 + $0xa3] sm:$0xff]
        %v2698 = vld [vmem:[#allocation2 + $0xab] sm:$0xff]
        %v2699 = vld [vmem:[#allocation2 + $0xb3] sm:$0xff]
        %v2700 = vld [vmem:[#allocation2 + $0xbb] sm:$0xff]
        %v2701 = vld [vmem:[#allocation2 + $0xc3] sm:$0xff]
        %v2702 = vld [vmem:[#allocation2 + $0xcb] sm:$0xff]
        %v2703 = vld [vmem:[#allocation2 + $0xd3] sm:$0xff]
        %v2704 = vld [vmem:[#allocation2 + $0xdb] sm:$0xff]
        %v2705 = vld [vmem:[#allocation2 + $0xe3] sm:$0xff]
        %v2706 = vld [vmem:[#allocation2 + $0xeb] sm:$0xff]
        %v2707 = vld [vmem:[#allocation2 + $0xf3] sm:$0xff]
        %v2708 = vld [vmem:[#allocation2 + $0xfb] sm:$0xff]
        %v2709 = vld [vmem:[#allocation2 + $0x103] sm:$0xff]
        %v2710 = vpack.c.bf16 %v2678, %v2678
        %v2711 = vpack.c.bf16 %v2679, %v2679
        %v2712 = vpack.c.bf16 %v2680, %v2680
        %v2713 = vpack.c.bf16 %v2681, %v2681
        %v2714 = vpack.c.bf16 %v2682, %v2682
        %v2715 = vpack.c.bf16 %v2683, %v2683
        %v2716 = vpack.c.bf16 %v2684, %v2684
        %v2717 = vpack.c.bf16 %v2685, %v2685
        %v2718 = vpack.c.bf16 %v2686, %v2686
        %v2719 = vpack.c.bf16 %v2687, %v2687
        %v2720 = vpack.c.bf16 %v2688, %v2688
        %v2721 = vpack.c.bf16 %v2689, %v2689
        %v2722 = vpack.c.bf16 %v2690, %v2690
        %v2723 = vpack.c.bf16 %v2691, %v2691
        %v2724 = vpack.c.bf16 %v2692, %v2692
        %v2725 = vpack.c.bf16 %v2693, %v2693
        %v2726 = vpack.c.bf16 %v2694, %v2694
        %v2727 = vpack.c.bf16 %v2695, %v2695
        %v2728 = vpack.c.bf16 %v2696, %v2696
        %v2729 = vpack.c.bf16 %v2697, %v2697
        %v2730 = vpack.c.bf16 %v2698, %v2698
        %v2731 = vpack.c.bf16 %v2699, %v2699
        %v2732 = vpack.c.bf16 %v2700, %v2700
        %v2733 = vpack.c.bf16 %v2701, %v2701
        %v2734 = vpack.c.bf16 %v2702, %v2702
        %v2735 = vpack.c.bf16 %v2703, %v2703
        %v2736 = vpack.c.bf16 %v2704, %v2704
        %v2737 = vpack.c.bf16 %v2705, %v2705
        %v2738 = vpack.c.bf16 %v2706, %v2706
        %v2739 = vpack.c.bf16 %v2707, %v2707
        %v2740 = vpack.c.bf16 %v2708, %v2708
        %v2741 = vpack.c.bf16 %v2709, %v2709
        %2774 = vrot.lane.b32.xlu0 %v2710, 48
        %v2775 = vpop.permute.xlu0 %2774
        %2776 = vrot.lane.b32.xlu0 %v2711, 48
        %v2777 = vpop.permute.xlu0 %2776
        %2778 = vrot.lane.b32.xlu0 %v2712, 48
        %v2779 = vpop.permute.xlu0 %2778
        %2780 = vrot.lane.b32.xlu0 %v2713, 48
        %v2781 = vpop.permute.xlu0 %2780
        %2782 = vrot.lane.b32.xlu0 %v2714, 48
        %v2783 = vpop.permute.xlu0 %2782
        %2784 = vrot.lane.b32.xlu0 %v2715, 48
        %v2785 = vpop.permute.xlu0 %2784
        %2786 = vrot.lane.b32.xlu0 %v2716, 48
        %v2787 = vpop.permute.xlu0 %2786
        %2788 = vrot.lane.b32.xlu0 %v2717, 48
        %v2789 = vpop.permute.xlu0 %2788
        %2790 = vrot.lane.b32.xlu0 %v2718, 48
        %v2791 = vpop.permute.xlu0 %2790
        %2792 = vrot.lane.b32.xlu0 %v2719, 48
        %v2793 = vpop.permute.xlu0 %2792
        %2794 = vrot.lane.b32.xlu0 %v2720, 48
        %v2795 = vpop.permute.xlu0 %2794
        %2796 = vrot.lane.b32.xlu0 %v2721, 48
        %v2797 = vpop.permute.xlu0 %2796
        %2798 = vrot.lane.b32.xlu0 %v2722, 48
        %v2799 = vpop.permute.xlu0 %2798
        %2800 = vrot.lane.b32.xlu0 %v2723, 48
        %v2801 = vpop.permute.xlu0 %2800
        %2802 = vrot.lane.b32.xlu0 %v2724, 48
        %v2803 = vpop.permute.xlu0 %2802
        %2804 = vrot.lane.b32.xlu0 %v2725, 48
        %v2805 = vpop.permute.xlu0 %2804
        %2806 = vrot.lane.b32.xlu0 %v2726, 48
        %v2807 = vpop.permute.xlu0 %2806
        %2808 = vrot.lane.b32.xlu0 %v2727, 48
        %v2809 = vpop.permute.xlu0 %2808
        %2810 = vrot.lane.b32.xlu0 %v2728, 48
        %v2811 = vpop.permute.xlu0 %2810
        %2812 = vrot.lane.b32.xlu0 %v2729, 48
        %v2813 = vpop.permute.xlu0 %2812
        %2814 = vrot.lane.b32.xlu0 %v2730, 48
        %v2815 = vpop.permute.xlu0 %2814
        %2816 = vrot.lane.b32.xlu0 %v2731, 48
        %v2817 = vpop.permute.xlu0 %2816
        %2818 = vrot.lane.b32.xlu0 %v2732, 48
        %v2819 = vpop.permute.xlu0 %2818
        %2820 = vrot.lane.b32.xlu0 %v2733, 48
        %v2821 = vpop.permute.xlu0 %2820
        %2822 = vrot.lane.b32.xlu0 %v2734, 48
        %v2823 = vpop.permute.xlu0 %2822
        %2824 = vrot.lane.b32.xlu0 %v2735, 48
        %v2825 = vpop.permute.xlu0 %2824
        %2826 = vrot.lane.b32.xlu0 %v2736, 48
        %v2827 = vpop.permute.xlu0 %2826
        %2828 = vrot.lane.b32.xlu0 %v2737, 48
        %v2829 = vpop.permute.xlu0 %2828
        %2830 = vrot.lane.b32.xlu0 %v2738, 48
        %v2831 = vpop.permute.xlu0 %2830
        %2832 = vrot.lane.b32.xlu0 %v2739, 48
        %v2833 = vpop.permute.xlu0 %2832
        %2834 = vrot.lane.b32.xlu0 %v2740, 48
        %v2835 = vpop.permute.xlu0 %2834
        %2836 = vrot.lane.b32.xlu0 %v2741, 48
        %v2837 = vpop.permute.xlu0 %2836
        %2870 = vst.msk [vmem:[#allocation3 + $0x4] sm:$0xf] %vm1201, %v2775
        %2871 = vst.msk [vmem:[#allocation3 + $0xc] sm:$0xf] %vm1201, %v2777
        %2872 = vst.msk [vmem:[#allocation3 + $0x14] sm:$0xf] %vm1201, %v2779
        %2873 = vst.msk [vmem:[#allocation3 + $0x1c] sm:$0xf] %vm1201, %v2781
        %2874 = vst.msk [vmem:[#allocation3 + $0x24] sm:$0xf] %vm1201, %v2783
        %2875 = vst.msk [vmem:[#allocation3 + $0x2c] sm:$0xf] %vm1201, %v2785
        %2876 = vst.msk [vmem:[#allocation3 + $0x34] sm:$0xf] %vm1201, %v2787
        %2877 = vst.msk [vmem:[#allocation3 + $0x3c] sm:$0xf] %vm1201, %v2789
        %2878 = vst.msk [vmem:[#allocation3 + $0x44] sm:$0xf] %vm1201, %v2791
        %2879 = vst.msk [vmem:[#allocation3 + $0x4c] sm:$0xf] %vm1201, %v2793
        %2880 = vst.msk [vmem:[#allocation3 + $0x54] sm:$0xf] %vm1201, %v2795
        %2881 = vst.msk [vmem:[#allocation3 + $0x5c] sm:$0xf] %vm1201, %v2797
        %2882 = vst.msk [vmem:[#allocation3 + $0x64] sm:$0xf] %vm1201, %v2799
        %2883 = vst.msk [vmem:[#allocation3 + $0x6c] sm:$0xf] %vm1201, %v2801
        %2884 = vst.msk [vmem:[#allocation3 + $0x74] sm:$0xf] %vm1201, %v2803
        %2885 = vst.msk [vmem:[#allocation3 + $0x7c] sm:$0xf] %vm1201, %v2805
        %2886 = vst.msk [vmem:[#allocation3 + $0x84] sm:$0xf] %vm1201, %v2807
        %2887 = vst.msk [vmem:[#allocation3 + $0x8c] sm:$0xf] %vm1201, %v2809
        %2888 = vst.msk [vmem:[#allocation3 + $0x94] sm:$0xf] %vm1201, %v2811
        %2889 = vst.msk [vmem:[#allocation3 + $0x9c] sm:$0xf] %vm1201, %v2813
        %2890 = vst.msk [vmem:[#allocation3 + $0xa4] sm:$0xf] %vm1201, %v2815
        %2891 = vst.msk [vmem:[#allocation3 + $0xac] sm:$0xf] %vm1201, %v2817
        %2892 = vst.msk [vmem:[#allocation3 + $0xb4] sm:$0xf] %vm1201, %v2819
        %2893 = vst.msk [vmem:[#allocation3 + $0xbc] sm:$0xf] %vm1201, %v2821
        %2894 = vst.msk [vmem:[#allocation3 + $0xc4] sm:$0xf] %vm1201, %v2823
        %2895 = vst.msk [vmem:[#allocation3 + $0xcc] sm:$0xf] %vm1201, %v2825
        %2896 = vst.msk [vmem:[#allocation3 + $0xd4] sm:$0xf] %vm1201, %v2827
        %2897 = vst.msk [vmem:[#allocation3 + $0xdc] sm:$0xf] %vm1201, %v2829
        %2898 = vst.msk [vmem:[#allocation3 + $0xe4] sm:$0xf] %vm1201, %v2831
        %2899 = vst.msk [vmem:[#allocation3 + $0xec] sm:$0xf] %vm1201, %v2833
        %2900 = vst.msk [vmem:[#allocation3 + $0xf4] sm:$0xf] %vm1201, %v2835
        %2901 = vst.msk [vmem:[#allocation3 + $0xfc] sm:$0xf] %vm1201, %v2837
        %v2902 = vld [vmem:[#allocation2 + $0xc] sm:$0xff]
        %v2903 = vld [vmem:[#allocation2 + $0x14] sm:$0xff]
        %v2904 = vld [vmem:[#allocation2 + $0x1c] sm:$0xff]
        %v2905 = vld [vmem:[#allocation2 + $0x24] sm:$0xff]
        %v2906 = vld [vmem:[#allocation2 + $0x2c] sm:$0xff]
        %v2907 = vld [vmem:[#allocation2 + $0x34] sm:$0xff]
        %v2908 = vld [vmem:[#allocation2 + $0x3c] sm:$0xff]
        %v2909 = vld [vmem:[#allocation2 + $0x44] sm:$0xff]
        %v2910 = vld [vmem:[#allocation2 + $0x4c] sm:$0xff]
        %v2911 = vld [vmem:[#allocation2 + $0x54] sm:$0xff]
        %v2912 = vld [vmem:[#allocation2 + $0x5c] sm:$0xff]
        %v2913 = vld [vmem:[#allocation2 + $0x64] sm:$0xff]
        %v2914 = vld [vmem:[#allocation2 + $0x6c] sm:$0xff]
        %v2915 = vld [vmem:[#allocation2 + $0x74] sm:$0xff]
        %v2916 = vld [vmem:[#allocation2 + $0x7c] sm:$0xff]
        %v2917 = vld [vmem:[#allocation2 + $0x84] sm:$0xff]
        %v2918 = vld [vmem:[#allocation2 + $0x8c] sm:$0xff]
        %v2919 = vld [vmem:[#allocation2 + $0x94] sm:$0xff]
        %v2920 = vld [vmem:[#allocation2 + $0x9c] sm:$0xff]
        %v2921 = vld [vmem:[#allocation2 + $0xa4] sm:$0xff]
        %v2922 = vld [vmem:[#allocation2 + $0xac] sm:$0xff]
        %v2923 = vld [vmem:[#allocation2 + $0xb4] sm:$0xff]
        %v2924 = vld [vmem:[#allocation2 + $0xbc] sm:$0xff]
        %v2925 = vld [vmem:[#allocation2 + $0xc4] sm:$0xff]
        %v2926 = vld [vmem:[#allocation2 + $0xcc] sm:$0xff]
        %v2927 = vld [vmem:[#allocation2 + $0xd4] sm:$0xff]
        %v2928 = vld [vmem:[#allocation2 + $0xdc] sm:$0xff]
        %v2929 = vld [vmem:[#allocation2 + $0xe4] sm:$0xff]
        %v2930 = vld [vmem:[#allocation2 + $0xec] sm:$0xff]
        %v2931 = vld [vmem:[#allocation2 + $0xf4] sm:$0xff]
        %v2932 = vld [vmem:[#allocation2 + $0xfc] sm:$0xff]
        %v2933 = vld [vmem:[#allocation2 + $0x104] sm:$0xff]
        %v2934 = vpack.c.bf16 %v2902, %v2902
        %v2935 = vpack.c.bf16 %v2903, %v2903
        %v2936 = vpack.c.bf16 %v2904, %v2904
        %v2937 = vpack.c.bf16 %v2905, %v2905
        %v2938 = vpack.c.bf16 %v2906, %v2906
        %v2939 = vpack.c.bf16 %v2907, %v2907
        %v2940 = vpack.c.bf16 %v2908, %v2908
        %v2941 = vpack.c.bf16 %v2909, %v2909
        %v2942 = vpack.c.bf16 %v2910, %v2910
        %v2943 = vpack.c.bf16 %v2911, %v2911
        %v2944 = vpack.c.bf16 %v2912, %v2912
        %v2945 = vpack.c.bf16 %v2913, %v2913
        %v2946 = vpack.c.bf16 %v2914, %v2914
        %v2947 = vpack.c.bf16 %v2915, %v2915
        %v2948 = vpack.c.bf16 %v2916, %v2916
        %v2949 = vpack.c.bf16 %v2917, %v2917
        %v2950 = vpack.c.bf16 %v2918, %v2918
        %v2951 = vpack.c.bf16 %v2919, %v2919
        %v2952 = vpack.c.bf16 %v2920, %v2920
        %v2953 = vpack.c.bf16 %v2921, %v2921
        %v2954 = vpack.c.bf16 %v2922, %v2922
        %v2955 = vpack.c.bf16 %v2923, %v2923
        %v2956 = vpack.c.bf16 %v2924, %v2924
        %v2957 = vpack.c.bf16 %v2925, %v2925
        %v2958 = vpack.c.bf16 %v2926, %v2926
        %v2959 = vpack.c.bf16 %v2927, %v2927
        %v2960 = vpack.c.bf16 %v2928, %v2928
        %v2961 = vpack.c.bf16 %v2929, %v2929
        %v2962 = vpack.c.bf16 %v2930, %v2930
        %v2963 = vpack.c.bf16 %v2931, %v2931
        %v2964 = vpack.c.bf16 %v2932, %v2932
        %v2965 = vpack.c.bf16 %v2933, %v2933
        %2998 = vrot.lane.b32.xlu0 %v2934, 64
        %v2999 = vpop.permute.xlu0 %2998
        %3000 = vrot.lane.b32.xlu0 %v2935, 64
        %v3001 = vpop.permute.xlu0 %3000
        %3002 = vrot.lane.b32.xlu0 %v2936, 64
        %v3003 = vpop.permute.xlu0 %3002
        %3004 = vrot.lane.b32.xlu0 %v2937, 64
        %v3005 = vpop.permute.xlu0 %3004
        %3006 = vrot.lane.b32.xlu0 %v2938, 64
        %v3007 = vpop.permute.xlu0 %3006
        %3008 = vrot.lane.b32.xlu0 %v2939, 64
        %v3009 = vpop.permute.xlu0 %3008
        %3010 = vrot.lane.b32.xlu0 %v2940, 64
        %v3011 = vpop.permute.xlu0 %3010
        %3012 = vrot.lane.b32.xlu0 %v2941, 64
        %v3013 = vpop.permute.xlu0 %3012
        %3014 = vrot.lane.b32.xlu0 %v2942, 64
        %v3015 = vpop.permute.xlu0 %3014
        %3016 = vrot.lane.b32.xlu0 %v2943, 64
        %v3017 = vpop.permute.xlu0 %3016
        %3018 = vrot.lane.b32.xlu0 %v2944, 64
        %v3019 = vpop.permute.xlu0 %3018
        %3020 = vrot.lane.b32.xlu0 %v2945, 64
        %v3021 = vpop.permute.xlu0 %3020
        %3022 = vrot.lane.b32.xlu0 %v2946, 64
        %v3023 = vpop.permute.xlu0 %3022
        %3024 = vrot.lane.b32.xlu0 %v2947, 64
        %v3025 = vpop.permute.xlu0 %3024
        %3026 = vrot.lane.b32.xlu0 %v2948, 64
        %v3027 = vpop.permute.xlu0 %3026
        %3028 = vrot.lane.b32.xlu0 %v2949, 64
        %v3029 = vpop.permute.xlu0 %3028
        %3030 = vrot.lane.b32.xlu0 %v2950, 64
        %v3031 = vpop.permute.xlu0 %3030
        %3032 = vrot.lane.b32.xlu0 %v2951, 64
        %v3033 = vpop.permute.xlu0 %3032
        %3034 = vrot.lane.b32.xlu0 %v2952, 64
        %v3035 = vpop.permute.xlu0 %3034
        %3036 = vrot.lane.b32.xlu0 %v2953, 64
        %v3037 = vpop.permute.xlu0 %3036
        %3038 = vrot.lane.b32.xlu0 %v2954, 64
        %v3039 = vpop.permute.xlu0 %3038
        %3040 = vrot.lane.b32.xlu0 %v2955, 64
        %v3041 = vpop.permute.xlu0 %3040
        %3042 = vrot.lane.b32.xlu0 %v2956, 64
        %v3043 = vpop.permute.xlu0 %3042
        %3044 = vrot.lane.b32.xlu0 %v2957, 64
        %v3045 = vpop.permute.xlu0 %3044
        %3046 = vrot.lane.b32.xlu0 %v2958, 64
        %v3047 = vpop.permute.xlu0 %3046
        %3048 = vrot.lane.b32.xlu0 %v2959, 64
        %v3049 = vpop.permute.xlu0 %3048
        %3050 = vrot.lane.b32.xlu0 %v2960, 64
        %v3051 = vpop.permute.xlu0 %3050
        %3052 = vrot.lane.b32.xlu0 %v2961, 64
        %v3053 = vpop.permute.xlu0 %3052
        %3054 = vrot.lane.b32.xlu0 %v2962, 64
        %v3055 = vpop.permute.xlu0 %3054
        %3056 = vrot.lane.b32.xlu0 %v2963, 64
        %v3057 = vpop.permute.xlu0 %3056
        %3058 = vrot.lane.b32.xlu0 %v2964, 64
        %v3059 = vpop.permute.xlu0 %3058
        %3060 = vrot.lane.b32.xlu0 %v2965, 64
        %v3061 = vpop.permute.xlu0 %3060
        %3094 = vst.msk [vmem:[#allocation3 + $0x4] sm:$0xf] %vm1426, %v2999
        %3095 = vst.msk [vmem:[#allocation3 + $0xc] sm:$0xf] %vm1426, %v3001
        %3096 = vst.msk [vmem:[#allocation3 + $0x14] sm:$0xf] %vm1426, %v3003
        %3097 = vst.msk [vmem:[#allocation3 + $0x1c] sm:$0xf] %vm1426, %v3005
        %3098 = vst.msk [vmem:[#allocation3 + $0x24] sm:$0xf] %vm1426, %v3007
        %3099 = vst.msk [vmem:[#allocation3 + $0x2c] sm:$0xf] %vm1426, %v3009
        %3100 = vst.msk [vmem:[#allocation3 + $0x34] sm:$0xf] %vm1426, %v3011
        %3101 = vst.msk [vmem:[#allocation3 + $0x3c] sm:$0xf] %vm1426, %v3013
        %3102 = vst.msk [vmem:[#allocation3 + $0x44] sm:$0xf] %vm1426, %v3015
        %3103 = vst.msk [vmem:[#allocation3 + $0x4c] sm:$0xf] %vm1426, %v3017
        %3104 = vst.msk [vmem:[#allocation3 + $0x54] sm:$0xf] %vm1426, %v3019
        %3105 = vst.msk [vmem:[#allocation3 + $0x5c] sm:$0xf] %vm1426, %v3021
        %3106 = vst.msk [vmem:[#allocation3 + $0x64] sm:$0xf] %vm1426, %v3023
        %3107 = vst.msk [vmem:[#allocation3 + $0x6c] sm:$0xf] %vm1426, %v3025
        %3108 = vst.msk [vmem:[#allocation3 + $0x74] sm:$0xf] %vm1426, %v3027
        %3109 = vst.msk [vmem:[#allocation3 + $0x7c] sm:$0xf] %vm1426, %v3029
        %3110 = vst.msk [vmem:[#allocation3 + $0x84] sm:$0xf] %vm1426, %v3031
        %3111 = vst.msk [vmem:[#allocation3 + $0x8c] sm:$0xf] %vm1426, %v3033
        %3112 = vst.msk [vmem:[#allocation3 + $0x94] sm:$0xf] %vm1426, %v3035
        %3113 = vst.msk [vmem:[#allocation3 + $0x9c] sm:$0xf] %vm1426, %v3037
        %3114 = vst.msk [vmem:[#allocation3 + $0xa4] sm:$0xf] %vm1426, %v3039
        %3115 = vst.msk [vmem:[#allocation3 + $0xac] sm:$0xf] %vm1426, %v3041
        %3116 = vst.msk [vmem:[#allocation3 + $0xb4] sm:$0xf] %vm1426, %v3043
        %3117 = vst.msk [vmem:[#allocation3 + $0xbc] sm:$0xf] %vm1426, %v3045
        %3118 = vst.msk [vmem:[#allocation3 + $0xc4] sm:$0xf] %vm1426, %v3047
        %3119 = vst.msk [vmem:[#allocation3 + $0xcc] sm:$0xf] %vm1426, %v3049
        %3120 = vst.msk [vmem:[#allocation3 + $0xd4] sm:$0xf] %vm1426, %v3051
        %3121 = vst.msk [vmem:[#allocation3 + $0xdc] sm:$0xf] %vm1426, %v3053
        %3122 = vst.msk [vmem:[#allocation3 + $0xe4] sm:$0xf] %vm1426, %v3055
        %3123 = vst.msk [vmem:[#allocation3 + $0xec] sm:$0xf] %vm1426, %v3057
        %3124 = vst.msk [vmem:[#allocation3 + $0xf4] sm:$0xf] %vm1426, %v3059
        %3125 = vst.msk [vmem:[#allocation3 + $0xfc] sm:$0xf] %vm1426, %v3061
        %v3126 = vld [vmem:[#allocation2 + $0xd] sm:$0xff]
        %v3127 = vld [vmem:[#allocation2 + $0x15] sm:$0xff]
        %v3128 = vld [vmem:[#allocation2 + $0x1d] sm:$0xff]
        %v3129 = vld [vmem:[#allocation2 + $0x25] sm:$0xff]
        %v3130 = vld [vmem:[#allocation2 + $0x2d] sm:$0xff]
        %v3131 = vld [vmem:[#allocation2 + $0x35] sm:$0xff]
        %v3132 = vld [vmem:[#allocation2 + $0x3d] sm:$0xff]
        %v3133 = vld [vmem:[#allocation2 + $0x45] sm:$0xff]
        %v3134 = vld [vmem:[#allocation2 + $0x4d] sm:$0xff]
        %v3135 = vld [vmem:[#allocation2 + $0x55] sm:$0xff]
        %v3136 = vld [vmem:[#allocation2 + $0x5d] sm:$0xff]
        %v3137 = vld [vmem:[#allocation2 + $0x65] sm:$0xff]
        %v3138 = vld [vmem:[#allocation2 + $0x6d] sm:$0xff]
        %v3139 = vld [vmem:[#allocation2 + $0x75] sm:$0xff]
        %v3140 = vld [vmem:[#allocation2 + $0x7d] sm:$0xff]
        %v3141 = vld [vmem:[#allocation2 + $0x85] sm:$0xff]
        %v3142 = vld [vmem:[#allocation2 + $0x8d] sm:$0xff]
        %v3143 = vld [vmem:[#allocation2 + $0x95] sm:$0xff]
        %v3144 = vld [vmem:[#allocation2 + $0x9d] sm:$0xff]
        %v3145 = vld [vmem:[#allocation2 + $0xa5] sm:$0xff]
        %v3146 = vld [vmem:[#allocation2 + $0xad] sm:$0xff]
        %v3147 = vld [vmem:[#allocation2 + $0xb5] sm:$0xff]
        %v3148 = vld [vmem:[#allocation2 + $0xbd] sm:$0xff]
        %v3149 = vld [vmem:[#allocation2 + $0xc5] sm:$0xff]
        %v3150 = vld [vmem:[#allocation2 + $0xcd] sm:$0xff]
        %v3151 = vld [vmem:[#allocation2 + $0xd5] sm:$0xff]
        %v3152 = vld [vmem:[#allocation2 + $0xdd] sm:$0xff]
        %v3153 = vld [vmem:[#allocation2 + $0xe5] sm:$0xff]
        %v3154 = vld [vmem:[#allocation2 + $0xed] sm:$0xff]
        %v3155 = vld [vmem:[#allocation2 + $0xf5] sm:$0xff]
        %v3156 = vld [vmem:[#allocation2 + $0xfd] sm:$0xff]
        %v3157 = vld [vmem:[#allocation2 + $0x105] sm:$0xff]
        %v3158 = vpack.c.bf16 %v3126, %v3126
        %v3159 = vpack.c.bf16 %v3127, %v3127
        %v3160 = vpack.c.bf16 %v3128, %v3128
        %v3161 = vpack.c.bf16 %v3129, %v3129
        %v3162 = vpack.c.bf16 %v3130, %v3130
        %v3163 = vpack.c.bf16 %v3131, %v3131
        %v3164 = vpack.c.bf16 %v3132, %v3132
        %v3165 = vpack.c.bf16 %v3133, %v3133
        %v3166 = vpack.c.bf16 %v3134, %v3134
        %v3167 = vpack.c.bf16 %v3135, %v3135
        %v3168 = vpack.c.bf16 %v3136, %v3136
        %v3169 = vpack.c.bf16 %v3137, %v3137
        %v3170 = vpack.c.bf16 %v3138, %v3138
        %v3171 = vpack.c.bf16 %v3139, %v3139
        %v3172 = vpack.c.bf16 %v3140, %v3140
        %v3173 = vpack.c.bf16 %v3141, %v3141
        %v3174 = vpack.c.bf16 %v3142, %v3142
        %v3175 = vpack.c.bf16 %v3143, %v3143
        %v3176 = vpack.c.bf16 %v3144, %v3144
        %v3177 = vpack.c.bf16 %v3145, %v3145
        %v3178 = vpack.c.bf16 %v3146, %v3146
        %v3179 = vpack.c.bf16 %v3147, %v3147
        %v3180 = vpack.c.bf16 %v3148, %v3148
        %v3181 = vpack.c.bf16 %v3149, %v3149
        %v3182 = vpack.c.bf16 %v3150, %v3150
        %v3183 = vpack.c.bf16 %v3151, %v3151
        %v3184 = vpack.c.bf16 %v3152, %v3152
        %v3185 = vpack.c.bf16 %v3153, %v3153
        %v3186 = vpack.c.bf16 %v3154, %v3154
        %v3187 = vpack.c.bf16 %v3155, %v3155
        %v3188 = vpack.c.bf16 %v3156, %v3156
        %v3189 = vpack.c.bf16 %v3157, %v3157
        %3222 = vrot.lane.b32.xlu0 %v3158, 80
        %v3223 = vpop.permute.xlu0 %3222
        %3224 = vrot.lane.b32.xlu0 %v3159, 80
        %v3225 = vpop.permute.xlu0 %3224
        %3226 = vrot.lane.b32.xlu0 %v3160, 80
        %v3227 = vpop.permute.xlu0 %3226
        %3228 = vrot.lane.b32.xlu0 %v3161, 80
        %v3229 = vpop.permute.xlu0 %3228
        %3230 = vrot.lane.b32.xlu0 %v3162, 80
        %v3231 = vpop.permute.xlu0 %3230
        %3232 = vrot.lane.b32.xlu0 %v3163, 80
        %v3233 = vpop.permute.xlu0 %3232
        %3234 = vrot.lane.b32.xlu0 %v3164, 80
        %v3235 = vpop.permute.xlu0 %3234
        %3236 = vrot.lane.b32.xlu0 %v3165, 80
        %v3237 = vpop.permute.xlu0 %3236
        %3238 = vrot.lane.b32.xlu0 %v3166, 80
        %v3239 = vpop.permute.xlu0 %3238
        %3240 = vrot.lane.b32.xlu0 %v3167, 80
        %v3241 = vpop.permute.xlu0 %3240
        %3242 = vrot.lane.b32.xlu0 %v3168, 80
        %v3243 = vpop.permute.xlu0 %3242
        %3244 = vrot.lane.b32.xlu0 %v3169, 80
        %v3245 = vpop.permute.xlu0 %3244
        %3246 = vrot.lane.b32.xlu0 %v3170, 80
        %v3247 = vpop.permute.xlu0 %3246
        %3248 = vrot.lane.b32.xlu0 %v3171, 80
        %v3249 = vpop.permute.xlu0 %3248
        %3250 = vrot.lane.b32.xlu0 %v3172, 80
        %v3251 = vpop.permute.xlu0 %3250
        %3252 = vrot.lane.b32.xlu0 %v3173, 80
        %v3253 = vpop.permute.xlu0 %3252
        %3254 = vrot.lane.b32.xlu0 %v3174, 80
        %v3255 = vpop.permute.xlu0 %3254
        %3256 = vrot.lane.b32.xlu0 %v3175, 80
        %v3257 = vpop.permute.xlu0 %3256
        %3258 = vrot.lane.b32.xlu0 %v3176, 80
        %v3259 = vpop.permute.xlu0 %3258
        %3260 = vrot.lane.b32.xlu0 %v3177, 80
        %v3261 = vpop.permute.xlu0 %3260
        %3262 = vrot.lane.b32.xlu0 %v3178, 80
        %v3263 = vpop.permute.xlu0 %3262
        %3264 = vrot.lane.b32.xlu0 %v3179, 80
        %v3265 = vpop.permute.xlu0 %3264
        %3266 = vrot.lane.b32.xlu0 %v3180, 80
        %v3267 = vpop.permute.xlu0 %3266
        %3268 = vrot.lane.b32.xlu0 %v3181, 80
        %v3269 = vpop.permute.xlu0 %3268
        %3270 = vrot.lane.b32.xlu0 %v3182, 80
        %v3271 = vpop.permute.xlu0 %3270
        %3272 = vrot.lane.b32.xlu0 %v3183, 80
        %v3273 = vpop.permute.xlu0 %3272
        %3274 = vrot.lane.b32.xlu0 %v3184, 80
        %v3275 = vpop.permute.xlu0 %3274
        %3276 = vrot.lane.b32.xlu0 %v3185, 80
        %v3277 = vpop.permute.xlu0 %3276
        %3278 = vrot.lane.b32.xlu0 %v3186, 80
        %v3279 = vpop.permute.xlu0 %3278
        %3280 = vrot.lane.b32.xlu0 %v3187, 80
        %v3281 = vpop.permute.xlu0 %3280
        %3282 = vrot.lane.b32.xlu0 %v3188, 80
        %v3283 = vpop.permute.xlu0 %3282
        %3284 = vrot.lane.b32.xlu0 %v3189, 80
        %v3285 = vpop.permute.xlu0 %3284
        %3318 = vst.msk [vmem:[#allocation3 + $0x4] sm:$0xf] %vm1651, %v3223
        %3319 = vst.msk [vmem:[#allocation3 + $0xc] sm:$0xf] %vm1651, %v3225
        %3320 = vst.msk [vmem:[#allocation3 + $0x14] sm:$0xf] %vm1651, %v3227
        %3321 = vst.msk [vmem:[#allocation3 + $0x1c] sm:$0xf] %vm1651, %v3229
        %3322 = vst.msk [vmem:[#allocation3 + $0x24] sm:$0xf] %vm1651, %v3231
        %3323 = vst.msk [vmem:[#allocation3 + $0x2c] sm:$0xf] %vm1651, %v3233
        %3324 = vst.msk [vmem:[#allocation3 + $0x34] sm:$0xf] %vm1651, %v3235
        %3325 = vst.msk [vmem:[#allocation3 + $0x3c] sm:$0xf] %vm1651, %v3237
        %3326 = vst.msk [vmem:[#allocation3 + $0x44] sm:$0xf] %vm1651, %v3239
        %3327 = vst.msk [vmem:[#allocation3 + $0x4c] sm:$0xf] %vm1651, %v3241
        %3328 = vst.msk [vmem:[#allocation3 + $0x54] sm:$0xf] %vm1651, %v3243
        %3329 = vst.msk [vmem:[#allocation3 + $0x5c] sm:$0xf] %vm1651, %v3245
        %3330 = vst.msk [vmem:[#allocation3 + $0x64] sm:$0xf] %vm1651, %v3247
        %3331 = vst.msk [vmem:[#allocation3 + $0x6c] sm:$0xf] %vm1651, %v3249
        %3332 = vst.msk [vmem:[#allocation3 + $0x74] sm:$0xf] %vm1651, %v3251
        %3333 = vst.msk [vmem:[#allocation3 + $0x7c] sm:$0xf] %vm1651, %v3253
        %3334 = vst.msk [vmem:[#allocation3 + $0x84] sm:$0xf] %vm1651, %v3255
        %3335 = vst.msk [vmem:[#allocation3 + $0x8c] sm:$0xf] %vm1651, %v3257
        %3336 = vst.msk [vmem:[#allocation3 + $0x94] sm:$0xf] %vm1651, %v3259
        %3337 = vst.msk [vmem:[#allocation3 + $0x9c] sm:$0xf] %vm1651, %v3261
        %3338 = vst.msk [vmem:[#allocation3 + $0xa4] sm:$0xf] %vm1651, %v3263
        %3339 = vst.msk [vmem:[#allocation3 + $0xac] sm:$0xf] %vm1651, %v3265
        %3340 = vst.msk [vmem:[#allocation3 + $0xb4] sm:$0xf] %vm1651, %v3267
        %3341 = vst.msk [vmem:[#allocation3 + $0xbc] sm:$0xf] %vm1651, %v3269
        %3342 = vst.msk [vmem:[#allocation3 + $0xc4] sm:$0xf] %vm1651, %v3271
        %3343 = vst.msk [vmem:[#allocation3 + $0xcc] sm:$0xf] %vm1651, %v3273
        %3344 = vst.msk [vmem:[#allocation3 + $0xd4] sm:$0xf] %vm1651, %v3275
        %3345 = vst.msk [vmem:[#allocation3 + $0xdc] sm:$0xf] %vm1651, %v3277
        %3346 = vst.msk [vmem:[#allocation3 + $0xe4] sm:$0xf] %vm1651, %v3279
        %3347 = vst.msk [vmem:[#allocation3 + $0xec] sm:$0xf] %vm1651, %v3281
        %3348 = vst.msk [vmem:[#allocation3 + $0xf4] sm:$0xf] %vm1651, %v3283
        %3349 = vst.msk [vmem:[#allocation3 + $0xfc] sm:$0xf] %vm1651, %v3285
        %v3350 = vld [vmem:[#allocation2 + $0xe] sm:$0xff]
        %v3351 = vld [vmem:[#allocation2 + $0x16] sm:$0xff]
        %v3352 = vld [vmem:[#allocation2 + $0x1e] sm:$0xff]
        %v3353 = vld [vmem:[#allocation2 + $0x26] sm:$0xff]
        %v3354 = vld [vmem:[#allocation2 + $0x2e] sm:$0xff]
        %v3355 = vld [vmem:[#allocation2 + $0x36] sm:$0xff]
        %v3356 = vld [vmem:[#allocation2 + $0x3e] sm:$0xff]
        %v3357 = vld [vmem:[#allocation2 + $0x46] sm:$0xff]
        %v3358 = vld [vmem:[#allocation2 + $0x4e] sm:$0xff]
        %v3359 = vld [vmem:[#allocation2 + $0x56] sm:$0xff]
        %v3360 = vld [vmem:[#allocation2 + $0x5e] sm:$0xff]
        %v3361 = vld [vmem:[#allocation2 + $0x66] sm:$0xff]
        %v3362 = vld [vmem:[#allocation2 + $0x6e] sm:$0xff]
        %v3363 = vld [vmem:[#allocation2 + $0x76] sm:$0xff]
        %v3364 = vld [vmem:[#allocation2 + $0x7e] sm:$0xff]
        %v3365 = vld [vmem:[#allocation2 + $0x86] sm:$0xff]
        %v3366 = vld [vmem:[#allocation2 + $0x8e] sm:$0xff]
        %v3367 = vld [vmem:[#allocation2 + $0x96] sm:$0xff]
        %v3368 = vld [vmem:[#allocation2 + $0x9e] sm:$0xff]
        %v3369 = vld [vmem:[#allocation2 + $0xa6] sm:$0xff]
        %v3370 = vld [vmem:[#allocation2 + $0xae] sm:$0xff]
        %v3371 = vld [vmem:[#allocation2 + $0xb6] sm:$0xff]
        %v3372 = vld [vmem:[#allocation2 + $0xbe] sm:$0xff]
        %v3373 = vld [vmem:[#allocation2 + $0xc6] sm:$0xff]
        %v3374 = vld [vmem:[#allocation2 + $0xce] sm:$0xff]
        %v3375 = vld [vmem:[#allocation2 + $0xd6] sm:$0xff]
        %v3376 = vld [vmem:[#allocation2 + $0xde] sm:$0xff]
        %v3377 = vld [vmem:[#allocation2 + $0xe6] sm:$0xff]
        %v3378 = vld [vmem:[#allocation2 + $0xee] sm:$0xff]
        %v3379 = vld [vmem:[#allocation2 + $0xf6] sm:$0xff]
        %v3380 = vld [vmem:[#allocation2 + $0xfe] sm:$0xff]
        %v3381 = vld [vmem:[#allocation2 + $0x106] sm:$0xff]
        %v3382 = vpack.c.bf16 %v3350, %v3350
        %v3383 = vpack.c.bf16 %v3351, %v3351
        %v3384 = vpack.c.bf16 %v3352, %v3352
        %v3385 = vpack.c.bf16 %v3353, %v3353
        %v3386 = vpack.c.bf16 %v3354, %v3354
        %v3387 = vpack.c.bf16 %v3355, %v3355
        %v3388 = vpack.c.bf16 %v3356, %v3356
        %v3389 = vpack.c.bf16 %v3357, %v3357
        %v3390 = vpack.c.bf16 %v3358, %v3358
        %v3391 = vpack.c.bf16 %v3359, %v3359
        %v3392 = vpack.c.bf16 %v3360, %v3360
        %v3393 = vpack.c.bf16 %v3361, %v3361
        %v3394 = vpack.c.bf16 %v3362, %v3362
        %v3395 = vpack.c.bf16 %v3363, %v3363
        %v3396 = vpack.c.bf16 %v3364, %v3364
        %v3397 = vpack.c.bf16 %v3365, %v3365
        %v3398 = vpack.c.bf16 %v3366, %v3366
        %v3399 = vpack.c.bf16 %v3367, %v3367
        %v3400 = vpack.c.bf16 %v3368, %v3368
        %v3401 = vpack.c.bf16 %v3369, %v3369
        %v3402 = vpack.c.bf16 %v3370, %v3370
        %v3403 = vpack.c.bf16 %v3371, %v3371
        %v3404 = vpack.c.bf16 %v3372, %v3372
        %v3405 = vpack.c.bf16 %v3373, %v3373
        %v3406 = vpack.c.bf16 %v3374, %v3374
        %v3407 = vpack.c.bf16 %v3375, %v3375
        %v3408 = vpack.c.bf16 %v3376, %v3376
        %v3409 = vpack.c.bf16 %v3377, %v3377
        %v3410 = vpack.c.bf16 %v3378, %v3378
        %v3411 = vpack.c.bf16 %v3379, %v3379
        %v3412 = vpack.c.bf16 %v3380, %v3380
        %v3413 = vpack.c.bf16 %v3381, %v3381
        %3446 = vrot.lane.b32.xlu0 %v3382, 96
        %v3447 = vpop.permute.xlu0 %3446
        %3448 = vrot.lane.b32.xlu0 %v3383, 96
        %v3449 = vpop.permute.xlu0 %3448
        %3450 = vrot.lane.b32.xlu0 %v3384, 96
        %v3451 = vpop.permute.xlu0 %3450
        %3452 = vrot.lane.b32.xlu0 %v3385, 96
        %v3453 = vpop.permute.xlu0 %3452
        %3454 = vrot.lane.b32.xlu0 %v3386, 96
        %v3455 = vpop.permute.xlu0 %3454
        %3456 = vrot.lane.b32.xlu0 %v3387, 96
        %v3457 = vpop.permute.xlu0 %3456
        %3458 = vrot.lane.b32.xlu0 %v3388, 96
        %v3459 = vpop.permute.xlu0 %3458
        %3460 = vrot.lane.b32.xlu0 %v3389, 96
        %v3461 = vpop.permute.xlu0 %3460
        %3462 = vrot.lane.b32.xlu0 %v3390, 96
        %v3463 = vpop.permute.xlu0 %3462
        %3464 = vrot.lane.b32.xlu0 %v3391, 96
        %v3465 = vpop.permute.xlu0 %3464
        %3466 = vrot.lane.b32.xlu0 %v3392, 96
        %v3467 = vpop.permute.xlu0 %3466
        %3468 = vrot.lane.b32.xlu0 %v3393, 96
        %v3469 = vpop.permute.xlu0 %3468
        %3470 = vrot.lane.b32.xlu0 %v3394, 96
        %v3471 = vpop.permute.xlu0 %3470
        %3472 = vrot.lane.b32.xlu0 %v3395, 96
        %v3473 = vpop.permute.xlu0 %3472
        %3474 = vrot.lane.b32.xlu0 %v3396, 96
        %v3475 = vpop.permute.xlu0 %3474
        %3476 = vrot.lane.b32.xlu0 %v3397, 96
        %v3477 = vpop.permute.xlu0 %3476
        %3478 = vrot.lane.b32.xlu0 %v3398, 96
        %v3479 = vpop.permute.xlu0 %3478
        %3480 = vrot.lane.b32.xlu0 %v3399, 96
        %v3481 = vpop.permute.xlu0 %3480
        %3482 = vrot.lane.b32.xlu0 %v3400, 96
        %v3483 = vpop.permute.xlu0 %3482
        %3484 = vrot.lane.b32.xlu0 %v3401, 96
        %v3485 = vpop.permute.xlu0 %3484
        %3486 = vrot.lane.b32.xlu0 %v3402, 96
        %v3487 = vpop.permute.xlu0 %3486
        %3488 = vrot.lane.b32.xlu0 %v3403, 96
        %v3489 = vpop.permute.xlu0 %3488
        %3490 = vrot.lane.b32.xlu0 %v3404, 96
        %v3491 = vpop.permute.xlu0 %3490
        %3492 = vrot.lane.b32.xlu0 %v3405, 96
        %v3493 = vpop.permute.xlu0 %3492
        %3494 = vrot.lane.b32.xlu0 %v3406, 96
        %v3495 = vpop.permute.xlu0 %3494
        %3496 = vrot.lane.b32.xlu0 %v3407, 96
        %v3497 = vpop.permute.xlu0 %3496
        %3498 = vrot.lane.b32.xlu0 %v3408, 96
        %v3499 = vpop.permute.xlu0 %3498
        %3500 = vrot.lane.b32.xlu0 %v3409, 96
        %v3501 = vpop.permute.xlu0 %3500
        %3502 = vrot.lane.b32.xlu0 %v3410, 96
        %v3503 = vpop.permute.xlu0 %3502
        %3504 = vrot.lane.b32.xlu0 %v3411, 96
        %v3505 = vpop.permute.xlu0 %3504
        %3506 = vrot.lane.b32.xlu0 %v3412, 96
        %v3507 = vpop.permute.xlu0 %3506
        %3508 = vrot.lane.b32.xlu0 %v3413, 96
        %v3509 = vpop.permute.xlu0 %3508
        %3542 = vst.msk [vmem:[#allocation3 + $0x4] sm:$0xf] %vm1876, %v3447
        %3543 = vst.msk [vmem:[#allocation3 + $0xc] sm:$0xf] %vm1876, %v3449
        %3544 = vst.msk [vmem:[#allocation3 + $0x14] sm:$0xf] %vm1876, %v3451
        %3545 = vst.msk [vmem:[#allocation3 + $0x1c] sm:$0xf] %vm1876, %v3453
        %3546 = vst.msk [vmem:[#allocation3 + $0x24] sm:$0xf] %vm1876, %v3455
        %3547 = vst.msk [vmem:[#allocation3 + $0x2c] sm:$0xf] %vm1876, %v3457
        %3548 = vst.msk [vmem:[#allocation3 + $0x34] sm:$0xf] %vm1876, %v3459
        %3549 = vst.msk [vmem:[#allocation3 + $0x3c] sm:$0xf] %vm1876, %v3461
        %3550 = vst.msk [vmem:[#allocation3 + $0x44] sm:$0xf] %vm1876, %v3463
        %3551 = vst.msk [vmem:[#allocation3 + $0x4c] sm:$0xf] %vm1876, %v3465
        %3552 = vst.msk [vmem:[#allocation3 + $0x54] sm:$0xf] %vm1876, %v3467
        %3553 = vst.msk [vmem:[#allocation3 + $0x5c] sm:$0xf] %vm1876, %v3469
        %3554 = vst.msk [vmem:[#allocation3 + $0x64] sm:$0xf] %vm1876, %v3471
        %3555 = vst.msk [vmem:[#allocation3 + $0x6c] sm:$0xf] %vm1876, %v3473
        %3556 = vst.msk [vmem:[#allocation3 + $0x74] sm:$0xf] %vm1876, %v3475
        %3557 = vst.msk [vmem:[#allocation3 + $0x7c] sm:$0xf] %vm1876, %v3477
        %3558 = vst.msk [vmem:[#allocation3 + $0x84] sm:$0xf] %vm1876, %v3479
        %3559 = vst.msk [vmem:[#allocation3 + $0x8c] sm:$0xf] %vm1876, %v3481
        %3560 = vst.msk [vmem:[#allocation3 + $0x94] sm:$0xf] %vm1876, %v3483
        %3561 = vst.msk [vmem:[#allocation3 + $0x9c] sm:$0xf] %vm1876, %v3485
        %3562 = vst.msk [vmem:[#allocation3 + $0xa4] sm:$0xf] %vm1876, %v3487
        %3563 = vst.msk [vmem:[#allocation3 + $0xac] sm:$0xf] %vm1876, %v3489
        %3564 = vst.msk [vmem:[#allocation3 + $0xb4] sm:$0xf] %vm1876, %v3491
        %3565 = vst.msk [vmem:[#allocation3 + $0xbc] sm:$0xf] %vm1876, %v3493
        %3566 = vst.msk [vmem:[#allocation3 + $0xc4] sm:$0xf] %vm1876, %v3495
        %3567 = vst.msk [vmem:[#allocation3 + $0xcc] sm:$0xf] %vm1876, %v3497
        %3568 = vst.msk [vmem:[#allocation3 + $0xd4] sm:$0xf] %vm1876, %v3499
        %3569 = vst.msk [vmem:[#allocation3 + $0xdc] sm:$0xf] %vm1876, %v3501
        %3570 = vst.msk [vmem:[#allocation3 + $0xe4] sm:$0xf] %vm1876, %v3503
        %3571 = vst.msk [vmem:[#allocation3 + $0xec] sm:$0xf] %vm1876, %v3505
        %3572 = vst.msk [vmem:[#allocation3 + $0xf4] sm:$0xf] %vm1876, %v3507
        %3573 = vst.msk [vmem:[#allocation3 + $0xfc] sm:$0xf] %vm1876, %v3509
        %v3574 = vld [vmem:[#allocation2 + $0xf] sm:$0xff]
        %v3575 = vld [vmem:[#allocation2 + $0x17] sm:$0xff]
        %v3576 = vld [vmem:[#allocation2 + $0x1f] sm:$0xff]
        %v3577 = vld [vmem:[#allocation2 + $0x27] sm:$0xff]
        %v3578 = vld [vmem:[#allocation2 + $0x2f] sm:$0xff]
        %v3579 = vld [vmem:[#allocation2 + $0x37] sm:$0xff]
        %v3580 = vld [vmem:[#allocation2 + $0x3f] sm:$0xff]
        %v3581 = vld [vmem:[#allocation2 + $0x47] sm:$0xff]
        %v3582 = vld [vmem:[#allocation2 + $0x4f] sm:$0xff]
        %v3583 = vld [vmem:[#allocation2 + $0x57] sm:$0xff]
        %v3584 = vld [vmem:[#allocation2 + $0x5f] sm:$0xff]
        %v3585 = vld [vmem:[#allocation2 + $0x67] sm:$0xff]
        %v3586 = vld [vmem:[#allocation2 + $0x6f] sm:$0xff]
        %v3587 = vld [vmem:[#allocation2 + $0x77] sm:$0xff]
        %v3588 = vld [vmem:[#allocation2 + $0x7f] sm:$0xff]
        %v3589 = vld [vmem:[#allocation2 + $0x87] sm:$0xff]
        %v3590 = vld [vmem:[#allocation2 + $0x8f] sm:$0xff]
        %v3591 = vld [vmem:[#allocation2 + $0x97] sm:$0xff]
        %v3592 = vld [vmem:[#allocation2 + $0x9f] sm:$0xff]
        %v3593 = vld [vmem:[#allocation2 + $0xa7] sm:$0xff]
        %v3594 = vld [vmem:[#allocation2 + $0xaf] sm:$0xff]
        %v3595 = vld [vmem:[#allocation2 + $0xb7] sm:$0xff]
        %v3596 = vld [vmem:[#allocation2 + $0xbf] sm:$0xff]
        %v3597 = vld [vmem:[#allocation2 + $0xc7] sm:$0xff]
        %v3598 = vld [vmem:[#allocation2 + $0xcf] sm:$0xff]
        %v3599 = vld [vmem:[#allocation2 + $0xd7] sm:$0xff]
        %v3600 = vld [vmem:[#allocation2 + $0xdf] sm:$0xff]
        %v3601 = vld [vmem:[#allocation2 + $0xe7] sm:$0xff]
        %v3602 = vld [vmem:[#allocation2 + $0xef] sm:$0xff]
        %v3603 = vld [vmem:[#allocation2 + $0xf7] sm:$0xff]
        %v3604 = vld [vmem:[#allocation2 + $0xff] sm:$0xff]
        %v3605 = vld [vmem:[#allocation2 + $0x107] sm:$0xff]
        %v3606 = vpack.c.bf16 %v3574, %v3574
        %v3607 = vpack.c.bf16 %v3575, %v3575
        %v3608 = vpack.c.bf16 %v3576, %v3576
        %v3609 = vpack.c.bf16 %v3577, %v3577
        %v3610 = vpack.c.bf16 %v3578, %v3578
        %v3611 = vpack.c.bf16 %v3579, %v3579
        %v3612 = vpack.c.bf16 %v3580, %v3580
        %v3613 = vpack.c.bf16 %v3581, %v3581
        %v3614 = vpack.c.bf16 %v3582, %v3582
        %v3615 = vpack.c.bf16 %v3583, %v3583
        %v3616 = vpack.c.bf16 %v3584, %v3584
        %v3617 = vpack.c.bf16 %v3585, %v3585
        %v3618 = vpack.c.bf16 %v3586, %v3586
        %v3619 = vpack.c.bf16 %v3587, %v3587
        %v3620 = vpack.c.bf16 %v3588, %v3588
        %v3621 = vpack.c.bf16 %v3589, %v3589
        %v3622 = vpack.c.bf16 %v3590, %v3590
        %v3623 = vpack.c.bf16 %v3591, %v3591
        %v3624 = vpack.c.bf16 %v3592, %v3592
        %v3625 = vpack.c.bf16 %v3593, %v3593
        %v3626 = vpack.c.bf16 %v3594, %v3594
        %v3627 = vpack.c.bf16 %v3595, %v3595
        %v3628 = vpack.c.bf16 %v3596, %v3596
        %v3629 = vpack.c.bf16 %v3597, %v3597
        %v3630 = vpack.c.bf16 %v3598, %v3598
        %v3631 = vpack.c.bf16 %v3599, %v3599
        %v3632 = vpack.c.bf16 %v3600, %v3600
        %v3633 = vpack.c.bf16 %v3601, %v3601
        %v3634 = vpack.c.bf16 %v3602, %v3602
        %v3635 = vpack.c.bf16 %v3603, %v3603
        %v3636 = vpack.c.bf16 %v3604, %v3604
        %v3637 = vpack.c.bf16 %v3605, %v3605
        %3670 = vrot.lane.b32.xlu0 %v3606, 112
        %v3671 = vpop.permute.xlu0 %3670
        %3672 = vrot.lane.b32.xlu0 %v3607, 112
        %v3673 = vpop.permute.xlu0 %3672
        %3674 = vrot.lane.b32.xlu0 %v3608, 112
        %v3675 = vpop.permute.xlu0 %3674
        %3676 = vrot.lane.b32.xlu0 %v3609, 112
        %v3677 = vpop.permute.xlu0 %3676
        %3678 = vrot.lane.b32.xlu0 %v3610, 112
        %v3679 = vpop.permute.xlu0 %3678
        %3680 = vrot.lane.b32.xlu0 %v3611, 112
        %v3681 = vpop.permute.xlu0 %3680
        %3682 = vrot.lane.b32.xlu0 %v3612, 112
        %v3683 = vpop.permute.xlu0 %3682
        %3684 = vrot.lane.b32.xlu0 %v3613, 112
        %v3685 = vpop.permute.xlu0 %3684
        %3686 = vrot.lane.b32.xlu0 %v3614, 112
        %v3687 = vpop.permute.xlu0 %3686
        %3688 = vrot.lane.b32.xlu0 %v3615, 112
        %v3689 = vpop.permute.xlu0 %3688
        %3690 = vrot.lane.b32.xlu0 %v3616, 112
        %v3691 = vpop.permute.xlu0 %3690
        %3692 = vrot.lane.b32.xlu0 %v3617, 112
        %v3693 = vpop.permute.xlu0 %3692
        %3694 = vrot.lane.b32.xlu0 %v3618, 112
        %v3695 = vpop.permute.xlu0 %3694
        %3696 = vrot.lane.b32.xlu0 %v3619, 112
        %v3697 = vpop.permute.xlu0 %3696
        %3698 = vrot.lane.b32.xlu0 %v3620, 112
        %v3699 = vpop.permute.xlu0 %3698
        %3700 = vrot.lane.b32.xlu0 %v3621, 112
        %v3701 = vpop.permute.xlu0 %3700
        %3702 = vrot.lane.b32.xlu0 %v3622, 112
        %v3703 = vpop.permute.xlu0 %3702
        %3704 = vrot.lane.b32.xlu0 %v3623, 112
        %v3705 = vpop.permute.xlu0 %3704
        %3706 = vrot.lane.b32.xlu0 %v3624, 112
        %v3707 = vpop.permute.xlu0 %3706
        %3708 = vrot.lane.b32.xlu0 %v3625, 112
        %v3709 = vpop.permute.xlu0 %3708
        %3710 = vrot.lane.b32.xlu0 %v3626, 112
        %v3711 = vpop.permute.xlu0 %3710
        %3712 = vrot.lane.b32.xlu0 %v3627, 112
        %v3713 = vpop.permute.xlu0 %3712
        %3714 = vrot.lane.b32.xlu0 %v3628, 112
        %v3715 = vpop.permute.xlu0 %3714
        %3716 = vrot.lane.b32.xlu0 %v3629, 112
        %v3717 = vpop.permute.xlu0 %3716
        %3718 = vrot.lane.b32.xlu0 %v3630, 112
        %v3719 = vpop.permute.xlu0 %3718
        %3720 = vrot.lane.b32.xlu0 %v3631, 112
        %v3721 = vpop.permute.xlu0 %3720
        %3722 = vrot.lane.b32.xlu0 %v3632, 112
        %v3723 = vpop.permute.xlu0 %3722
        %3724 = vrot.lane.b32.xlu0 %v3633, 112
        %v3725 = vpop.permute.xlu0 %3724
        %3726 = vrot.lane.b32.xlu0 %v3634, 112
        %v3727 = vpop.permute.xlu0 %3726
        %3728 = vrot.lane.b32.xlu0 %v3635, 112
        %v3729 = vpop.permute.xlu0 %3728
        %3730 = vrot.lane.b32.xlu0 %v3636, 112
        %v3731 = vpop.permute.xlu0 %3730
        %3732 = vrot.lane.b32.xlu0 %v3637, 112
        %v3733 = vpop.permute.xlu0 %3732
        %3766 = vst.msk [vmem:[#allocation3 + $0x4] sm:$0xf] %vm2101, %v3671
        %3767 = vst.msk [vmem:[#allocation3 + $0xc] sm:$0xf] %vm2101, %v3673
        %3768 = vst.msk [vmem:[#allocation3 + $0x14] sm:$0xf] %vm2101, %v3675
        %3769 = vst.msk [vmem:[#allocation3 + $0x1c] sm:$0xf] %vm2101, %v3677
        %3770 = vst.msk [vmem:[#allocation3 + $0x24] sm:$0xf] %vm2101, %v3679
        %3771 = vst.msk [vmem:[#allocation3 + $0x2c] sm:$0xf] %vm2101, %v3681
        %3772 = vst.msk [vmem:[#allocation3 + $0x34] sm:$0xf] %vm2101, %v3683
        %3773 = vst.msk [vmem:[#allocation3 + $0x3c] sm:$0xf] %vm2101, %v3685
        %3774 = vst.msk [vmem:[#allocation3 + $0x44] sm:$0xf] %vm2101, %v3687
        %3775 = vst.msk [vmem:[#allocation3 + $0x4c] sm:$0xf] %vm2101, %v3689
        %3776 = vst.msk [vmem:[#allocation3 + $0x54] sm:$0xf] %vm2101, %v3691
        %3777 = vst.msk [vmem:[#allocation3 + $0x5c] sm:$0xf] %vm2101, %v3693
        %3778 = vst.msk [vmem:[#allocation3 + $0x64] sm:$0xf] %vm2101, %v3695
        %3779 = vst.msk [vmem:[#allocation3 + $0x6c] sm:$0xf] %vm2101, %v3697
        %3780 = vst.msk [vmem:[#allocation3 + $0x74] sm:$0xf] %vm2101, %v3699
        %3781 = vst.msk [vmem:[#allocation3 + $0x7c] sm:$0xf] %vm2101, %v3701
        %3782 = vst.msk [vmem:[#allocation3 + $0x84] sm:$0xf] %vm2101, %v3703
        %3783 = vst.msk [vmem:[#allocation3 + $0x8c] sm:$0xf] %vm2101, %v3705
        %3784 = vst.msk [vmem:[#allocation3 + $0x94] sm:$0xf] %vm2101, %v3707
        %3785 = vst.msk [vmem:[#allocation3 + $0x9c] sm:$0xf] %vm2101, %v3709
        %3786 = vst.msk [vmem:[#allocation3 + $0xa4] sm:$0xf] %vm2101, %v3711
        %3787 = vst.msk [vmem:[#allocation3 + $0xac] sm:$0xf] %vm2101, %v3713
        %3788 = vst.msk [vmem:[#allocation3 + $0xb4] sm:$0xf] %vm2101, %v3715
        %3789 = vst.msk [vmem:[#allocation3 + $0xbc] sm:$0xf] %vm2101, %v3717
        %3790 = vst.msk [vmem:[#allocation3 + $0xc4] sm:$0xf] %vm2101, %v3719
        %3791 = vst.msk [vmem:[#allocation3 + $0xcc] sm:$0xf] %vm2101, %v3721
        %3792 = vst.msk [vmem:[#allocation3 + $0xd4] sm:$0xf] %vm2101, %v3723
        %3793 = vst.msk [vmem:[#allocation3 + $0xdc] sm:$0xf] %vm2101, %v3725
        %3794 = vst.msk [vmem:[#allocation3 + $0xe4] sm:$0xf] %vm2101, %v3727
        %3795 = vst.msk [vmem:[#allocation3 + $0xec] sm:$0xf] %vm2101, %v3729
        %3796 = vst.msk [vmem:[#allocation3 + $0xf4] sm:$0xf] %vm2101, %v3731
        %3797 = vst.msk [vmem:[#allocation3 + $0xfc] sm:$0xf] %vm2101, %v3733
        %v3798 = vld [vmem:[%s0] sm:$0xff]
        %v3799 = vld [vmem:[%s0 + $0x8] sm:$0xff]
        %v3800 = vld [vmem:[%s0 + $0x10] sm:$0xff]
        %v3801 = vld [vmem:[#allocation3] sm:$0xff]
        %v3802 = vld [vmem:[#allocation3 + $0x8] sm:$0xff]
        %v3803 = vld [vmem:[#allocation3 + $0x10] sm:$0xff]
        %v3804 = vld [vmem:[#allocation3 + $0x18] sm:$0xff]
        %v3805 = vld [vmem:[#allocation3 + $0x20] sm:$0xff]
        %v3806 = vld [vmem:[#allocation3 + $0x28] sm:$0xff]
        %v3807 = vld [vmem:[#allocation3 + $0x30] sm:$0xff]
        %v3808 = vld [vmem:[#allocation3 + $0x38] sm:$0xff]
        %v3809 = vld [vmem:[#allocation3 + $0x40] sm:$0xff]
        %v3810 = vld [vmem:[#allocation3 + $0x48] sm:$0xff]
        %v3811 = vld [vmem:[#allocation3 + $0x50] sm:$0xff]
        %v3812 = vld [vmem:[#allocation3 + $0x58] sm:$0xff]
        %v3813 = vld [vmem:[#allocation3 + $0x60] sm:$0xff]
        %v3814 = vld [vmem:[#allocation3 + $0x68] sm:$0xff]
        %v3815 = vld [vmem:[#allocation3 + $0x70] sm:$0xff]
        %v3816 = vld [vmem:[#allocation3 + $0x78] sm:$0xff]
        %v3817 = vld [vmem:[#allocation3 + $0x80] sm:$0xff]
        %v3818 = vld [vmem:[#allocation3 + $0x88] sm:$0xff]
        %v3819 = vld [vmem:[#allocation3 + $0x90] sm:$0xff]
        %v3820 = vld [vmem:[#allocation3 + $0x98] sm:$0xff]
        %v3821 = vld [vmem:[#allocation3 + $0xa0] sm:$0xff]
        %v3822 = vld [vmem:[#allocation3 + $0xa8] sm:$0xff]
        %v3823 = vld [vmem:[#allocation3 + $0xb0] sm:$0xff]
        %v3824 = vld [vmem:[#allocation3 + $0xb8] sm:$0xff]
        %v3825 = vld [vmem:[#allocation3 + $0xc0] sm:$0xff]
        %v3826 = vld [vmem:[#allocation3 + $0xc8] sm:$0xff]
        %v3827 = vld [vmem:[#allocation3 + $0xd0] sm:$0xff]
        %v3828 = vld [vmem:[#allocation3 + $0xd8] sm:$0xff]
        %v3829 = vld [vmem:[#allocation3 + $0xe0] sm:$0xff]
        %v3830 = vld [vmem:[#allocation3 + $0xe8] sm:$0xff]
        %v3831 = vld [vmem:[#allocation3 + $0xf0] sm:$0xff]
        %v3832 = vld [vmem:[#allocation3 + $0xf8] sm:$0xff]
        %v3836 = vunpack.c.l.b16 %v3798
        %v3837 = vunpack.c.h.b16 %v3798
        %v3838 = vunpack.c.l.b16 %v3799
        %v3839 = vunpack.c.h.b16 %v3799
        %v3840 = vunpack.c.l.b16 %v3800
        %v3841 = vunpack.c.h.b16 %v3800
        %v3842 = vpack.c.b16 %v3838, %v3836
        %v3843 = vpack.c.b16 %v3839, %v3837
        %v3844 = vpack.c.b16 %v3840, %v3840
        %v3845 = vpack.c.b16 %v3841, %v3841
        %v3882 = vunpack.c.l.b16 %v3801
        %v3883 = vunpack.c.h.b16 %v3801
        %v3884 = vunpack.c.l.b16 %v3802
        %v3885 = vunpack.c.h.b16 %v3802
        %v3886 = vunpack.c.l.b16 %v3803
        %v3887 = vunpack.c.h.b16 %v3803
        %v3888 = vunpack.c.l.b16 %v3804
        %v3889 = vunpack.c.h.b16 %v3804
        %v3890 = vunpack.c.l.b16 %v3805
        %v3891 = vunpack.c.h.b16 %v3805
        %v3892 = vunpack.c.l.b16 %v3806
        %v3893 = vunpack.c.h.b16 %v3806
        %v3894 = vunpack.c.l.b16 %v3807
        %v3895 = vunpack.c.h.b16 %v3807
        %v3896 = vunpack.c.l.b16 %v3808
        %v3897 = vunpack.c.h.b16 %v3808
        %v3898 = vunpack.c.l.b16 %v3809
        %v3899 = vunpack.c.h.b16 %v3809
        %v3900 = vunpack.c.l.b16 %v3810
        %v3901 = vunpack.c.h.b16 %v3810
        %v3902 = vunpack.c.l.b16 %v3811
        %v3903 = vunpack.c.h.b16 %v3811
        %v3904 = vunpack.c.l.b16 %v3812
        %v3905 = vunpack.c.h.b16 %v3812
        %v3906 = vunpack.c.l.b16 %v3813
        %v3907 = vunpack.c.h.b16 %v3813
        %v3908 = vunpack.c.l.b16 %v3814
        %v3909 = vunpack.c.h.b16 %v3814
        %v3910 = vunpack.c.l.b16 %v3815
        %v3911 = vunpack.c.h.b16 %v3815
        %v3912 = vunpack.c.l.b16 %v3816
        %v3913 = vunpack.c.h.b16 %v3816
        %v3914 = vunpack.c.l.b16 %v3817
        %v3915 = vunpack.c.h.b16 %v3817
        %v3916 = vunpack.c.l.b16 %v3818
        %v3917 = vunpack.c.h.b16 %v3818
        %v3918 = vunpack.c.l.b16 %v3819
        %v3919 = vunpack.c.h.b16 %v3819
        %v3920 = vunpack.c.l.b16 %v3820
        %v3921 = vunpack.c.h.b16 %v3820
        %v3922 = vunpack.c.l.b16 %v3821
        %v3923 = vunpack.c.h.b16 %v3821
        %v3924 = vunpack.c.l.b16 %v3822
        %v3925 = vunpack.c.h.b16 %v3822
        %v3926 = vunpack.c.l.b16 %v3823
        %v3927 = vunpack.c.h.b16 %v3823
        %v3928 = vunpack.c.l.b16 %v3824
        %v3929 = vunpack.c.h.b16 %v3824
        %v3930 = vunpack.c.l.b16 %v3825
        %v3931 = vunpack.c.h.b16 %v3825
        %v3932 = vunpack.c.l.b16 %v3826
        %v3933 = vunpack.c.h.b16 %v3826
        %v3934 = vunpack.c.l.b16 %v3827
        %v3935 = vunpack.c.h.b16 %v3827
        %v3936 = vunpack.c.l.b16 %v3828
        %v3937 = vunpack.c.h.b16 %v3828
        %v3938 = vunpack.c.l.b16 %v3829
        %v3939 = vunpack.c.h.b16 %v3829
        %v3940 = vunpack.c.l.b16 %v3830
        %v3941 = vunpack.c.h.b16 %v3830
        %v3942 = vunpack.c.l.b16 %v3831
        %v3943 = vunpack.c.h.b16 %v3831
        %v3944 = vunpack.c.l.b16 %v3832
        %v3945 = vunpack.c.h.b16 %v3832
        %v3946 = vpack.c.b16 %v3884, %v3882
        %v3947 = vpack.c.b16 %v3885, %v3883
        %v3948 = vpack.c.b16 %v3888, %v3886
        %v3949 = vpack.c.b16 %v3889, %v3887
        %v3950 = vpack.c.b16 %v3892, %v3890
        %v3951 = vpack.c.b16 %v3893, %v3891
        %v3952 = vpack.c.b16 %v3896, %v3894
        %v3953 = vpack.c.b16 %v3897, %v3895
        %v3954 = vpack.c.b16 %v3900, %v3898
        %v3955 = vpack.c.b16 %v3901, %v3899
        %v3956 = vpack.c.b16 %v3904, %v3902
        %v3957 = vpack.c.b16 %v3905, %v3903
        %v3958 = vpack.c.b16 %v3908, %v3906
        %v3959 = vpack.c.b16 %v3909, %v3907
        %v3960 = vpack.c.b16 %v3912, %v3910
        %v3961 = vpack.c.b16 %v3913, %v3911
        %v3962 = vpack.c.b16 %v3916, %v3914
        %v3963 = vpack.c.b16 %v3917, %v3915
        %v3964 = vpack.c.b16 %v3920, %v3918
        %v3965 = vpack.c.b16 %v3921, %v3919
        %v3966 = vpack.c.b16 %v3924, %v3922
        %v3967 = vpack.c.b16 %v3925, %v3923
        %v3968 = vpack.c.b16 %v3928, %v3926
        %v3969 = vpack.c.b16 %v3929, %v3927
        %v3970 = vpack.c.b16 %v3932, %v3930
        %v3971 = vpack.c.b16 %v3933, %v3931
        %v3972 = vpack.c.b16 %v3936, %v3934
        %v3973 = vpack.c.b16 %v3937, %v3935
        %v3974 = vpack.c.b16 %v3940, %v3938
        %v3975 = vpack.c.b16 %v3941, %v3939
        %v3976 = vpack.c.b16 %v3944, %v3942
        %v3977 = vpack.c.b16 %v3945, %v3943
        %4010 = vmatpush.bf16.xpose.msra.mxu0 %v3960
        %4011 = vmatpush.bf16.xpose.msra.mxu0 %v3958
        %4012 = vmatpush.bf16.xpose.msra.mxu0 %v3956
        %4013 = vmatpush.bf16.xpose.msra.mxu0 %v3954
        %4014 = vmatpush.bf16.xpose.msra.mxu0 %v3952
        %4015 = vmatpush.bf16.xpose.msra.mxu0 %v3950
        %4016 = vmatpush.bf16.xpose.msra.mxu0 %v3948
        %4017 = vmatpush.bf16.xpose.msra.mxu0 %v3946
        %4018 = vmatmul.bf16.gmra.mxu0 %v3842
        %v4019 = vpop.f32.mrf.mxu0
        %v4020 = vadd.f32 0.0, %v4019
        %v4021 = vpop.f32.mrf.mxu0
        %v4022 = vadd.f32 0.0, %v4021
        %4023 = vmatmul.bf16.gmra.mxu0 %v3844
        %v4024 = vpop.f32.mrf.mxu0
        %v4025 = vadd.f32 0.0, %v4024
        %v4026 = vpop.f32.mrf.mxu0
        %4027 = vdwg.mxu0
        %4028 = vmatpush.bf16.xpose.msra.mxu0 %v3961
        %4029 = vmatpush.bf16.xpose.msra.mxu0 %v3959
        %4030 = vmatpush.bf16.xpose.msra.mxu0 %v3957
        %4031 = vmatpush.bf16.xpose.msra.mxu0 %v3955
        %4032 = vmatpush.bf16.xpose.msra.mxu0 %v3953
        %4033 = vmatpush.bf16.xpose.msra.mxu0 %v3951
        %4034 = vmatpush.bf16.xpose.msra.mxu0 %v3949
        %4035 = vmatpush.bf16.xpose.msra.mxu0 %v3947
        %4036 = vmatmul.bf16.gmra.mxu0 %v3843
        %v4037 = vpop.f32.mrf.mxu0
        %v4038 = vadd.f32 %v4020, %v4037
        %v4039 = vpop.f32.mrf.mxu0
        %v4040 = vadd.f32 %v4022, %v4039
        %4041 = vmatmul.bf16.gmra.mxu0 %v3845
        %v4042 = vpop.f32.mrf.mxu0
        %v4043 = vadd.f32 %v4025, %v4042
        %v4044 = vpop.f32.mrf.mxu0
        %4045 = vdwg.mxu0
        %4046 = vmatpush.bf16.xpose.msra.mxu0 %v3976
        %4047 = vmatpush.bf16.xpose.msra.mxu0 %v3974
        %4048 = vmatpush.bf16.xpose.msra.mxu0 %v3972
        %4049 = vmatpush.bf16.xpose.msra.mxu0 %v3970
        %4050 = vmatpush.bf16.xpose.msra.mxu0 %v3968
        %4051 = vmatpush.bf16.xpose.msra.mxu0 %v3966
        %4052 = vmatpush.bf16.xpose.msra.mxu0 %v3964
        %4053 = vmatpush.bf16.xpose.msra.mxu0 %v3962
        %4054 = vmatmul.bf16.gmra.mxu0 %v3842
        %v4055 = vpop.f32.mrf.mxu0
        %v4056 = vadd.f32 0.0, %v4055
        %v4057 = vpop.f32.mrf.mxu0
        %v4058 = vadd.f32 0.0, %v4057
        %4059 = vmatmul.bf16.gmra.mxu0 %v3844
        %v4060 = vpop.f32.mrf.mxu0
        %v4061 = vadd.f32 0.0, %v4060
        %v4062 = vpop.f32.mrf.mxu0
        %4063 = vdwg.mxu0
        %4064 = vmatpush.bf16.xpose.msra.mxu0 %v3977
        %4065 = vmatpush.bf16.xpose.msra.mxu0 %v3975
        %4066 = vmatpush.bf16.xpose.msra.mxu0 %v3973
        %4067 = vmatpush.bf16.xpose.msra.mxu0 %v3971
        %4068 = vmatpush.bf16.xpose.msra.mxu0 %v3969
        %4069 = vmatpush.bf16.xpose.msra.mxu0 %v3967
        %4070 = vmatpush.bf16.xpose.msra.mxu0 %v3965
        %4071 = vmatpush.bf16.xpose.msra.mxu0 %v3963
        %4072 = vmatmul.bf16.gmra.mxu0 %v3843
        %v4073 = vpop.f32.mrf.mxu0
        %v4074 = vadd.f32 %v4056, %v4073
        %v4075 = vpop.f32.mrf.mxu0
        %v4076 = vadd.f32 %v4058, %v4075
        %4077 = vmatmul.bf16.gmra.mxu0 %v3845
        %v4078 = vpop.f32.mrf.mxu0
        %v4079 = vadd.f32 %v4061, %v4078
        %v4080 = vpop.f32.mrf.mxu0
        %4081 = vdwg.mxu0
        %4082 = vst [vmem:[%s174] sm:$0xff] %v4038
        %4083 = vst [vmem:[%s174 + $0x8] sm:$0xff] %v4074
        %4084 = vst [vmem:[%s174 + $0x10] sm:$0xff] %v4040
        %4085 = vst [vmem:[%s174 + $0x18] sm:$0xff] %v4076
        %4086 = vst [vmem:[%s174 + $0x20] sm:$0xff] %v4043
        %4087 = vst [vmem:[%s174 + $0x28] sm:$0xff] %v4079
        %s4088 = sand.u32 %s95, 1
        %s4089 = sand.u32 %s95, 1
        %s4090 = smul.addr %s4089, 48
        %s4091 = scalar_lea.vmem [#allocation4], %s4090
        // Predicated region
        $region33: #{forward.1} parent=31 // pred_check
          %p4092 = pneg %p105
        $region34: #{forward.1} parent=31 // pred_check_branch
          %4094 = sbr.rel (%p4092) target = $region36
        $region35: #{forward.1} parent=31 // pred_region
          %s4095 = smul.u32 2, %s14
          %s4096 = smul.addr %s4095, 8
          %s4097 = scalar_lea.vmem %s3, %s4096
          // Predicated region
          $region37: #{forward.1} parent=35 // pred_check
            _
          $region38: #{forward.1} parent=35 // pred_check_branch
            %4099 = sbr.rel (0) target = $region40
          $region39: #{forward.1} parent=35 // pred_region
            // Predicated region
            $region41: #{forward.1} parent=39 // pred_check
              _
            $region42: #{forward.1} parent=39 // pred_check_branch
              %4101 = sbr.rel (0) target = $region44
            $region43: #{forward.1} parent=39 // pred_region
              loop: start=0, step=1, limit=1
              $region45: #{forward.1} parent=43 // loop_pre_header
                _
              $region46: #{forward.1} parent=43 // loop_header
                %s4103 = sphi 0, %s4107
                %p4104 = scmp.ge.s32.totalorder %s4103, 1
                %s4108 = sphi %s4091, %s4091
                %s4109 = sphi %s4097, %s4097
              $region47: #{forward.1} parent=43 // loop_header_branch
                %4106 = sbr.rel (%p4104) target = $region51
              $region48: #{forward.1} parent=43 // loop_body
                %v4110 = vld [vmem:[%s4108] sm:$0xff]
                %4111 = vst [vmem:[%s4109] sm:$0xff] %v4110
                %v4112 = vld [vmem:[%s4108 + $0x8] sm:$0xff]
                %4113 = vst [vmem:[%s4109 + $0x8] sm:$0xff] %v4112
                %v4114 = vld [vmem:[%s4108 + $0x10] sm:$0xff]
                %4115 = vst [vmem:[%s4109 + $0x20] sm:$0xff] %v4114
                %v4116 = vld [vmem:[%s4108 + $0x18] sm:$0xff]
                %4117 = vst [vmem:[%s4109 + $0x28] sm:$0xff] %v4116
                %v4118 = vld [vmem:[%s4108 + $0x20] sm:$0xff]
                %4119 = vst [vmem:[%s4109 + $0x40] sm:$0xff] %v4118
                %v4120 = vld [vmem:[%s4108 + $0x28] sm:$0xff]
                %4121 = vst [vmem:[%s4109 + $0x48] sm:$0xff] %v4120
              $region49: #{forward.1} parent=43 // loop_footer
                %s4107 = sadd.s32 1, %s4103
              $region50: #{forward.1} parent=43 // loop_footer_branch
                %4102 = sbr.rel target = $region46
              $region51: #{forward.1} parent=43 // loop_exit
                _
            $region44: #{forward.1} parent=39 // pred_fallthru
              _
            // Predicated region
            $region52: #{forward.1} parent=39 // pred_check
              _
            $region53: #{forward.1} parent=39 // pred_check_branch
              %4123 = sbr.rel target = $region55
            $region54: #{forward.1} parent=39 // pred_region
              _
            $region55: #{forward.1} parent=39 // pred_fallthru
              _
          $region40: #{forward.1} parent=35 // pred_fallthru
            _
          %4124 = vnop
        $region36: #{forward.1} parent=31 // pred_fallthru
          _
      $region32: #{forward.1} parent=5 // pred_fallthru
        _
      %p4125 = scmp.le.s32.totalorder 2, %s9
      // Predicated region
      $region56: #{forward.1} parent=5 // pred_check
        %p4126 = pneg %p4125
      $region57: #{forward.1} parent=5 // pred_check_branch
        %4128 = sbr.rel (%p4126) target = $region59
      $region58: #{forward.1} parent=5 // pred_region
        %s4129 = ssub.s32 %s9, 2
        // Predicated region
        $region60: #{forward.1} parent=58 // pred_check
          %p4130 = pneg %p111
        $region61: #{forward.1} parent=58 // pred_check_branch
          %4132 = sbr.rel (%p4130) target = $region63
        $region62: #{forward.1} parent=58 // pred_region
          %s4133 = sand.u32 %s96, 1
          %s4134 = sand.u32 %s96, 1
          %s4135 = smul.addr %s4134, 48
          %s4136 = scalar_lea.vmem [#allocation4], %s4135
        $region63: #{forward.1} parent=58 // pred_fallthru
          _
      $region59: #{forward.1} parent=5 // pred_fallthru
        _
    $region6: #{forward.1} parent=1 // loop_footer
      %s13 = sadd.s32 1, %s9
    $region7: #{forward.1} parent=1 // loop_footer_branch
      %8 = sbr.rel target = $region3
    $region8: #{forward.1} parent=1 // loop_exit
      _

</llo_original>
